<compile_context>
chip_gen: v7x
topology: tpu7x:2x2x1
jax: 0.10.0
libtpu: 0.0.40
codegen_flags: <defaults>
</compile_context>

<pallas_src>
import math
import functools

import numpy as np
import jax
import jax.numpy as jnp
from jax.experimental import pallas as pl
from jax.experimental.pallas import tpu as pltpu


MXU_DTYPE = jnp.bfloat16    # matmul operand dtype; accumulation is always f32
ACT_DTYPE = jnp.bfloat16    # inter-kernel activation dtype (HBM traffic)
MASK_DTYPE = jnp.bfloat16   # streamed 0/1 mask dtype


def _vmem_limit_from_blocks(blocks):
    """Scoped-VMEM limit from per-step block (shape, dtype) list.

    Everything (weights included) is double-buffered by the pipeline, plus slack
    for in-kernel f32 temporaries. Clamp to v7x's 64 MiB physical ceiling.
    """
    total = sum(int(np.prod(s)) * jnp.dtype(d).itemsize for s, d in blocks)
    return int(min(max(2 * total + (8 << 20), 32 << 20), 64 << 20))


# --------------------------- fused attention blocks --------------------------

def _attn_ln_core(x, q, k, v, mask, causal, wo, bo, g, beta, o_ref,
                  n_heads, scale):
    """Shared SDPA + output-projection + residual + LayerNorm (all f32 math).

    x:    (Sq, D) f32 residual
    q:    (Sq, D) f32, k/v: (Skv, D) f32
    mask: (Sq, Skv) bf16 0/1 or None      wo: (D, D) bf16
    """
    Sq, D = q.shape
    Skv = k.shape[0]
    dk = D // n_heads
    q = q * scale                                 # fold 1/sqrt(dk), in f32

    if causal:
        rows = jax.lax.broadcasted_iota(jnp.int32, (Sq, Skv), 0)
        cols = jax.lax.broadcasted_iota(jnp.int32, (Sq, Skv), 1)
        keep = cols <= rows                       # generated in-kernel: no HBM bias

    ctxs = []
    for h in range(n_heads):                      # static unroll; n_heads is small
        lo = h * dk
        qh = q[:, lo:lo + dk].astype(MXU_DTYPE)
        kh = k[:, lo:lo + dk].astype(MXU_DTYPE)
        vh = v[:, lo:lo + dk].astype(MXU_DTYPE)
        # contract on dk directly -- no K^T materialization
        s = jax.lax.dot_general(qh, kh, (((1,), (1,)), ((), ())),
                                preferred_element_type=jnp.float32)   # (Sq, Skv)
        if causal:
            s = jnp.where(keep, s, jnp.float32(-1e9))
        if mask is not None:
            s = jnp.where(mask == 0, jnp.float32(-1e9), s)            # masked_fill
        mx = jnp.max(s, axis=-1, keepdims=True)
        e = jnp.exp(s - mx)
        p = e / jnp.sum(e, axis=-1, keepdims=True)                    # exact softmax
        ctxs.append(jnp.dot(p.astype(MXU_DTYPE), vh,
                            preferred_element_type=jnp.float32))      # (Sq, dk)

    # lane-dense (Sq, D) contexts -> ONE output-projection matmul with K = D
    ctx = jnp.concatenate(ctxs, axis=-1) if n_heads > 1 else ctxs[0]
    y = jnp.dot(ctx.astype(MXU_DTYPE), wo,
                preferred_element_type=jnp.float32) + bo + x          # + residual

    mean = jnp.mean(y, axis=-1, keepdims=True)
    var = jnp.mean(jnp.square(y - mean), axis=-1, keepdims=True)
    yn = (y - mean) * jax.lax.rsqrt(var + 1e-6)                       # eps = 1e-6
    o_ref[...] = (yn * g + beta).astype(o_ref.dtype)


def self_attn_ln_kernel(x_ref, wqkv_ref, bqkv_ref, wo_ref, bo_ref, *rest,
                        n_heads, scale, causal, has_mask):
    """LayerNorm(MHA(x, x, x) + x) for one batch element; fused (D,3D) QKV."""
    if has_mask:
        mask_ref, g_ref, beta_ref, o_ref = rest
    else:
        mask_ref = None
        g_ref, beta_ref, o_ref = rest
    x = x_ref[...].astype(jnp.float32)
    D = x.shape[-1]
    qkv = jnp.dot(x.astype(MXU_DTYPE), wqkv_ref[...],
                  preferred_element_type=jnp.float32) + bqkv_ref[...]  # (Sq, 3D)
    q = qkv[:, :D]
    k = qkv[:, D:2 * D]
    v = qkv[:, 2 * D:]
    mask = mask_ref[...] if has_mask else None
    _attn_ln_core(x, q, k, v, mask, causal, wo_ref[...], bo_ref[...],
                  g_ref[...], beta_ref[...], o_ref, n_heads, scale)


def cross_attn_ln_kernel(x_ref, kv_ref, wq_ref, bq_ref, wkv_ref, bkv_ref,
                         wo_ref, bo_ref, *rest, n_heads, scale, has_mask):
    """LayerNorm(MHA(x, kv, kv) + x) for one batch element; fused (D,2D) KV."""
    if has_mask:
        mask_ref, g_ref, beta_ref, o_ref = rest
    else:
        mask_ref = None
        g_ref, beta_ref, o_ref = rest
    x = x_ref[...].astype(jnp.float32)
    kv = kv_ref[...].astype(jnp.float32)
    D = x.shape[-1]
    q = jnp.dot(x.astype(MXU_DTYPE), wq_ref[...],
                preferred_element_type=jnp.float32) + bq_ref[...]      # (Sq, D)
    kvp = jnp.dot(kv.astype(MXU_DTYPE), wkv_ref[...],
                  preferred_element_type=jnp.float32) + bkv_ref[...]   # (Skv, 2D)
    k = kvp[:, :D]
    v = kvp[:, D:]
    mask = mask_ref[...] if has_mask else None
    _attn_ln_core(x, q, k, v, mask, False, wo_ref[...], bo_ref[...],
                  g_ref[...], beta_ref[...], o_ref, n_heads, scale)


def self_attn_ln_block(x, p, mask, gamma, beta, n_heads, causal):
    B, Sq, D = x.shape
    Skv = Sq
    scale = 1.0 / math.sqrt(D // n_heads)
    has_mask = mask is not None
    kern = functools.partial(self_attn_ln_kernel, n_heads=n_heads, scale=scale,
                             causal=causal, has_mask=has_mask)
    in_specs = [
        pl.BlockSpec((None, Sq, D), lambda b: (b, 0, 0)),      # x
        pl.BlockSpec((D, 3 * D), lambda b: (0, 0)),            # wqkv
        pl.BlockSpec((1, 3 * D), lambda b: (0, 0)),            # bqkv
        pl.BlockSpec((D, D), lambda b: (0, 0)),                # wo
        pl.BlockSpec((1, D), lambda b: (0, 0)),                # bo
    ]
    args = [x, p["wqkv"], p["bqkv"], p["wo"], p["bo"]]
    blocks = [((Sq, D), x.dtype), ((D, 3 * D), MXU_DTYPE), ((1, 3 * D), jnp.float32),
              ((D, D), MXU_DTYPE), ((1, D), jnp.float32)]
    if has_mask:
        in_specs.append(pl.BlockSpec((None, Sq, Skv), lambda b: (b, 0, 0)))
        args.append(mask)
        blocks.append(((Sq, Skv), MASK_DTYPE))
    in_specs += [pl.BlockSpec((1, D), lambda b: (0, 0)),       # gamma
                 pl.BlockSpec((1, D), lambda b: (0, 0))]       # beta
    args += [gamma, beta]
    blocks += [((1, D), jnp.float32)] * 2 + [((Sq, D), ACT_DTYPE)]
    return pl.pallas_call(
        kern,
        out_shape=jax.ShapeDtypeStruct((B, Sq, D), ACT_DTYPE),
        grid=(B,),
        in_specs=in_specs,
        out_specs=pl.BlockSpec((None, Sq, D), lambda b: (b, 0, 0)),
        compiler_params=pltpu.CompilerParams(
            dimension_semantics=("parallel",),
            vmem_limit_bytes=_vmem_limit_from_blocks(blocks)),
    )(*args)


def cross_attn_ln_block(x, kv, p, mask, gamma, beta, n_heads):
    B, Sq, D = x.shape
    Skv = kv.shape[1]
    scale = 1.0 / math.sqrt(D // n_heads)
    has_mask = mask is not None
    kern = functools.partial(cross_attn_ln_kernel, n_heads=n_heads, scale=scale,
                             has_mask=has_mask)
    in_specs = [
        pl.BlockSpec((None, Sq, D), lambda b: (b, 0, 0)),      # x
        pl.BlockSpec((None, Skv, D), lambda b: (b, 0, 0)),     # kv (encoder out)
        pl.BlockSpec((D, D), lambda b: (0, 0)),                # wq
        pl.BlockSpec((1, D), lambda b: (0, 0)),                # bq
        pl.BlockSpec((D, 2 * D), lambda b: (0, 0)),            # wkv
        pl.BlockSpec((1, 2 * D), lambda b: (0, 0)),            # bkv
        pl.BlockSpec((D, D), lambda b: (0, 0)),                # wo
        pl.BlockSpec((1, D), lambda b: (0, 0)),                # bo
    ]
    args = [x, kv, p["wq"], p["bq"], p["wkv"], p["bkv"], p["wo"], p["bo"]]
    blocks = [((Sq, D), x.dtype), ((Skv, D), kv.dtype),
              ((D, D), MXU_DTYPE), ((1, D), jnp.float32),
              ((D, 2 * D), MXU_DTYPE), ((1, 2 * D), jnp.float32),
              ((D, D), MXU_DTYPE), ((1, D), jnp.float32)]
    if has_mask:
        in_specs.append(pl.BlockSpec((None, Sq, Skv), lambda b: (b, 0, 0)))
        args.append(mask)
        blocks.append(((Sq, Skv), MASK_DTYPE))
    in_specs += [pl.BlockSpec((1, D), lambda b: (0, 0)),
                 pl.BlockSpec((1, D), lambda b: (0, 0))]
    args += [gamma, beta]
    blocks += [((1, D), jnp.float32)] * 2 + [((Sq, D), ACT_DTYPE)]
    return pl.pallas_call(
        kern,
        out_shape=jax.ShapeDtypeStruct((B, Sq, D), ACT_DTYPE),
        grid=(B,),
        in_specs=in_specs,
        out_specs=pl.BlockSpec((None, Sq, D), lambda b: (b, 0, 0)),
        compiler_params=pltpu.CompilerParams(
            dimension_semantics=("parallel",),
            vmem_limit_bytes=_vmem_limit_from_blocks(blocks)),
    )(*args)


# ------------------------------ fused FFN block ------------------------------

def ffn_ln_kernel(x_ref, w1_ref, b1_ref, w2_ref, b2_ref, g_ref, beta_ref, o_ref):
    # LayerNorm(x + relu(x @ W1 + b1) @ W2 + b2), one row-tile at a time.
    x = x_ref[...].astype(jnp.float32)                        # (tm, D)
    h = jnp.dot(x.astype(MXU_DTYPE), w1_ref[...],
                preferred_element_type=jnp.float32) + b1_ref[...]
    h = jnp.maximum(h, 0.0)
    y = jnp.dot(h.astype(MXU_DTYPE), w2_ref[...],
                preferred_element_type=jnp.float32) + b2_ref[...]
    y = y + x
    mean = jnp.mean(y, axis=-1, keepdims=True)
    var = jnp.mean(jnp.square(y - mean), axis=-1, keepdims=True)
    yn = (y - mean) * jax.lax.rsqrt(var + 1e-6)
    o_ref[...] = (yn * g_ref[...] + beta_ref[...]).astype(o_ref.dtype)


def _pick_block_m(M, D, H2):
    """Row tile: multiple of 8, VMEM-capped, dividing M; prefer >= 2 grid steps."""
    if M % 8 != 0:
        return M
    # per-row bytes: double-buffered bf16 x/out tiles + f32 intermediates (h, y)
    per_row = 2 * (2 * D * jnp.dtype(ACT_DTYPE).itemsize) + 4 * (H2 + D)
    cap = max(8, min(512, ((24 << 20) // max(per_row, 1)) // 8 * 8))
    blk = min(M, cap)
    while blk > 8 and M % blk != 0:
        blk -= 8
    if M % blk != 0:
        return M
    if blk == M and M >= 16 and (M // 2) % 8 == 0:
        blk = M // 2        # give both v7x TensorCores work even at small M
    return blk


def ffn_ln_block(x2d, w1, b1, w2, b2, gamma, beta):
    M, D = x2d.shape
    H2 = w1.shape[1]
    tm = _pick_block_m(M, D, H2)
    blocks = [((tm, D), x2d.dtype), ((D, H2), MXU_DTYPE), ((1, H2), jnp.float32),
              ((H2, D), MXU_DTYPE), ((1, D), jnp.float32),
              ((1, D), jnp.float32), ((1, D), jnp.float32),
              ((tm, D), ACT_DTYPE), ((tm, H2), jnp.float32), ((tm, D), jnp.float32)]
    return pl.pallas_call(
        ffn_ln_kernel,
        out_shape=jax.ShapeDtypeStruct((M, D), ACT_DTYPE),
        grid=(M // tm,),
        in_specs=[
            pl.BlockSpec((tm, D), lambda i: (i, 0)),
            pl.BlockSpec((D, H2), lambda i: (0, 0)),
            pl.BlockSpec((1, H2), lambda i: (0, 0)),
            pl.BlockSpec((H2, D), lambda i: (0, 0)),
            pl.BlockSpec((1, D), lambda i: (0, 0)),
            pl.BlockSpec((1, D), lambda i: (0, 0)),
            pl.BlockSpec((1, D), lambda i: (0, 0)),
        ],
        out_specs=pl.BlockSpec((tm, D), lambda i: (i, 0)),
        compiler_params=pltpu.CompilerParams(
            dimension_semantics=("parallel",),
            vmem_limit_bytes=_vmem_limit_from_blocks(blocks)),
    )(x2d, w1, b1, w2, b2, gamma, beta)


# ------------------------- Model (JAX glue around kernels) ------------------

def decoder_layer(p, x, enc, src_mask, tgt_mask, n_heads, causal):
    B, S, D = x.shape
    # self-attention + residual + LN1 (one fused kernel, causal mask in-kernel)
    out1 = self_attn_ln_block(x, p["sa"], tgt_mask, p["ln1_g"], p["ln1_b"],
                              n_heads, causal)
    # cross-attention + residual + LN2 (one fused kernel)
    out2 = cross_attn_ln_block(out1, enc, p["sa2"], src_mask,
                               p["ln2_g"], p["ln2_b"], n_heads)
    # FFN + residual + LN3 (one fused kernel, batch folded into row dim)
    out = ffn_ln_block(out2.reshape(B * S, D), p["w1"], p["b1"], p["w2"],
                       p["b2"], p["ln3_g"], p["ln3_b"]).reshape(B, S, D)
    return out


def _prep_mask(mask, B, Sq, Sk):
    """Convert an arbitrary 0/1 mask into a compact bf16 0/1 stream (or None)."""
    if mask is None:
        return None
    m = jnp.asarray(mask)
    if m.ndim == 4:
        m = m[:, 0]
    return jnp.broadcast_to(m, (B, Sq, Sk)).astype(MASK_DTYPE)


def decoder_forward(params, tokens, encode_out, src_mask, tgt_mask, *,
                    d_model, num_layers, n_heads, tgt_is_causal=False):
    # embedding lookup + scale + positional embedding (XLA glue: gather)
    x = params["embedding"][tokens] * math.sqrt(d_model)
    x = x + params["pos_emb"][:, : x.shape[1], :]
    # TODO(synk): dropout (training mode) not implemented -- eval-mode identity.
    B, S, _ = x.shape
    S_enc = encode_out.shape[1]
    src_mask_k = _prep_mask(src_mask, B, S, S_enc)
    # standard causal target mask is generated in-kernel (no O(S^2) HBM stream);
    # an arbitrary tgt_mask still works via the bf16 streamed path.
    tgt_mask_k = None if tgt_is_causal else _prep_mask(tgt_mask, B, S, S)
    for i in range(num_layers):
        x = decoder_layer(params["layers"][i], x, encode_out,
                          src_mask_k, tgt_mask_k, n_heads, causal=tgt_is_causal)
    return x.astype(jnp.float32)


# ------------------------------ Parameter init ------------------------------

def _init_linear(key, d_in, d_out, w_dtype=MXU_DTYPE):
    kw, kb = jax.random.split(key)
    bound = 1.0 / math.sqrt(d_in)
    w = jax.random.uniform(kw, (d_in, d_out), jnp.float32, -bound, bound)
    b = jax.random.uniform(kb, (1, d_out), jnp.float32, -bound, bound)
    return w.astype(w_dtype), b


def _init_mha_self(key, d_model):
    ks = jax.random.split(key, 4)
    wq, bq = _init_linear(ks[0], d_model, d_model)
    wk, bk = _init_linear(ks[1], d_model, d_model)
    wv, bv = _init_linear(ks[2], d_model, d_model)
    wo, bo = _init_linear(ks[3], d_model, d_model)
    return dict(wqkv=jnp.concatenate([wq, wk, wv], axis=1),   # (D, 3D) bf16
                bqkv=jnp.concatenate([bq, bk, bv], axis=1),   # (1, 3D) f32
                wo=wo, bo=bo)


def _init_mha_cross(key, d_model):
    ks = jax.random.split(key, 4)
    wq, bq = _init_linear(ks[0], d_model, d_model)
    wk, bk = _init_linear(ks[1], d_model, d_model)
    wv, bv = _init_linear(ks[2], d_model, d_model)
    wo, bo = _init_linear(ks[3], d_model, d_model)
    return dict(wq=wq, bq=bq,
                wkv=jnp.concatenate([wk, wv], axis=1),        # (D, 2D) bf16
                bkv=jnp.concatenate([bk, bv], axis=1),        # (1, 2D) f32
                wo=wo, bo=bo)


def _init_layer(key, d_model):
    ks = jax.random.split(key, 4)
    w1, b1 = _init_linear(ks[2], d_model, d_model // 2)
    w2, b2 = _init_linear(ks[3], d_model // 2, d_model)
    return dict(
        sa=_init_mha_self(ks[0], d_model),
        sa2=_init_mha_cross(ks[1], d_model),
        w1=w1, b1=b1, w2=w2, b2=b2,
        ln1_g=jnp.ones((1, d_model), jnp.float32),
        ln1_b=jnp.zeros((1, d_model), jnp.float32),
        ln2_g=jnp.ones((1, d_model), jnp.float32),
        ln2_b=jnp.zeros((1, d_model), jnp.float32),
        ln3_g=jnp.ones((1, d_model), jnp.float32),
        ln3_b=jnp.zeros((1, d_model), jnp.float32),
    )


def _positional_embedding(d_model, max_seq):
    # exact formula from DynamicPositionEmbedding
    emb = np.array([[[math.sin(pos * math.exp(-math.log(10000) * i / d_model)
                               * math.exp(math.log(10000) / d_model * (i % 2))
                               + 0.5 * math.pi * (i % 2))
                      for i in range(d_model)]
                     for pos in range(max_seq)]], dtype=np.float32)
    return jnp.asarray(emb)


def init_decoder_params(key, num_layers, d_model, vocab_size, max_len,
                        pad_token=0):
    k_emb, k_layers = jax.random.split(key)
    emb = jax.random.normal(k_emb, (vocab_size, d_model), jnp.float32)
    emb = emb.at[pad_token].set(0.0)                 # padding_idx -> zero row
    layer_keys = jax.random.split(k_layers, num_layers)
    layers = [_init_layer(layer_keys[i], d_model) for i in range(num_layers)]
    return dict(embedding=emb,
                pos_emb=_positional_embedding(d_model, max_len),
                layers=layers)


# ----------------------------------- main -----------------------------------

if __name__ == "__main__":
    # small config consistent with the module: h = d_model // 64
    B, S, S_ENC = 2, 8, 8
    D_MODEL = 128
    NUM_LAYERS = 2
    VOCAB = 50
    MAX_LEN = 32
    PAD_TOKEN = 0
    H = D_MODEL // 64                 # 2 heads, d_k = 64

    key = jax.random.PRNGKey(0)
    k_params, k_tok, k_enc = jax.random.split(key, 3)

    params = init_decoder_params(k_params, NUM_LAYERS, D_MODEL, VOCAB,
                                 MAX_LEN, pad_token=PAD_TOKEN)

    tokens = jax.random.randint(k_tok, (B, S), 1, VOCAB, dtype=jnp.int32)
    encode_out = jax.random.normal(k_enc, (B, S_ENC, D_MODEL), jnp.float32)

    # source mask (all visible) streamed as bf16 0/1; causal target mask is
    # generated inside the self-attention kernel (tgt_is_causal=True).
    src_mask = jnp.ones((B, 1, S, S_ENC), jnp.float32)

    fwd = jax.jit(functools.partial(decoder_forward, d_model=D_MODEL,
                                    num_layers=NUM_LAYERS, n_heads=H,
                                    tgt_is_causal=True))
    out = fwd(params, tokens, encode_out, src_mask, None)
    out = jax.block_until_ready(out)
    assert out.shape == (B, S, D_MODEL) and bool(jnp.all(jnp.isfinite(out)))
    print("KERNEL_OK")
</pallas_src>

<mosaic_0001>
module attributes {stable_mosaic.version = 11 : i64} {
  func.func @cross_attn_ln_kernel(%arg0: i32, %arg1: memref<1x8x128xbf16, #tpu.memory_space<vmem>>, %arg2: memref<1x8x128xf32, #tpu.memory_space<vmem>>, %arg3: memref<128x128xbf16, #tpu.memory_space<vmem>>, %arg4: memref<1x128xf32, #tpu.memory_space<vmem>>, %arg5: memref<128x256xbf16, #tpu.memory_space<vmem>>, %arg6: memref<1x256xf32, #tpu.memory_space<vmem>>, %arg7: memref<128x128xbf16, #tpu.memory_space<vmem>>, %arg8: memref<1x128xf32, #tpu.memory_space<vmem>>, %arg9: memref<1x8x8xbf16, #tpu.memory_space<vmem>>, %arg10: memref<1x128xf32, #tpu.memory_space<vmem>>, %arg11: memref<1x128xf32, #tpu.memory_space<vmem>>, %arg12: memref<1x8x128xbf16, #tpu.memory_space<vmem>>) attributes {dimension_semantics = [#tpu.dimension_semantics<parallel>], iteration_bounds = array<i64: 2>, scalar_prefetch = 0 : i64, scratch_operands = 0 : i64, tpu.core_type = #tpu.core_type<tc>, window_params = [{transform_indices = @transform_0, window_bounds = array<i64: 1, 8, 128>}, {transform_indices = @transform_1, window_bounds = array<i64: 1, 8, 128>}, {pipeline_mode = #tpu.pipeline_mode<synchronous>, transform_indices = @transform_2, window_bounds = array<i64: 128, 128>}, {pipeline_mode = #tpu.pipeline_mode<synchronous>, transform_indices = @transform_3, window_bounds = array<i64: 1, 128>}, {pipeline_mode = #tpu.pipeline_mode<synchronous>, transform_indices = @transform_4, window_bounds = array<i64: 128, 256>}, {pipeline_mode = #tpu.pipeline_mode<synchronous>, transform_indices = @transform_5, window_bounds = array<i64: 1, 256>}, {pipeline_mode = #tpu.pipeline_mode<synchronous>, transform_indices = @transform_6, window_bounds = array<i64: 128, 128>}, {pipeline_mode = #tpu.pipeline_mode<synchronous>, transform_indices = @transform_7, window_bounds = array<i64: 1, 128>}, {transform_indices = @transform_8, window_bounds = array<i64: 1, 8, 8>}, {pipeline_mode = #tpu.pipeline_mode<synchronous>, transform_indices = @transform_9, window_bounds = array<i64: 1, 128>}, {pipeline_mode = #tpu.pipeline_mode<synchronous>, transform_indices = @transform_10, window_bounds = array<i64: 1, 128>}, {transform_indices = @transform_11, window_bounds = array<i64: 1, 8, 128>}]} {
    %c0 = arith.constant 0 : index
    %c0_0 = arith.constant 0 : index
    %c0_1 = arith.constant 0 : index
    %0 = vector.load %arg1[%c0, %c0_0, %c0_1] : memref<1x8x128xbf16, #tpu.memory_space<vmem>>, vector<1x8x128xbf16>
    %1 = vector.shape_cast %0 : vector<1x8x128xbf16> to vector<8x128xbf16>
    %2 = arith.extf %1 : vector<8x128xbf16> to vector<8x128xf32>
    %c0_2 = arith.constant 0 : index
    %c0_3 = arith.constant 0 : index
    %c0_4 = arith.constant 0 : index
    %3 = vector.load %arg2[%c0_2, %c0_3, %c0_4] : memref<1x8x128xf32, #tpu.memory_space<vmem>>, vector<1x8x128xf32>
    %4 = vector.shape_cast %3 : vector<1x8x128xf32> to vector<8x128xf32>
    %5 = arith.truncf %2 : vector<8x128xf32> to vector<8x128xbf16>
    %c0_5 = arith.constant 0 : index
    %c0_6 = arith.constant 0 : index
    %6 = vector.load %arg3[%c0_5, %c0_6] : memref<128x128xbf16, #tpu.memory_space<vmem>>, vector<128x128xbf16>
    %cst = arith.constant dense<0.000000e+00> : vector<8x128xf32>
    %7 = tpu.matmul %5, %6, %cst {dimension_numbers = #tpu.dot_dimension_numbers<[1], [0], [0], [1], [0, 0, 1, 1], [], []>} : vector<8x128xbf16>, vector<128x128xbf16>, vector<8x128xf32> -> vector<8x128xf32>
    %c0_7 = arith.constant 0 : index
    %c0_8 = arith.constant 0 : index
    %8 = vector.load %arg4[%c0_7, %c0_8] : memref<1x128xf32, #tpu.memory_space<vmem>>, vector<1x128xf32>
    %9 = vector.broadcast %8 : vector<1x128xf32> to vector<8x128xf32>
    %10 = arith.addf %7, %9 : vector<8x128xf32>
    %11 = arith.truncf %4 : vector<8x128xf32> to vector<8x128xbf16>
    %c0_9 = arith.constant 0 : index
    %c0_10 = arith.constant 0 : index
    %12 = vector.load %arg5[%c0_9, %c0_10] : memref<128x256xbf16, #tpu.memory_space<vmem>>, vector<128x256xbf16>
    %cst_11 = arith.constant dense<0.000000e+00> : vector<8x256xf32>
    %13 = tpu.matmul %11, %12, %cst_11 {dimension_numbers = #tpu.dot_dimension_numbers<[1], [0], [0], [1], [0, 0, 1, 1], [], []>} : vector<8x128xbf16>, vector<128x256xbf16>, vector<8x256xf32> -> vector<8x256xf32>
    %c0_12 = arith.constant 0 : index
    %c0_13 = arith.constant 0 : index
    %14 = vector.load %arg6[%c0_12, %c0_13] : memref<1x256xf32, #tpu.memory_space<vmem>>, vector<1x256xf32>
    %15 = vector.broadcast %14 : vector<1x256xf32> to vector<8x256xf32>
    %16 = arith.addf %13, %15 : vector<8x256xf32>
    %17 = vector.extract_strided_slice %16 {offsets = [0, 0], sizes = [8, 128], strides = [1, 1]} : vector<8x256xf32> to vector<8x128xf32>
    %18 = vector.extract_strided_slice %16 {offsets = [0, 128], sizes = [8, 128], strides = [1, 1]} : vector<8x256xf32> to vector<8x128xf32>
    %c0_14 = arith.constant 0 : index
    %c0_15 = arith.constant 0 : index
    %c0_16 = arith.constant 0 : index
    %19 = vector.load %arg9[%c0_14, %c0_15, %c0_16] : memref<1x8x8xbf16, #tpu.memory_space<vmem>>, vector<1x8x8xbf16>
    %20 = vector.shape_cast %19 : vector<1x8x8xbf16> to vector<8x8xbf16>
    %c0_17 = arith.constant 0 : index
    %c0_18 = arith.constant 0 : index
    %21 = vector.load %arg7[%c0_17, %c0_18] : memref<128x128xbf16, #tpu.memory_space<vmem>>, vector<128x128xbf16>
    %c0_19 = arith.constant 0 : index
    %c0_20 = arith.constant 0 : index
    %22 = vector.load %arg8[%c0_19, %c0_20] : memref<1x128xf32, #tpu.memory_space<vmem>>, vector<1x128xf32>
    %c0_21 = arith.constant 0 : index
    %c0_22 = arith.constant 0 : index
    %23 = vector.load %arg10[%c0_21, %c0_22] : memref<1x128xf32, #tpu.memory_space<vmem>>, vector<1x128xf32>
    %c0_23 = arith.constant 0 : index
    %c0_24 = arith.constant 0 : index
    %24 = vector.load %arg11[%c0_23, %c0_24] : memref<1x128xf32, #tpu.memory_space<vmem>>, vector<1x128xf32>
    %cst_25 = arith.constant 1.250000e-01 : f32
    %25 = vector.broadcast %cst_25 : f32 to vector<8x128xf32>
    %26 = arith.mulf %10, %25 : vector<8x128xf32>
    %27 = vector.extract_strided_slice %26 {offsets = [0, 0], sizes = [8, 64], strides = [1, 1]} : vector<8x128xf32> to vector<8x64xf32>
    %28 = arith.truncf %27 : vector<8x64xf32> to vector<8x64xbf16>
    %29 = vector.extract_strided_slice %17 {offsets = [0, 0], sizes = [8, 64], strides = [1, 1]} : vector<8x128xf32> to vector<8x64xf32>
    %30 = arith.truncf %29 : vector<8x64xf32> to vector<8x64xbf16>
    %31 = vector.extract_strided_slice %18 {offsets = [0, 0], sizes = [8, 64], strides = [1, 1]} : vector<8x128xf32> to vector<8x64xf32>
    %32 = arith.truncf %31 : vector<8x64xf32> to vector<8x64xbf16>
    %cst_26 = arith.constant dense<0.000000e+00> : vector<8x8xf32>
    %33 = tpu.matmul %28, %30, %cst_26 {dimension_numbers = #tpu.dot_dimension_numbers<[1], [1], [0], [0], [0, 0, 1, 0], [], []>} : vector<8x64xbf16>, vector<8x64xbf16>, vector<8x8xf32> -> vector<8x8xf32>
    %cst_27 = arith.constant 0.000000e+00 : bf16
    %34 = vector.broadcast %cst_27 : bf16 to vector<8x8xbf16>
    %35 = arith.cmpf oeq, %20, %34 : vector<8x8xbf16>
    %cst_28 = arith.constant -1.000000e+09 : f32
    %36 = vector.broadcast %cst_28 : f32 to vector<8x8xf32>
    %37 = arith.select %35, %36, %33 : vector<8x8xi1>, vector<8x8xf32>
    %cst_29 = arith.constant dense<0xFF800000> : vector<8xf32>
    %38 = vector.multi_reduction <maximumf>, %37, %cst_29 [1] : vector<8x8xf32> to vector<8xf32>
    %39 = vector.shape_cast %38 : vector<8xf32> to vector<8x1xf32>
    %40 = vector.broadcast %39 : vector<8x1xf32> to vector<8x8xf32>
    %41 = arith.subf %37, %40 : vector<8x8xf32>
    %42 = math.exp %41 : vector<8x8xf32>
    %cst_30 = arith.constant dense<0.000000e+00> : vector<8xf32>
    %43 = vector.multi_reduction <add>, %42, %cst_30 [1] : vector<8x8xf32> to vector<8xf32>
    %44 = vector.shape_cast %43 : vector<8xf32> to vector<8x1xf32>
    %45 = vector.broadcast %44 : vector<8x1xf32> to vector<8x8xf32>
    %46 = arith.divf %42, %45 : vector<8x8xf32>
    %47 = arith.truncf %46 : vector<8x8xf32> to vector<8x8xbf16>
    %cst_31 = arith.constant dense<0.000000e+00> : vector<8x64xf32>
    %48 = tpu.matmul %47, %32, %cst_31 {dimension_numbers = #tpu.dot_dimension_numbers<[1], [0], [0], [1], [0, 0, 1, 1], [], []>} : vector<8x8xbf16>, vector<8x64xbf16>, vector<8x64xf32> -> vector<8x64xf32>
    %49 = vector.extract_strided_slice %26 {offsets = [0, 64], sizes = [8, 64], strides = [1, 1]} : vector<8x128xf32> to vector<8x64xf32>
    %50 = arith.truncf %49 : vector<8x64xf32> to vector<8x64xbf16>
    %51 = vector.extract_strided_slice %17 {offsets = [0, 64], sizes = [8, 64], strides = [1, 1]} : vector<8x128xf32> to vector<8x64xf32>
    %52 = arith.truncf %51 : vector<8x64xf32> to vector<8x64xbf16>
    %53 = vector.extract_strided_slice %18 {offsets = [0, 64], sizes = [8, 64], strides = [1, 1]} : vector<8x128xf32> to vector<8x64xf32>
    %54 = arith.truncf %53 : vector<8x64xf32> to vector<8x64xbf16>
    %cst_32 = arith.constant dense<0.000000e+00> : vector<8x8xf32>
    %55 = tpu.matmul %50, %52, %cst_32 {dimension_numbers = #tpu.dot_dimension_numbers<[1], [1], [0], [0], [0, 0, 1, 0], [], []>} : vector<8x64xbf16>, vector<8x64xbf16>, vector<8x8xf32> -> vector<8x8xf32>
    %cst_33 = arith.constant 0.000000e+00 : bf16
    %56 = vector.broadcast %cst_33 : bf16 to vector<8x8xbf16>
    %57 = arith.cmpf oeq, %20, %56 : vector<8x8xbf16>
    %cst_34 = arith.constant -1.000000e+09 : f32
    %58 = vector.broadcast %cst_34 : f32 to vector<8x8xf32>
    %59 = arith.select %57, %58, %55 : vector<8x8xi1>, vector<8x8xf32>
    %cst_35 = arith.constant dense<0xFF800000> : vector<8xf32>
    %60 = vector.multi_reduction <maximumf>, %59, %cst_35 [1] : vector<8x8xf32> to vector<8xf32>
    %61 = vector.shape_cast %60 : vector<8xf32> to vector<8x1xf32>
    %62 = vector.broadcast %61 : vector<8x1xf32> to vector<8x8xf32>
    %63 = arith.subf %59, %62 : vector<8x8xf32>
    %64 = math.exp %63 : vector<8x8xf32>
    %cst_36 = arith.constant dense<0.000000e+00> : vector<8xf32>
    %65 = vector.multi_reduction <add>, %64, %cst_36 [1] : vector<8x8xf32> to vector<8xf32>
    %66 = vector.shape_cast %65 : vector<8xf32> to vector<8x1xf32>
    %67 = vector.broadcast %66 : vector<8x1xf32> to vector<8x8xf32>
    %68 = arith.divf %64, %67 : vector<8x8xf32>
    %69 = arith.truncf %68 : vector<8x8xf32> to vector<8x8xbf16>
    %cst_37 = arith.constant dense<0.000000e+00> : vector<8x64xf32>
    %70 = tpu.matmul %69, %54, %cst_37 {dimension_numbers = #tpu.dot_dimension_numbers<[1], [0], [0], [1], [0, 0, 1, 1], [], []>} : vector<8x8xbf16>, vector<8x64xbf16>, vector<8x64xf32> -> vector<8x64xf32>
    %71 = tpu.concatenate %48, %70 in 1 : vector<8x64xf32>, vector<8x64xf32> -> vector<8x128xf32>
    %72 = arith.truncf %71 : vector<8x128xf32> to vector<8x128xbf16>
    %cst_38 = arith.constant dense<0.000000e+00> : vector<8x128xf32>
    %73 = tpu.matmul %72, %21, %cst_38 {dimension_numbers = #tpu.dot_dimension_numbers<[1], [0], [0], [1], [0, 0, 1, 1], [], []>} : vector<8x128xbf16>, vector<128x128xbf16>, vector<8x128xf32> -> vector<8x128xf32>
    %74 = vector.broadcast %22 : vector<1x128xf32> to vector<8x128xf32>
    %75 = arith.addf %73, %74 : vector<8x128xf32>
    %76 = arith.addf %75, %2 : vector<8x128xf32>
    %cst_39 = arith.constant dense<0.000000e+00> : vector<8xf32>
    %77 = vector.multi_reduction <add>, %76, %cst_39 [1] : vector<8x128xf32> to vector<8xf32>
    %78 = vector.shape_cast %77 : vector<8xf32> to vector<8x1xf32>
    %cst_40 = arith.constant 1.280000e+02 : f32
    %79 = vector.broadcast %cst_40 : f32 to vector<8x1xf32>
    %80 = arith.divf %78, %79 : vector<8x1xf32>
    %81 = vector.broadcast %80 : vector<8x1xf32> to vector<8x128xf32>
    %82 = arith.subf %76, %81 : vector<8x128xf32>
    %83 = arith.mulf %82, %82 : vector<8x128xf32>
    %cst_41 = arith.constant dense<0.000000e+00> : vector<8xf32>
    %84 = vector.multi_reduction <add>, %83, %cst_41 [1] : vector<8x128xf32> to vector<8xf32>
    %85 = vector.shape_cast %84 : vector<8xf32> to vector<8x1xf32>
    %cst_42 = arith.constant 1.280000e+02 : f32
    %86 = vector.broadcast %cst_42 : f32 to vector<8x1xf32>
    %87 = arith.divf %85, %86 : vector<8x1xf32>
    %88 = vector.broadcast %80 : vector<8x1xf32> to vector<8x128xf32>
    %89 = arith.subf %76, %88 : vector<8x128xf32>
    %cst_43 = arith.constant 9.99999997E-7 : f32
    %90 = vector.broadcast %cst_43 : f32 to vector<8x1xf32>
    %91 = arith.addf %87, %90 : vector<8x1xf32>
    %92 = math.rsqrt %91 : vector<8x1xf32>
    %93 = vector.broadcast %92 : vector<8x1xf32> to vector<8x128xf32>
    %94 = arith.mulf %89, %93 : vector<8x128xf32>
    %95 = vector.broadcast %23 : vector<1x128xf32> to vector<8x128xf32>
    %96 = arith.mulf %94, %95 : vector<8x128xf32>
    %97 = vector.broadcast %24 : vector<1x128xf32> to vector<8x128xf32>
    %98 = arith.addf %96, %97 : vector<8x128xf32>
    %99 = arith.truncf %98 : vector<8x128xf32> to vector<8x128xbf16>
    %c0_44 = arith.constant 0 : index
    %c0_45 = arith.constant 0 : index
    %c0_46 = arith.constant 0 : index
    %100 = vector.load %arg12[%c0_44, %c0_45, %c0_46] : memref<1x8x128xbf16, #tpu.memory_space<vmem>>, vector<1x8x128xbf16>
    %101 = vector.shape_cast %100 : vector<1x8x128xbf16> to vector<8x128xbf16>
    %102 = vector.shape_cast %99 : vector<8x128xbf16> to vector<1x8x128xbf16>
    tpu.vector_store %arg12[%c0_44, %c0_45, %c0_46], %102 {strides = array<i32>} : memref<1x8x128xbf16, #tpu.memory_space<vmem>>, vector<1x8x128xbf16>,
    return
  }
  func.func @transform_0(%arg0: i32) -> (i32, i32, i32) {
    %c0_i32 = arith.constant 0 : i32
    %c0_i32_0 = arith.constant 0 : i32
    %c0_i32_1 = arith.constant 0 : i32
    return %arg0, %c0_i32, %c0_i32_0 : i32, i32, i32
  }
  func.func @transform_1(%arg0: i32) -> (i32, i32, i32) {
    %c0_i32 = arith.constant 0 : i32
    %c0_i32_0 = arith.constant 0 : i32
    %c0_i32_1 = arith.constant 0 : i32
    return %arg0, %c0_i32, %c0_i32_0 : i32, i32, i32
  }
  func.func @transform_2(%arg0: i32) -> (i32, i32) {
    %c0_i32 = arith.constant 0 : i32
    %c0_i32_0 = arith.constant 0 : i32
    %c0_i32_1 = arith.constant 0 : i32
    return %c0_i32, %c0_i32_0 : i32, i32
  }
  func.func @transform_3(%arg0: i32) -> (i32, i32) {
    %c0_i32 = arith.constant 0 : i32
    %c0_i32_0 = arith.constant 0 : i32
    %c0_i32_1 = arith.constant 0 : i32
    return %c0_i32, %c0_i32_0 : i32, i32
  }
  func.func @transform_4(%arg0: i32) -> (i32, i32) {
    %c0_i32 = arith.constant 0 : i32
    %c0_i32_0 = arith.constant 0 : i32
    %c0_i32_1 = arith.constant 0 : i32
    return %c0_i32, %c0_i32_0 : i32, i32
  }
  func.func @transform_5(%arg0: i32) -> (i32, i32) {
    %c0_i32 = arith.constant 0 : i32
    %c0_i32_0 = arith.constant 0 : i32
    %c0_i32_1 = arith.constant 0 : i32
    return %c0_i32, %c0_i32_0 : i32, i32
  }
  func.func @transform_6(%arg0: i32) -> (i32, i32) {
    %c0_i32 = arith.constant 0 : i32
    %c0_i32_0 = arith.constant 0 : i32
    %c0_i32_1 = arith.constant 0 : i32
    return %c0_i32, %c0_i32_0 : i32, i32
  }
  func.func @transform_7(%arg0: i32) -> (i32, i32) {
    %c0_i32 = arith.constant 0 : i32
    %c0_i32_0 = arith.constant 0 : i32
    %c0_i32_1 = arith.constant 0 : i32
    return %c0_i32, %c0_i32_0 : i32, i32
  }
  func.func @transform_8(%arg0: i32) -> (i32, i32, i32) {
    %c0_i32 = arith.constant 0 : i32
    %c0_i32_0 = arith.constant 0 : i32
    %c0_i32_1 = arith.constant 0 : i32
    return %arg0, %c0_i32, %c0_i32_0 : i32, i32, i32
  }
  func.func @transform_9(%arg0: i32) -> (i32, i32) {
    %c0_i32 = arith.constant 0 : i32
    %c0_i32_0 = arith.constant 0 : i32
    %c0_i32_1 = arith.constant 0 : i32
    return %c0_i32, %c0_i32_0 : i32, i32
  }
  func.func @transform_10(%arg0: i32) -> (i32, i32) {
    %c0_i32 = arith.constant 0 : i32
    %c0_i32_0 = arith.constant 0 : i32
    %c0_i32_1 = arith.constant 0 : i32
    return %c0_i32, %c0_i32_0 : i32, i32
  }
  func.func @transform_11(%arg0: i32) -> (i32, i32, i32) {
    %c0_i32 = arith.constant 0 : i32
    %c0_i32_0 = arith.constant 0 : i32
    %c0_i32_1 = arith.constant 0 : i32
    return %arg0, %c0_i32, %c0_i32_0 : i32, i32, i32
  }
}

module attributes {stable_mosaic.version = 11 : i64} {
  func.func @ffn_ln_kernel(%arg0: i32, %arg1: memref<8x128xbf16, #tpu.memory_space<vmem>>, %arg2: memref<128x64xbf16, #tpu.memory_space<vmem>>, %arg3: memref<1x64xf32, #tpu.memory_space<vmem>>, %arg4: memref<64x128xbf16, #tpu.memory_space<vmem>>, %arg5: memref<1x128xf32, #tpu.memory_space<vmem>>, %arg6: memref<1x128xf32, #tpu.memory_space<vmem>>, %arg7: memref<1x128xf32, #tpu.memory_space<vmem>>, %arg8: memref<8x128xbf16, #tpu.memory_space<vmem>>) attributes {dimension_semantics = [#tpu.dimension_semantics<parallel>], iteration_bounds = array<i64: 2>, scalar_prefetch = 0 : i64, scratch_operands = 0 : i64, tpu.core_type = #tpu.core_type<tc>, window_params = [{transform_indices = @transform_0, window_bounds = array<i64: 8, 128>}, {pipeline_mode = #tpu.pipeline_mode<synchronous>, transform_indices = @transform_1, window_bounds = array<i64: 128, 64>}, {pipeline_mode = #tpu.pipeline_mode<synchronous>, transform_indices = @transform_2, window_bounds = array<i64: 1, 64>}, {pipeline_mode = #tpu.pipeline_mode<synchronous>, transform_indices = @transform_3, window_bounds = array<i64: 64, 128>}, {pipeline_mode = #tpu.pipeline_mode<synchronous>, transform_indices = @transform_4, window_bounds = array<i64: 1, 128>}, {pipeline_mode = #tpu.pipeline_mode<synchronous>, transform_indices = @transform_5, window_bounds = array<i64: 1, 128>}, {pipeline_mode = #tpu.pipeline_mode<synchronous>, transform_indices = @transform_6, window_bounds = array<i64: 1, 128>}, {transform_indices = @transform_7, window_bounds = array<i64: 8, 128>}]} {
    %c0 = arith.constant 0 : index
    %c0_0 = arith.constant 0 : index
    %0 = vector.load %arg1[%c0, %c0_0] : memref<8x128xbf16, #tpu.memory_space<vmem>>, vector<8x128xbf16>
    %1 = arith.extf %0 : vector<8x128xbf16> to vector<8x128xf32>
    %2 = arith.truncf %1 : vector<8x128xf32> to vector<8x128xbf16>
    %c0_1 = arith.constant 0 : index
    %c0_2 = arith.constant 0 : index
    %3 = vector.load %arg2[%c0_1, %c0_2] : memref<128x64xbf16, #tpu.memory_space<vmem>>, vector<128x64xbf16>
    %cst = arith.constant dense<0.000000e+00> : vector<8x64xf32>
    %4 = tpu.matmul %2, %3, %cst {dimension_numbers = #tpu.dot_dimension_numbers<[1], [0], [0], [1], [0, 0, 1, 1], [], []>} : vector<8x128xbf16>, vector<128x64xbf16>, vector<8x64xf32> -> vector<8x64xf32>
    %c0_3 = arith.constant 0 : index
    %c0_4 = arith.constant 0 : index
    %5 = vector.load %arg3[%c0_3, %c0_4] : memref<1x64xf32, #tpu.memory_space<vmem>>, vector<1x64xf32>
    %6 = vector.broadcast %5 : vector<1x64xf32> to vector<8x64xf32>
    %7 = arith.addf %4, %6 : vector<8x64xf32>
    %cst_5 = arith.constant 0.000000e+00 : f32
    %8 = vector.broadcast %cst_5 : f32 to vector<8x64xf32>
    %9 = arith.maximumf %7, %8 : vector<8x64xf32>
    %10 = arith.truncf %9 : vector<8x64xf32> to vector<8x64xbf16>
    %c0_6 = arith.constant 0 : index
    %c0_7 = arith.constant 0 : index
    %11 = vector.load %arg4[%c0_6, %c0_7] : memref<64x128xbf16, #tpu.memory_space<vmem>>, vector<64x128xbf16>
    %cst_8 = arith.constant dense<0.000000e+00> : vector<8x128xf32>
    %12 = tpu.matmul %10, %11, %cst_8 {dimension_numbers = #tpu.dot_dimension_numbers<[1], [0], [0], [1], [0, 0, 1, 1], [], []>} : vector<8x64xbf16>, vector<64x128xbf16>, vector<8x128xf32> -> vector<8x128xf32>
    %c0_9 = arith.constant 0 : index
    %c0_10 = arith.constant 0 : index
    %13 = vector.load %arg5[%c0_9, %c0_10] : memref<1x128xf32, #tpu.memory_space<vmem>>, vector<1x128xf32>
    %14 = vector.broadcast %13 : vector<1x128xf32> to vector<8x128xf32>
    %15 = arith.addf %12, %14 : vector<8x128xf32>
    %16 = arith.addf %15, %1 : vector<8x128xf32>
    %cst_11 = arith.constant dense<0.000000e+00> : vector<8xf32>
    %17 = vector.multi_reduction <add>, %16, %cst_11 [1] : vector<8x128xf32> to vector<8xf32>
    %18 = vector.shape_cast %17 : vector<8xf32> to vector<8x1xf32>
    %cst_12 = arith.constant 1.280000e+02 : f32
    %19 = vector.broadcast %cst_12 : f32 to vector<8x1xf32>
    %20 = arith.divf %18, %19 : vector<8x1xf32>
    %21 = vector.broadcast %20 : vector<8x1xf32> to vector<8x128xf32>
    %22 = arith.subf %16, %21 : vector<8x128xf32>
    %23 = arith.mulf %22, %22 : vector<8x128xf32>
    %cst_13 = arith.constant dense<0.000000e+00> : vector<8xf32>
    %24 = vector.multi_reduction <add>, %23, %cst_13 [1] : vector<8x128xf32> to vector<8xf32>
    %25 = vector.shape_cast %24 : vector<8xf32> to vector<8x1xf32>
    %cst_14 = arith.constant 1.280000e+02 : f32
    %26 = vector.broadcast %cst_14 : f32 to vector<8x1xf32>
    %27 = arith.divf %25, %26 : vector<8x1xf32>
    %28 = vector.broadcast %20 : vector<8x1xf32> to vector<8x128xf32>
    %29 = arith.subf %16, %28 : vector<8x128xf32>
    %cst_15 = arith.constant 9.99999997E-7 : f32
    %30 = vector.broadcast %cst_15 : f32 to vector<8x1xf32>
    %31 = arith.addf %27, %30 : vector<8x1xf32>
    %32 = math.rsqrt %31 : vector<8x1xf32>
    %33 = vector.broadcast %32 : vector<8x1xf32> to vector<8x128xf32>
    %34 = arith.mulf %29, %33 : vector<8x128xf32>
    %c0_16 = arith.constant 0 : index
    %c0_17 = arith.constant 0 : index
    %35 = vector.load %arg6[%c0_16, %c0_17] : memref<1x128xf32, #tpu.memory_space<vmem>>, vector<1x128xf32>
    %36 = vector.broadcast %35 : vector<1x128xf32> to vector<8x128xf32>
    %37 = arith.mulf %34, %36 : vector<8x128xf32>
    %c0_18 = arith.constant 0 : index
    %c0_19 = arith.constant 0 : index
    %38 = vector.load %arg7[%c0_18, %c0_19] : memref<1x128xf32, #tpu.memory_space<vmem>>, vector<1x128xf32>
    %39 = vector.broadcast %38 : vector<1x128xf32> to vector<8x128xf32>
    %40 = arith.addf %37, %39 : vector<8x128xf32>
    %41 = arith.truncf %40 : vector<8x128xf32> to vector<8x128xbf16>
    %c0_20 = arith.constant 0 : index
    %c0_21 = arith.constant 0 : index
    %42 = vector.load %arg8[%c0_20, %c0_21] : memref<8x128xbf16, #tpu.memory_space<vmem>>, vector<8x128xbf16>
    tpu.vector_store %arg8[%c0_20, %c0_21], %41 {strides = array<i32>} : memref<8x128xbf16, #tpu.memory_space<vmem>>, vector<8x128xbf16>,
    return
  }
  func.func @transform_0(%arg0: i32) -> (i32, i32) {
    %c0_i32 = arith.constant 0 : i32
    %c0_i32_0 = arith.constant 0 : i32
    return %arg0, %c0_i32 : i32, i32
  }
  func.func @transform_1(%arg0: i32) -> (i32, i32) {
    %c0_i32 = arith.constant 0 : i32
    %c0_i32_0 = arith.constant 0 : i32
    %c0_i32_1 = arith.constant 0 : i32
    return %c0_i32, %c0_i32_0 : i32, i32
  }
  func.func @transform_2(%arg0: i32) -> (i32, i32) {
    %c0_i32 = arith.constant 0 : i32
    %c0_i32_0 = arith.constant 0 : i32
    %c0_i32_1 = arith.constant 0 : i32
    return %c0_i32, %c0_i32_0 : i32, i32
  }
  func.func @transform_3(%arg0: i32) -> (i32, i32) {
    %c0_i32 = arith.constant 0 : i32
    %c0_i32_0 = arith.constant 0 : i32
    %c0_i32_1 = arith.constant 0 : i32
    return %c0_i32, %c0_i32_0 : i32, i32
  }
  func.func @transform_4(%arg0: i32) -> (i32, i32) {
    %c0_i32 = arith.constant 0 : i32
    %c0_i32_0 = arith.constant 0 : i32
    %c0_i32_1 = arith.constant 0 : i32
    return %c0_i32, %c0_i32_0 : i32, i32
  }
  func.func @transform_5(%arg0: i32) -> (i32, i32) {
    %c0_i32 = arith.constant 0 : i32
    %c0_i32_0 = arith.constant 0 : i32
    %c0_i32_1 = arith.constant 0 : i32
    return %c0_i32, %c0_i32_0 : i32, i32
  }
  func.func @transform_6(%arg0: i32) -> (i32, i32) {
    %c0_i32 = arith.constant 0 : i32
    %c0_i32_0 = arith.constant 0 : i32
    %c0_i32_1 = arith.constant 0 : i32
    return %c0_i32, %c0_i32_0 : i32, i32
  }
  func.func @transform_7(%arg0: i32) -> (i32, i32) {
    %c0_i32 = arith.constant 0 : i32
    %c0_i32_0 = arith.constant 0 : i32
    return %arg0, %c0_i32 : i32, i32
  }
}

module attributes {stable_mosaic.version = 11 : i64} {
  func.func @self_attn_ln_kernel(%arg0: i32, %arg1: memref<1x8x128xf32, #tpu.memory_space<vmem>>, %arg2: memref<128x384xbf16, #tpu.memory_space<vmem>>, %arg3: memref<1x384xf32, #tpu.memory_space<vmem>>, %arg4: memref<128x128xbf16, #tpu.memory_space<vmem>>, %arg5: memref<1x128xf32, #tpu.memory_space<vmem>>, %arg6: memref<1x128xf32, #tpu.memory_space<vmem>>, %arg7: memref<1x128xf32, #tpu.memory_space<vmem>>, %arg8: memref<1x8x128xbf16, #tpu.memory_space<vmem>>) attributes {dimension_semantics = [#tpu.dimension_semantics<parallel>], iteration_bounds = array<i64: 2>, scalar_prefetch = 0 : i64, scratch_operands = 0 : i64, tpu.core_type = #tpu.core_type<tc>, window_params = [{transform_indices = @transform_0, window_bounds = array<i64: 1, 8, 128>}, {pipeline_mode = #tpu.pipeline_mode<synchronous>, transform_indices = @transform_1, window_bounds = array<i64: 128, 384>}, {pipeline_mode = #tpu.pipeline_mode<synchronous>, transform_indices = @transform_2, window_bounds = array<i64: 1, 384>}, {pipeline_mode = #tpu.pipeline_mode<synchronous>, transform_indices = @transform_3, window_bounds = array<i64: 128, 128>}, {pipeline_mode = #tpu.pipeline_mode<synchronous>, transform_indices = @transform_4, window_bounds = array<i64: 1, 128>}, {pipeline_mode = #tpu.pipeline_mode<synchronous>, transform_indices = @transform_5, window_bounds = array<i64: 1, 128>}, {pipeline_mode = #tpu.pipeline_mode<synchronous>, transform_indices = @transform_6, window_bounds = array<i64: 1, 128>}, {transform_indices = @transform_7, window_bounds = array<i64: 1, 8, 128>}]} {
    %c0 = arith.constant 0 : index
    %c0_0 = arith.constant 0 : index
    %c0_1 = arith.constant 0 : index
    %0 = vector.load %arg1[%c0, %c0_0, %c0_1] : memref<1x8x128xf32, #tpu.memory_space<vmem>>, vector<1x8x128xf32>
    %1 = vector.shape_cast %0 : vector<1x8x128xf32> to vector<8x128xf32>
    %2 = arith.truncf %1 : vector<8x128xf32> to vector<8x128xbf16>
    %c0_2 = arith.constant 0 : index
    %c0_3 = arith.constant 0 : index
    %3 = vector.load %arg2[%c0_2, %c0_3] : memref<128x384xbf16, #tpu.memory_space<vmem>>, vector<128x384xbf16>
    %cst = arith.constant dense<0.000000e+00> : vector<8x384xf32>
    %4 = tpu.matmul %2, %3, %cst {dimension_numbers = #tpu.dot_dimension_numbers<[1], [0], [0], [1], [0, 0, 1, 1], [], []>} : vector<8x128xbf16>, vector<128x384xbf16>, vector<8x384xf32> -> vector<8x384xf32>
    %c0_4 = arith.constant 0 : index
    %c0_5 = arith.constant 0 : index
    %5 = vector.load %arg3[%c0_4, %c0_5] : memref<1x384xf32, #tpu.memory_space<vmem>>, vector<1x384xf32>
    %6 = vector.broadcast %5 : vector<1x384xf32> to vector<8x384xf32>
    %7 = arith.addf %4, %6 : vector<8x384xf32>
    %8 = vector.extract_strided_slice %7 {offsets = [0, 0], sizes = [8, 128], strides = [1, 1]} : vector<8x384xf32> to vector<8x128xf32>
    %9 = vector.extract_strided_slice %7 {offsets = [0, 128], sizes = [8, 128], strides = [1, 1]} : vector<8x384xf32> to vector<8x128xf32>
    %10 = vector.extract_strided_slice %7 {offsets = [0, 256], sizes = [8, 128], strides = [1, 1]} : vector<8x384xf32> to vector<8x128xf32>
    %c0_6 = arith.constant 0 : index
    %c0_7 = arith.constant 0 : index
    %11 = vector.load %arg4[%c0_6, %c0_7] : memref<128x128xbf16, #tpu.memory_space<vmem>>, vector<128x128xbf16>
    %c0_8 = arith.constant 0 : index
    %c0_9 = arith.constant 0 : index
    %12 = vector.load %arg5[%c0_8, %c0_9] : memref<1x128xf32, #tpu.memory_space<vmem>>, vector<1x128xf32>
    %c0_10 = arith.constant 0 : index
    %c0_11 = arith.constant 0 : index
    %13 = vector.load %arg6[%c0_10, %c0_11] : memref<1x128xf32, #tpu.memory_space<vmem>>, vector<1x128xf32>
    %c0_12 = arith.constant 0 : index
    %c0_13 = arith.constant 0 : index
    %14 = vector.load %arg7[%c0_12, %c0_13] : memref<1x128xf32, #tpu.memory_space<vmem>>, vector<1x128xf32>
    %cst_14 = arith.constant 1.250000e-01 : f32
    %15 = vector.broadcast %cst_14 : f32 to vector<8x128xf32>
    %16 = arith.mulf %8, %15 : vector<8x128xf32>
    %17 = tpu.iota {dimensions = array<i32: 0>} : vector<8x8xi32>
    %18 = tpu.iota {dimensions = array<i32: 1>} : vector<8x8xi32>
    %19 = arith.cmpi sle, %18, %17 : vector<8x8xi32>
    %20 = vector.extract_strided_slice %16 {offsets = [0, 0], sizes = [8, 64], strides = [1, 1]} : vector<8x128xf32> to vector<8x64xf32>
    %21 = arith.truncf %20 : vector<8x64xf32> to vector<8x64xbf16>
    %22 = vector.extract_strided_slice %9 {offsets = [0, 0], sizes = [8, 64], strides = [1, 1]} : vector<8x128xf32> to vector<8x64xf32>
    %23 = arith.truncf %22 : vector<8x64xf32> to vector<8x64xbf16>
    %24 = vector.extract_strided_slice %10 {offsets = [0, 0], sizes = [8, 64], strides = [1, 1]} : vector<8x128xf32> to vector<8x64xf32>
    %25 = arith.truncf %24 : vector<8x64xf32> to vector<8x64xbf16>
    %cst_15 = arith.constant dense<0.000000e+00> : vector<8x8xf32>
    %26 = tpu.matmul %21, %23, %cst_15 {dimension_numbers = #tpu.dot_dimension_numbers<[1], [1], [0], [0], [0, 0, 1, 0], [], []>} : vector<8x64xbf16>, vector<8x64xbf16>, vector<8x8xf32> -> vector<8x8xf32>
    %cst_16 = arith.constant -1.000000e+09 : f32
    %27 = vector.broadcast %cst_16 : f32 to vector<8x8xf32>
    %28 = arith.select %19, %26, %27 : vector<8x8xi1>, vector<8x8xf32>
    %cst_17 = arith.constant dense<0xFF800000> : vector<8xf32>
    %29 = vector.multi_reduction <maximumf>, %28, %cst_17 [1] : vector<8x8xf32> to vector<8xf32>
    %30 = vector.shape_cast %29 : vector<8xf32> to vector<8x1xf32>
    %31 = vector.broadcast %30 : vector<8x1xf32> to vector<8x8xf32>
    %32 = arith.subf %28, %31 : vector<8x8xf32>
    %33 = math.exp %32 : vector<8x8xf32>
    %cst_18 = arith.constant dense<0.000000e+00> : vector<8xf32>
    %34 = vector.multi_reduction <add>, %33, %cst_18 [1] : vector<8x8xf32> to vector<8xf32>
    %35 = vector.shape_cast %34 : vector<8xf32> to vector<8x1xf32>
    %36 = vector.broadcast %35 : vector<8x1xf32> to vector<8x8xf32>
    %37 = arith.divf %33, %36 : vector<8x8xf32>
    %38 = arith.truncf %37 : vector<8x8xf32> to vector<8x8xbf16>
    %cst_19 = arith.constant dense<0.000000e+00> : vector<8x64xf32>
    %39 = tpu.matmul %38, %25, %cst_19 {dimension_numbers = #tpu.dot_dimension_numbers<[1], [0], [0], [1], [0, 0, 1, 1], [], []>} : vector<8x8xbf16>, vector<8x64xbf16>, vector<8x64xf32> -> vector<8x64xf32>
    %40 = vector.extract_strided_slice %16 {offsets = [0, 64], sizes = [8, 64], strides = [1, 1]} : vector<8x128xf32> to vector<8x64xf32>
    %41 = arith.truncf %40 : vector<8x64xf32> to vector<8x64xbf16>
    %42 = vector.extract_strided_slice %9 {offsets = [0, 64], sizes = [8, 64], strides = [1, 1]} : vector<8x128xf32> to vector<8x64xf32>
    %43 = arith.truncf %42 : vector<8x64xf32> to vector<8x64xbf16>
    %44 = vector.extract_strided_slice %10 {offsets = [0, 64], sizes = [8, 64], strides = [1, 1]} : vector<8x128xf32> to vector<8x64xf32>
    %45 = arith.truncf %44 : vector<8x64xf32> to vector<8x64xbf16>
    %cst_20 = arith.constant dense<0.000000e+00> : vector<8x8xf32>
    %46 = tpu.matmul %41, %43, %cst_20 {dimension_numbers = #tpu.dot_dimension_numbers<[1], [1], [0], [0], [0, 0, 1, 0], [], []>} : vector<8x64xbf16>, vector<8x64xbf16>, vector<8x8xf32> -> vector<8x8xf32>
    %cst_21 = arith.constant -1.000000e+09 : f32
    %47 = vector.broadcast %cst_21 : f32 to vector<8x8xf32>
    %48 = arith.select %19, %46, %47 : vector<8x8xi1>, vector<8x8xf32>
    %cst_22 = arith.constant dense<0xFF800000> : vector<8xf32>
    %49 = vector.multi_reduction <maximumf>, %48, %cst_22 [1] : vector<8x8xf32> to vector<8xf32>
    %50 = vector.shape_cast %49 : vector<8xf32> to vector<8x1xf32>
    %51 = vector.broadcast %50 : vector<8x1xf32> to vector<8x8xf32>
    %52 = arith.subf %48, %51 : vector<8x8xf32>
    %53 = math.exp %52 : vector<8x8xf32>
    %cst_23 = arith.constant dense<0.000000e+00> : vector<8xf32>
    %54 = vector.multi_reduction <add>, %53, %cst_23 [1] : vector<8x8xf32> to vector<8xf32>
    %55 = vector.shape_cast %54 : vector<8xf32> to vector<8x1xf32>
    %56 = vector.broadcast %55 : vector<8x1xf32> to vector<8x8xf32>
    %57 = arith.divf %53, %56 : vector<8x8xf32>
    %58 = arith.truncf %57 : vector<8x8xf32> to vector<8x8xbf16>
    %cst_24 = arith.constant dense<0.000000e+00> : vector<8x64xf32>
    %59 = tpu.matmul %58, %45, %cst_24 {dimension_numbers = #tpu.dot_dimension_numbers<[1], [0], [0], [1], [0, 0, 1, 1], [], []>} : vector<8x8xbf16>, vector<8x64xbf16>, vector<8x64xf32> -> vector<8x64xf32>
    %60 = tpu.concatenate %39, %59 in 1 : vector<8x64xf32>, vector<8x64xf32> -> vector<8x128xf32>
    %61 = arith.truncf %60 : vector<8x128xf32> to vector<8x128xbf16>
    %cst_25 = arith.constant dense<0.000000e+00> : vector<8x128xf32>
    %62 = tpu.matmul %61, %11, %cst_25 {dimension_numbers = #tpu.dot_dimension_numbers<[1], [0], [0], [1], [0, 0, 1, 1], [], []>} : vector<8x128xbf16>, vector<128x128xbf16>, vector<8x128xf32> -> vector<8x128xf32>
    %63 = vector.broadcast %12 : vector<1x128xf32> to vector<8x128xf32>
    %64 = arith.addf %62, %63 : vector<8x128xf32>
    %65 = arith.addf %64, %1 : vector<8x128xf32>
    %cst_26 = arith.constant dense<0.000000e+00> : vector<8xf32>
    %66 = vector.multi_reduction <add>, %65, %cst_26 [1] : vector<8x128xf32> to vector<8xf32>
    %67 = vector.shape_cast %66 : vector<8xf32> to vector<8x1xf32>
    %cst_27 = arith.constant 1.280000e+02 : f32
    %68 = vector.broadcast %cst_27 : f32 to vector<8x1xf32>
    %69 = arith.divf %67, %68 : vector<8x1xf32>
    %70 = vector.broadcast %69 : vector<8x1xf32> to vector<8x128xf32>
    %71 = arith.subf %65, %70 : vector<8x128xf32>
    %72 = arith.mulf %71, %71 : vector<8x128xf32>
    %cst_28 = arith.constant dense<0.000000e+00> : vector<8xf32>
    %73 = vector.multi_reduction <add>, %72, %cst_28 [1] : vector<8x128xf32> to vector<8xf32>
    %74 = vector.shape_cast %73 : vector<8xf32> to vector<8x1xf32>
    %cst_29 = arith.constant 1.280000e+02 : f32
    %75 = vector.broadcast %cst_29 : f32 to vector<8x1xf32>
    %76 = arith.divf %74, %75 : vector<8x1xf32>
    %77 = vector.broadcast %69 : vector<8x1xf32> to vector<8x128xf32>
    %78 = arith.subf %65, %77 : vector<8x128xf32>
    %cst_30 = arith.constant 9.99999997E-7 : f32
    %79 = vector.broadcast %cst_30 : f32 to vector<8x1xf32>
    %80 = arith.addf %76, %79 : vector<8x1xf32>
    %81 = math.rsqrt %80 : vector<8x1xf32>
    %82 = vector.broadcast %81 : vector<8x1xf32> to vector<8x128xf32>
    %83 = arith.mulf %78, %82 : vector<8x128xf32>
    %84 = vector.broadcast %13 : vector<1x128xf32> to vector<8x128xf32>
    %85 = arith.mulf %83, %84 : vector<8x128xf32>
    %86 = vector.broadcast %14 : vector<1x128xf32> to vector<8x128xf32>
    %87 = arith.addf %85, %86 : vector<8x128xf32>
    %88 = arith.truncf %87 : vector<8x128xf32> to vector<8x128xbf16>
    %c0_31 = arith.constant 0 : index
    %c0_32 = arith.constant 0 : index
    %c0_33 = arith.constant 0 : index
    %89 = vector.load %arg8[%c0_31, %c0_32, %c0_33] : memref<1x8x128xbf16, #tpu.memory_space<vmem>>, vector<1x8x128xbf16>
    %90 = vector.shape_cast %89 : vector<1x8x128xbf16> to vector<8x128xbf16>
    %91 = vector.shape_cast %88 : vector<8x128xbf16> to vector<1x8x128xbf16>
    tpu.vector_store %arg8[%c0_31, %c0_32, %c0_33], %91 {strides = array<i32>} : memref<1x8x128xbf16, #tpu.memory_space<vmem>>, vector<1x8x128xbf16>,
    return
  }
  func.func @transform_0(%arg0: i32) -> (i32, i32, i32) {
    %c0_i32 = arith.constant 0 : i32
    %c0_i32_0 = arith.constant 0 : i32
    %c0_i32_1 = arith.constant 0 : i32
    return %arg0, %c0_i32, %c0_i32_0 : i32, i32, i32
  }
  func.func @transform_1(%arg0: i32) -> (i32, i32) {
    %c0_i32 = arith.constant 0 : i32
    %c0_i32_0 = arith.constant 0 : i32
    %c0_i32_1 = arith.constant 0 : i32
    return %c0_i32, %c0_i32_0 : i32, i32
  }
  func.func @transform_2(%arg0: i32) -> (i32, i32) {
    %c0_i32 = arith.constant 0 : i32
    %c0_i32_0 = arith.constant 0 : i32
    %c0_i32_1 = arith.constant 0 : i32
    return %c0_i32, %c0_i32_0 : i32, i32
  }
  func.func @transform_3(%arg0: i32) -> (i32, i32) {
    %c0_i32 = arith.constant 0 : i32
    %c0_i32_0 = arith.constant 0 : i32
    %c0_i32_1 = arith.constant 0 : i32
    return %c0_i32, %c0_i32_0 : i32, i32
  }
  func.func @transform_4(%arg0: i32) -> (i32, i32) {
    %c0_i32 = arith.constant 0 : i32
    %c0_i32_0 = arith.constant 0 : i32
    %c0_i32_1 = arith.constant 0 : i32
    return %c0_i32, %c0_i32_0 : i32, i32
  }
  func.func @transform_5(%arg0: i32) -> (i32, i32) {
    %c0_i32 = arith.constant 0 : i32
    %c0_i32_0 = arith.constant 0 : i32
    %c0_i32_1 = arith.constant 0 : i32
    return %c0_i32, %c0_i32_0 : i32, i32
  }
  func.func @transform_6(%arg0: i32) -> (i32, i32) {
    %c0_i32 = arith.constant 0 : i32
    %c0_i32_0 = arith.constant 0 : i32
    %c0_i32_1 = arith.constant 0 : i32
    return %c0_i32, %c0_i32_0 : i32, i32
  }
  func.func @transform_7(%arg0: i32) -> (i32, i32, i32) {
    %c0_i32 = arith.constant 0 : i32
    %c0_i32_0 = arith.constant 0 : i32
    %c0_i32_1 = arith.constant 0 : i32
    return %arg0, %c0_i32, %c0_i32_0 : i32, i32, i32
  }
}

module attributes {stable_mosaic.version = 11 : i64} {
  func.func @self_attn_ln_kernel(%arg0: i32, %arg1: memref<1x8x128xbf16, #tpu.memory_space<vmem>>, %arg2: memref<128x384xbf16, #tpu.memory_space<vmem>>, %arg3: memref<1x384xf32, #tpu.memory_space<vmem>>, %arg4: memref<128x128xbf16, #tpu.memory_space<vmem>>, %arg5: memref<1x128xf32, #tpu.memory_space<vmem>>, %arg6: memref<1x128xf32, #tpu.memory_space<vmem>>, %arg7: memref<1x128xf32, #tpu.memory_space<vmem>>, %arg8: memref<1x8x128xbf16, #tpu.memory_space<vmem>>) attributes {dimension_semantics = [#tpu.dimension_semantics<parallel>], iteration_bounds = array<i64: 2>, scalar_prefetch = 0 : i64, scratch_operands = 0 : i64, tpu.core_type = #tpu.core_type<tc>, window_params = [{transform_indices = @transform_0, window_bounds = array<i64: 1, 8, 128>}, {pipeline_mode = #tpu.pipeline_mode<synchronous>, transform_indices = @transform_1, window_bounds = array<i64: 128, 384>}, {pipeline_mode = #tpu.pipeline_mode<synchronous>, transform_indices = @transform_2, window_bounds = array<i64: 1, 384>}, {pipeline_mode = #tpu.pipeline_mode<synchronous>, transform_indices = @transform_3, window_bounds = array<i64: 128, 128>}, {pipeline_mode = #tpu.pipeline_mode<synchronous>, transform_indices = @transform_4, window_bounds = array<i64: 1, 128>}, {pipeline_mode = #tpu.pipeline_mode<synchronous>, transform_indices = @transform_5, window_bounds = array<i64: 1, 128>}, {pipeline_mode = #tpu.pipeline_mode<synchronous>, transform_indices = @transform_6, window_bounds = array<i64: 1, 128>}, {transform_indices = @transform_7, window_bounds = array<i64: 1, 8, 128>}]} {
    %c0 = arith.constant 0 : index
    %c0_0 = arith.constant 0 : index
    %c0_1 = arith.constant 0 : index
    %0 = vector.load %arg1[%c0, %c0_0, %c0_1] : memref<1x8x128xbf16, #tpu.memory_space<vmem>>, vector<1x8x128xbf16>
    %1 = vector.shape_cast %0 : vector<1x8x128xbf16> to vector<8x128xbf16>
    %2 = arith.extf %1 : vector<8x128xbf16> to vector<8x128xf32>
    %3 = arith.truncf %2 : vector<8x128xf32> to vector<8x128xbf16>
    %c0_2 = arith.constant 0 : index
    %c0_3 = arith.constant 0 : index
    %4 = vector.load %arg2[%c0_2, %c0_3] : memref<128x384xbf16, #tpu.memory_space<vmem>>, vector<128x384xbf16>
    %cst = arith.constant dense<0.000000e+00> : vector<8x384xf32>
    %5 = tpu.matmul %3, %4, %cst {dimension_numbers = #tpu.dot_dimension_numbers<[1], [0], [0], [1], [0, 0, 1, 1], [], []>} : vector<8x128xbf16>, vector<128x384xbf16>, vector<8x384xf32> -> vector<8x384xf32>
    %c0_4 = arith.constant 0 : index
    %c0_5 = arith.constant 0 : index
    %6 = vector.load %arg3[%c0_4, %c0_5] : memref<1x384xf32, #tpu.memory_space<vmem>>, vector<1x384xf32>
    %7 = vector.broadcast %6 : vector<1x384xf32> to vector<8x384xf32>
    %8 = arith.addf %5, %7 : vector<8x384xf32>
    %9 = vector.extract_strided_slice %8 {offsets = [0, 0], sizes = [8, 128], strides = [1, 1]} : vector<8x384xf32> to vector<8x128xf32>
    %10 = vector.extract_strided_slice %8 {offsets = [0, 128], sizes = [8, 128], strides = [1, 1]} : vector<8x384xf32> to vector<8x128xf32>
    %11 = vector.extract_strided_slice %8 {offsets = [0, 256], sizes = [8, 128], strides = [1, 1]} : vector<8x384xf32> to vector<8x128xf32>
    %c0_6 = arith.constant 0 : index
    %c0_7 = arith.constant 0 : index
    %12 = vector.load %arg4[%c0_6, %c0_7] : memref<128x128xbf16, #tpu.memory_space<vmem>>, vector<128x128xbf16>
    %c0_8 = arith.constant 0 : index
    %c0_9 = arith.constant 0 : index
    %13 = vector.load %arg5[%c0_8, %c0_9] : memref<1x128xf32, #tpu.memory_space<vmem>>, vector<1x128xf32>
    %c0_10 = arith.constant 0 : index
    %c0_11 = arith.constant 0 : index
    %14 = vector.load %arg6[%c0_10, %c0_11] : memref<1x128xf32, #tpu.memory_space<vmem>>, vector<1x128xf32>
    %c0_12 = arith.constant 0 : index
    %c0_13 = arith.constant 0 : index
    %15 = vector.load %arg7[%c0_12, %c0_13] : memref<1x128xf32, #tpu.memory_space<vmem>>, vector<1x128xf32>
    %cst_14 = arith.constant 1.250000e-01 : f32
    %16 = vector.broadcast %cst_14 : f32 to vector<8x128xf32>
    %17 = arith.mulf %9, %16 : vector<8x128xf32>
    %18 = tpu.iota {dimensions = array<i32: 0>} : vector<8x8xi32>
    %19 = tpu.iota {dimensions = array<i32: 1>} : vector<8x8xi32>
    %20 = arith.cmpi sle, %19, %18 : vector<8x8xi32>
    %21 = vector.extract_strided_slice %17 {offsets = [0, 0], sizes = [8, 64], strides = [1, 1]} : vector<8x128xf32> to vector<8x64xf32>
    %22 = arith.truncf %21 : vector<8x64xf32> to vector<8x64xbf16>
    %23 = vector.extract_strided_slice %10 {offsets = [0, 0], sizes = [8, 64], strides = [1, 1]} : vector<8x128xf32> to vector<8x64xf32>
    %24 = arith.truncf %23 : vector<8x64xf32> to vector<8x64xbf16>
    %25 = vector.extract_strided_slice %11 {offsets = [0, 0], sizes = [8, 64], strides = [1, 1]} : vector<8x128xf32> to vector<8x64xf32>
    %26 = arith.truncf %25 : vector<8x64xf32> to vector<8x64xbf16>
    %cst_15 = arith.constant dense<0.000000e+00> : vector<8x8xf32>
    %27 = tpu.matmul %22, %24, %cst_15 {dimension_numbers = #tpu.dot_dimension_numbers<[1], [1], [0], [0], [0, 0, 1, 0], [], []>} : vector<8x64xbf16>, vector<8x64xbf16>, vector<8x8xf32> -> vector<8x8xf32>
    %cst_16 = arith.constant -1.000000e+09 : f32
    %28 = vector.broadcast %cst_16 : f32 to vector<8x8xf32>
    %29 = arith.select %20, %27, %28 : vector<8x8xi1>, vector<8x8xf32>
    %cst_17 = arith.constant dense<0xFF800000> : vector<8xf32>
    %30 = vector.multi_reduction <maximumf>, %29, %cst_17 [1] : vector<8x8xf32> to vector<8xf32>
    %31 = vector.shape_cast %30 : vector<8xf32> to vector<8x1xf32>
    %32 = vector.broadcast %31 : vector<8x1xf32> to vector<8x8xf32>
    %33 = arith.subf %29, %32 : vector<8x8xf32>
    %34 = math.exp %33 : vector<8x8xf32>
    %cst_18 = arith.constant dense<0.000000e+00> : vector<8xf32>
    %35 = vector.multi_reduction <add>, %34, %cst_18 [1] : vector<8x8xf32> to vector<8xf32>
    %36 = vector.shape_cast %35 : vector<8xf32> to vector<8x1xf32>
    %37 = vector.broadcast %36 : vector<8x1xf32> to vector<8x8xf32>
    %38 = arith.divf %34, %37 : vector<8x8xf32>
    %39 = arith.truncf %38 : vector<8x8xf32> to vector<8x8xbf16>
    %cst_19 = arith.constant dense<0.000000e+00> : vector<8x64xf32>
    %40 = tpu.matmul %39, %26, %cst_19 {dimension_numbers = #tpu.dot_dimension_numbers<[1], [0], [0], [1], [0, 0, 1, 1], [], []>} : vector<8x8xbf16>, vector<8x64xbf16>, vector<8x64xf32> -> vector<8x64xf32>
    %41 = vector.extract_strided_slice %17 {offsets = [0, 64], sizes = [8, 64], strides = [1, 1]} : vector<8x128xf32> to vector<8x64xf32>
    %42 = arith.truncf %41 : vector<8x64xf32> to vector<8x64xbf16>
    %43 = vector.extract_strided_slice %10 {offsets = [0, 64], sizes = [8, 64], strides = [1, 1]} : vector<8x128xf32> to vector<8x64xf32>
    %44 = arith.truncf %43 : vector<8x64xf32> to vector<8x64xbf16>
    %45 = vector.extract_strided_slice %11 {offsets = [0, 64], sizes = [8, 64], strides = [1, 1]} : vector<8x128xf32> to vector<8x64xf32>
    %46 = arith.truncf %45 : vector<8x64xf32> to vector<8x64xbf16>
    %cst_20 = arith.constant dense<0.000000e+00> : vector<8x8xf32>
    %47 = tpu.matmul %42, %44, %cst_20 {dimension_numbers = #tpu.dot_dimension_numbers<[1], [1], [0], [0], [0, 0, 1, 0], [], []>} : vector<8x64xbf16>, vector<8x64xbf16>, vector<8x8xf32> -> vector<8x8xf32>
    %cst_21 = arith.constant -1.000000e+09 : f32
    %48 = vector.broadcast %cst_21 : f32 to vector<8x8xf32>
    %49 = arith.select %20, %47, %48 : vector<8x8xi1>, vector<8x8xf32>
    %cst_22 = arith.constant dense<0xFF800000> : vector<8xf32>
    %50 = vector.multi_reduction <maximumf>, %49, %cst_22 [1] : vector<8x8xf32> to vector<8xf32>
    %51 = vector.shape_cast %50 : vector<8xf32> to vector<8x1xf32>
    %52 = vector.broadcast %51 : vector<8x1xf32> to vector<8x8xf32>
    %53 = arith.subf %49, %52 : vector<8x8xf32>
    %54 = math.exp %53 : vector<8x8xf32>
    %cst_23 = arith.constant dense<0.000000e+00> : vector<8xf32>
    %55 = vector.multi_reduction <add>, %54, %cst_23 [1] : vector<8x8xf32> to vector<8xf32>
    %56 = vector.shape_cast %55 : vector<8xf32> to vector<8x1xf32>
    %57 = vector.broadcast %56 : vector<8x1xf32> to vector<8x8xf32>
    %58 = arith.divf %54, %57 : vector<8x8xf32>
    %59 = arith.truncf %58 : vector<8x8xf32> to vector<8x8xbf16>
    %cst_24 = arith.constant dense<0.000000e+00> : vector<8x64xf32>
    %60 = tpu.matmul %59, %46, %cst_24 {dimension_numbers = #tpu.dot_dimension_numbers<[1], [0], [0], [1], [0, 0, 1, 1], [], []>} : vector<8x8xbf16>, vector<8x64xbf16>, vector<8x64xf32> -> vector<8x64xf32>
    %61 = tpu.concatenate %40, %60 in 1 : vector<8x64xf32>, vector<8x64xf32> -> vector<8x128xf32>
    %62 = arith.truncf %61 : vector<8x128xf32> to vector<8x128xbf16>
    %cst_25 = arith.constant dense<0.000000e+00> : vector<8x128xf32>
    %63 = tpu.matmul %62, %12, %cst_25 {dimension_numbers = #tpu.dot_dimension_numbers<[1], [0], [0], [1], [0, 0, 1, 1], [], []>} : vector<8x128xbf16>, vector<128x128xbf16>, vector<8x128xf32> -> vector<8x128xf32>
    %64 = vector.broadcast %13 : vector<1x128xf32> to vector<8x128xf32>
    %65 = arith.addf %63, %64 : vector<8x128xf32>
    %66 = arith.addf %65, %2 : vector<8x128xf32>
    %cst_26 = arith.constant dense<0.000000e+00> : vector<8xf32>
    %67 = vector.multi_reduction <add>, %66, %cst_26 [1] : vector<8x128xf32> to vector<8xf32>
    %68 = vector.shape_cast %67 : vector<8xf32> to vector<8x1xf32>
    %cst_27 = arith.constant 1.280000e+02 : f32
    %69 = vector.broadcast %cst_27 : f32 to vector<8x1xf32>
    %70 = arith.divf %68, %69 : vector<8x1xf32>
    %71 = vector.broadcast %70 : vector<8x1xf32> to vector<8x128xf32>
    %72 = arith.subf %66, %71 : vector<8x128xf32>
    %73 = arith.mulf %72, %72 : vector<8x128xf32>
    %cst_28 = arith.constant dense<0.000000e+00> : vector<8xf32>
    %74 = vector.multi_reduction <add>, %73, %cst_28 [1] : vector<8x128xf32> to vector<8xf32>
    %75 = vector.shape_cast %74 : vector<8xf32> to vector<8x1xf32>
    %cst_29 = arith.constant 1.280000e+02 : f32
    %76 = vector.broadcast %cst_29 : f32 to vector<8x1xf32>
    %77 = arith.divf %75, %76 : vector<8x1xf32>
    %78 = vector.broadcast %70 : vector<8x1xf32> to vector<8x128xf32>
    %79 = arith.subf %66, %78 : vector<8x128xf32>
    %cst_30 = arith.constant 9.99999997E-7 : f32
    %80 = vector.broadcast %cst_30 : f32 to vector<8x1xf32>
    %81 = arith.addf %77, %80 : vector<8x1xf32>
    %82 = math.rsqrt %81 : vector<8x1xf32>
    %83 = vector.broadcast %82 : vector<8x1xf32> to vector<8x128xf32>
    %84 = arith.mulf %79, %83 : vector<8x128xf32>
    %85 = vector.broadcast %14 : vector<1x128xf32> to vector<8x128xf32>
    %86 = arith.mulf %84, %85 : vector<8x128xf32>
    %87 = vector.broadcast %15 : vector<1x128xf32> to vector<8x128xf32>
    %88 = arith.addf %86, %87 : vector<8x128xf32>
    %89 = arith.truncf %88 : vector<8x128xf32> to vector<8x128xbf16>
    %c0_31 = arith.constant 0 : index
    %c0_32 = arith.constant 0 : index
    %c0_33 = arith.constant 0 : index
    %90 = vector.load %arg8[%c0_31, %c0_32, %c0_33] : memref<1x8x128xbf16, #tpu.memory_space<vmem>>, vector<1x8x128xbf16>
    %91 = vector.shape_cast %90 : vector<1x8x128xbf16> to vector<8x128xbf16>
    %92 = vector.shape_cast %89 : vector<8x128xbf16> to vector<1x8x128xbf16>
    tpu.vector_store %arg8[%c0_31, %c0_32, %c0_33], %92 {strides = array<i32>} : memref<1x8x128xbf16, #tpu.memory_space<vmem>>, vector<1x8x128xbf16>,
    return
  }
  func.func @transform_0(%arg0: i32) -> (i32, i32, i32) {
    %c0_i32 = arith.constant 0 : i32
    %c0_i32_0 = arith.constant 0 : i32
    %c0_i32_1 = arith.constant 0 : i32
    return %arg0, %c0_i32, %c0_i32_0 : i32, i32, i32
  }
  func.func @transform_1(%arg0: i32) -> (i32, i32) {
    %c0_i32 = arith.constant 0 : i32
    %c0_i32_0 = arith.constant 0 : i32
    %c0_i32_1 = arith.constant 0 : i32
    return %c0_i32, %c0_i32_0 : i32, i32
  }
  func.func @transform_2(%arg0: i32) -> (i32, i32) {
    %c0_i32 = arith.constant 0 : i32
    %c0_i32_0 = arith.constant 0 : i32
    %c0_i32_1 = arith.constant 0 : i32
    return %c0_i32, %c0_i32_0 : i32, i32
  }
  func.func @transform_3(%arg0: i32) -> (i32, i32) {
    %c0_i32 = arith.constant 0 : i32
    %c0_i32_0 = arith.constant 0 : i32
    %c0_i32_1 = arith.constant 0 : i32
    return %c0_i32, %c0_i32_0 : i32, i32
  }
  func.func @transform_4(%arg0: i32) -> (i32, i32) {
    %c0_i32 = arith.constant 0 : i32
    %c0_i32_0 = arith.constant 0 : i32
    %c0_i32_1 = arith.constant 0 : i32
    return %c0_i32, %c0_i32_0 : i32, i32
  }
  func.func @transform_5(%arg0: i32) -> (i32, i32) {
    %c0_i32 = arith.constant 0 : i32
    %c0_i32_0 = arith.constant 0 : i32
    %c0_i32_1 = arith.constant 0 : i32
    return %c0_i32, %c0_i32_0 : i32, i32
  }
  func.func @transform_6(%arg0: i32) -> (i32, i32) {
    %c0_i32 = arith.constant 0 : i32
    %c0_i32_0 = arith.constant 0 : i32
    %c0_i32_1 = arith.constant 0 : i32
    return %c0_i32, %c0_i32_0 : i32, i32
  }
  func.func @transform_7(%arg0: i32) -> (i32, i32, i32) {
    %c0_i32 = arith.constant 0 : i32
    %c0_i32_0 = arith.constant 0 : i32
    %c0_i32_1 = arith.constant 0 : i32
    return %arg0, %c0_i32, %c0_i32_0 : i32, i32, i32
  }
}

</mosaic_0001>

<llo_original>
// kernel: decoder_forward.8
$region0: #{decoder_forward.8}
  #allocation0 [shape = 'u32[]', space=smem, size = 0x4, offset = 0x4, fixed_abs, tag = 'smem constant byte address 0x4 - core index']
  #allocation1 [shape = 'u32[144,128]{1,0:T(1,128)}', space=vmem, size = 0x12000, scoped, tag = 'internal scratch']
  %s0 = inlined_call_operand.vmem [shape: bf16[16,128], index: 0, kind: input, shape index: {}]
  %s1 = inlined_call_operand.vmem [shape: bf16[128,64], index: 1, kind: input, shape index: {}]
  %s2 = inlined_call_operand.vmem [shape: f32[1,64], index: 2, kind: input, shape index: {}]
  %s3 = inlined_call_operand.vmem [shape: bf16[64,128], index: 3, kind: input, shape index: {}]
  %s4 = inlined_call_operand.vmem [shape: f32[1,128], index: 4, kind: input, shape index: {}]
  %s5 = inlined_call_operand.vmem [shape: f32[1,128], index: 5, kind: input, shape index: {}]
  %s6 = inlined_call_operand.vmem [shape: f32[1,128], index: 6, kind: input, shape index: {}]
  %s7 = inlined_call_operand.vmem [shape: bf16[16,128], index: 7, kind: output, shape index: {}]
  %s8 = sld [smem:[#allocation0]]
  $region61: #{decoder_forward.8} parent=0
    _
  %s10 = ssub.s32 1, %s8
  %s11 = scalar_select 0, %s10, %s8
  loop: start=0, step=1, limit=4
  $region2: #{decoder_forward.8} parent=0 // loop_pre_header
    _
  $region3: #{decoder_forward.8} parent=0 // loop_header
    %s13 = sphi 0, %s17
    %p14 = scmp.ge.s32.totalorder %s13, 4
    %s23 = sphi 0, %s25
    %s26 = sphi 0, %s23
    %s27 = sphi 0, %s26
    %s43 = sphi 0, %s27
    %s47 = sphi 0, %s47
    %s49 = sphi 0, %s47
    %s50 = sphi 0, %s49
    %s64 = sphi 0, %s50
    %s68 = sphi 0, %s68
    %s70 = sphi 0, %s68
    %s71 = sphi 0, %s70
    %s85 = sphi 0, %s71
    %s89 = sphi 0, %s89
    %s91 = sphi 0, %s89
    %s92 = sphi 0, %s91
    %s106 = sphi 0, %s92
    %s110 = sphi 0, %s110
    %s112 = sphi 0, %s110
    %s113 = sphi 0, %s112
    %s127 = sphi 0, %s113
    %s131 = sphi 0, %s131
    %s133 = sphi 0, %s131
    %s134 = sphi 0, %s133
    %s148 = sphi 0, %s134
    %s152 = sphi 0, %s152
    %s154 = sphi 0, %s152
    %s155 = sphi 0, %s154
    %s169 = sphi 0, %s155
    %s175 = sphi 0, %s177
    %s178 = sphi 0, %s175
    %s179 = sphi 0, %s178
    %s195 = sphi 0, %s179
  $region4: #{decoder_forward.8} parent=0 // loop_header_branch
    %16 = sbr.rel (%p14) target = $region8
  $region5: #{decoder_forward.8} parent=0 // loop_body
    %s18 = ssub.s32 %s13, 1
    %s19 = ssub.s32 %s13, 2
    %s20 = sadd.s32 %s13, 1
    %s21 = ssub.s32 %s13, %s20
    %p22 = scmp.eq.s32.totalorder %s21, 0
    %s24 = sadd.s32 %s23, 1
    %s25 = scalar_select %p22, %s23, %s24
    %p28 = pneg %p22
    %p29 = scmp.eq.s32.totalorder %s13, 1
    %p30 = por %p28, %p29
    %p31 = scmp.ne.s32.totalorder %s23, %s26
    %p32 = scmp.eq.s32.totalorder %s13, 0
    %p33 = por %p31, %p32
    %p34 = scmp.ne.s32.totalorder %s23, %s26
    %p35 = scmp.eq.s32.totalorder %s18, 1
    %p36 = por %p34, %p35
    %p37 = scmp.ne.s32.totalorder %s26, %s27
    %p38 = scmp.eq.s32.totalorder %s18, 0
    %p39 = por %p37, %p38
    %p40 = scmp.ne.s32.totalorder %s26, %s27
    %p41 = scmp.eq.s32.totalorder %s19, 1
    %p42 = por %p40, %p41
    %p44 = scmp.ne.s32.totalorder %s27, %s43
    %p45 = scmp.eq.s32.totalorder %s19, 0
    %p46 = por %p44, %p45
    %s48 = sadd.s32 %s47, 1
    %p51 = scmp.eq.s32.totalorder %s13, 1
    %p52 = scmp.ne.s32.totalorder %s47, %s49
    %p53 = scmp.eq.s32.totalorder %s13, 0
    %p54 = por %p52, %p53
    %p55 = scmp.ne.s32.totalorder %s47, %s49
    %p56 = scmp.eq.s32.totalorder %s18, 1
    %p57 = por %p55, %p56
    %p58 = scmp.ne.s32.totalorder %s49, %s50
    %p59 = scmp.eq.s32.totalorder %s18, 0
    %p60 = por %p58, %p59
    %p61 = scmp.ne.s32.totalorder %s49, %s50
    %p62 = scmp.eq.s32.totalorder %s19, 1
    %p63 = por %p61, %p62
    %p65 = scmp.ne.s32.totalorder %s50, %s64
    %p66 = scmp.eq.s32.totalorder %s19, 0
    %p67 = por %p65, %p66
    %s69 = sadd.s32 %s68, 1
    %p72 = scmp.eq.s32.totalorder %s13, 1
    %p73 = scmp.ne.s32.totalorder %s68, %s70
    %p74 = scmp.eq.s32.totalorder %s13, 0
    %p75 = por %p73, %p74
    %p76 = scmp.ne.s32.totalorder %s68, %s70
    %p77 = scmp.eq.s32.totalorder %s18, 1
    %p78 = por %p76, %p77
    %p79 = scmp.ne.s32.totalorder %s70, %s71
    %p80 = scmp.eq.s32.totalorder %s18, 0
    %p81 = por %p79, %p80
    %p82 = scmp.ne.s32.totalorder %s70, %s71
    %p83 = scmp.eq.s32.totalorder %s19, 1
    %p84 = por %p82, %p83
    %p86 = scmp.ne.s32.totalorder %s71, %s85
    %p87 = scmp.eq.s32.totalorder %s19, 0
    %p88 = por %p86, %p87
    %s90 = sadd.s32 %s89, 1
    %p93 = scmp.eq.s32.totalorder %s13, 1
    %p94 = scmp.ne.s32.totalorder %s89, %s91
    %p95 = scmp.eq.s32.totalorder %s13, 0
    %p96 = por %p94, %p95
    %p97 = scmp.ne.s32.totalorder %s89, %s91
    %p98 = scmp.eq.s32.totalorder %s18, 1
    %p99 = por %p97, %p98
    %p100 = scmp.ne.s32.totalorder %s91, %s92
    %p101 = scmp.eq.s32.totalorder %s18, 0
    %p102 = por %p100, %p101
    %p103 = scmp.ne.s32.totalorder %s91, %s92
    %p104 = scmp.eq.s32.totalorder %s19, 1
    %p105 = por %p103, %p104
    %p107 = scmp.ne.s32.totalorder %s92, %s106
    %p108 = scmp.eq.s32.totalorder %s19, 0
    %p109 = por %p107, %p108
    %s111 = sadd.s32 %s110, 1
    %p114 = scmp.eq.s32.totalorder %s13, 1
    %p115 = scmp.ne.s32.totalorder %s110, %s112
    %p116 = scmp.eq.s32.totalorder %s13, 0
    %p117 = por %p115, %p116
    %p118 = scmp.ne.s32.totalorder %s110, %s112
    %p119 = scmp.eq.s32.totalorder %s18, 1
    %p120 = por %p118, %p119
    %p121 = scmp.ne.s32.totalorder %s112, %s113
    %p122 = scmp.eq.s32.totalorder %s18, 0
    %p123 = por %p121, %p122
    %p124 = scmp.ne.s32.totalorder %s112, %s113
    %p125 = scmp.eq.s32.totalorder %s19, 1
    %p126 = por %p124, %p125
    %p128 = scmp.ne.s32.totalorder %s113, %s127
    %p129 = scmp.eq.s32.totalorder %s19, 0
    %p130 = por %p128, %p129
    %s132 = sadd.s32 %s131, 1
    %p135 = scmp.eq.s32.totalorder %s13, 1
    %p136 = scmp.ne.s32.totalorder %s131, %s133
    %p137 = scmp.eq.s32.totalorder %s13, 0
    %p138 = por %p136, %p137
    %p139 = scmp.ne.s32.totalorder %s131, %s133
    %p140 = scmp.eq.s32.totalorder %s18, 1
    %p141 = por %p139, %p140
    %p142 = scmp.ne.s32.totalorder %s133, %s134
    %p143 = scmp.eq.s32.totalorder %s18, 0
    %p144 = por %p142, %p143
    %p145 = scmp.ne.s32.totalorder %s133, %s134
    %p146 = scmp.eq.s32.totalorder %s19, 1
    %p147 = por %p145, %p146
    %p149 = scmp.ne.s32.totalorder %s134, %s148
    %p150 = scmp.eq.s32.totalorder %s19, 0
    %p151 = por %p149, %p150
    %s153 = sadd.s32 %s152, 1
    %p156 = scmp.eq.s32.totalorder %s13, 1
    %p157 = scmp.ne.s32.totalorder %s152, %s154
    %p158 = scmp.eq.s32.totalorder %s13, 0
    %p159 = por %p157, %p158
    %p160 = scmp.ne.s32.totalorder %s152, %s154
    %p161 = scmp.eq.s32.totalorder %s18, 1
    %p162 = por %p160, %p161
    %p163 = scmp.ne.s32.totalorder %s154, %s155
    %p164 = scmp.eq.s32.totalorder %s18, 0
    %p165 = por %p163, %p164
    %p166 = scmp.ne.s32.totalorder %s154, %s155
    %p167 = scmp.eq.s32.totalorder %s19, 1
    %p168 = por %p166, %p167
    %p170 = scmp.ne.s32.totalorder %s155, %s169
    %p171 = scmp.eq.s32.totalorder %s19, 0
    %p172 = por %p170, %p171
    %s173 = ssub.s32 %s13, %s20
    %p174 = scmp.eq.s32.totalorder %s173, 0
    %s176 = sadd.s32 %s175, 1
    %s177 = scalar_select %p174, %s175, %s176
    %p180 = pneg %p174
    %p181 = scmp.eq.s32.totalorder %s13, 1
    %p182 = por %p180, %p181
    %p183 = scmp.ne.s32.totalorder %s175, %s178
    %p184 = scmp.eq.s32.totalorder %s13, 0
    %p185 = por %p183, %p184
    %p186 = scmp.ne.s32.totalorder %s175, %s178
    %p187 = scmp.eq.s32.totalorder %s18, 1
    %p188 = por %p186, %p187
    %p189 = scmp.ne.s32.totalorder %s178, %s179
    %p190 = scmp.eq.s32.totalorder %s18, 0
    %p191 = por %p189, %p190
    %p192 = scmp.ne.s32.totalorder %s178, %s179
    %p193 = scmp.eq.s32.totalorder %s19, 1
    %p194 = por %p192, %p193
    %p196 = scmp.ne.s32.totalorder %s179, %s195
    %p197 = scmp.eq.s32.totalorder %s19, 0
    %p198 = por %p196, %p197
    %p199 = scmp.le.s32.totalorder 1, %s13
    %p200 = scmp.lt.s32.totalorder %s13, 3
    %p201 = pnand %p199, %p200
    %p202 = pneg %p201
    // Predicated region
    $region9: #{decoder_forward.8} parent=5 // pred_check
      _
    $region10: #{decoder_forward.8} parent=5 // pred_check_branch
      %204 = sbr.rel (%p201) target = $region12
    $region11: #{decoder_forward.8} parent=5 // pred_region
      %s205 = ssub.s32 %s13, 1
      // Predicated region
      $region13: #{decoder_forward.8} parent=11 // pred_check
        %p206 = pneg %p60
      $region14: #{decoder_forward.8} parent=11 // pred_check_branch
        %208 = sbr.rel (%p206) target = $region16
      $region15: #{decoder_forward.8} parent=11 // pred_region
        _
      $region16: #{decoder_forward.8} parent=11 // pred_fallthru
        _
      // Predicated region
      $region17: #{decoder_forward.8} parent=11 // pred_check
        %p209 = pneg %p81
      $region18: #{decoder_forward.8} parent=11 // pred_check_branch
        %211 = sbr.rel (%p209) target = $region20
      $region19: #{decoder_forward.8} parent=11 // pred_region
        _
      $region20: #{decoder_forward.8} parent=11 // pred_fallthru
        _
      // Predicated region
      $region21: #{decoder_forward.8} parent=11 // pred_check
        %p212 = pneg %p102
      $region22: #{decoder_forward.8} parent=11 // pred_check_branch
        %214 = sbr.rel (%p212) target = $region24
      $region23: #{decoder_forward.8} parent=11 // pred_region
        _
      $region24: #{decoder_forward.8} parent=11 // pred_fallthru
        _
      // Predicated region
      $region25: #{decoder_forward.8} parent=11 // pred_check
        %p215 = pneg %p123
      $region26: #{decoder_forward.8} parent=11 // pred_check_branch
        %217 = sbr.rel (%p215) target = $region28
      $region27: #{decoder_forward.8} parent=11 // pred_region
        _
      $region28: #{decoder_forward.8} parent=11 // pred_fallthru
        _
      // Predicated region
      $region29: #{decoder_forward.8} parent=11 // pred_check
        %p218 = pneg %p144
      $region30: #{decoder_forward.8} parent=11 // pred_check_branch
        %220 = sbr.rel (%p218) target = $region32
      $region31: #{decoder_forward.8} parent=11 // pred_region
        _
      $region32: #{decoder_forward.8} parent=11 // pred_fallthru
        _
      // Predicated region
      $region33: #{decoder_forward.8} parent=11 // pred_check
        %p221 = pneg %p165
      $region34: #{decoder_forward.8} parent=11 // pred_check_branch
        %223 = sbr.rel (%p221) target = $region36
      $region35: #{decoder_forward.8} parent=11 // pred_region
        _
      $region36: #{decoder_forward.8} parent=11 // pred_fallthru
        _
    $region12: #{decoder_forward.8} parent=5 // pred_fallthru
      _
    %p224 = scmp.lt.s32.totalorder %s13, 2
    // Predicated region
    $region37: #{decoder_forward.8} parent=5 // pred_check
      %p225 = pneg %p224
    $region38: #{decoder_forward.8} parent=5 // pred_check_branch
      %227 = sbr.rel (%p225) target = $region40
    $region39: #{decoder_forward.8} parent=5 // pred_region
      // Predicated region
      $region41: #{decoder_forward.8} parent=39 // pred_check
        %p228 = pneg %p33
      $region42: #{decoder_forward.8} parent=39 // pred_check_branch
        %230 = sbr.rel (%p228) target = $region44
      $region43: #{decoder_forward.8} parent=39 // pred_region
        %p231 = scmp.lt.s32.totalorder %s13, 1
        %s232 = scalar_select %p231, %s13, 1
        %s233 = smul.addr %s232, 4
        %s234 = scalar_lea.vmem %s0, %s233
      $region44: #{decoder_forward.8} parent=39 // pred_fallthru
        _
    $region40: #{decoder_forward.8} parent=5 // pred_fallthru
      _
    %p235 = scmp.le.s32.totalorder 1, %s13
    %p236 = scmp.lt.s32.totalorder %s13, 3
    %p237 = pnand %p235, %p236
    %p238 = pneg %p237
    // Predicated region
    $region45: #{decoder_forward.8} parent=5 // pred_check
      _
    $region46: #{decoder_forward.8} parent=5 // pred_check_branch
      %240 = sbr.rel (%p237) target = $region48
    $region47: #{decoder_forward.8} parent=5 // pred_region
      %s241 = ssub.s32 %s13, 1
      %p242 = scmp.lt.s32.totalorder %s18, 1
      %s243 = scalar_select %p242, %s18, 1
      %s244 = smul.addr %s243, 4
      %s245 = scalar_lea.vmem %s0, %s244
      %p246 = pneg %p39
      %p247 = pneg %p36
      %p248 = pneg %p60
      %p249 = pneg %p57
      %p250 = pneg %p81
      %p251 = pneg %p78
      %p252 = pneg %p102
      %p253 = pneg %p99
      %p254 = pneg %p123
      %p255 = pneg %p120
      %p256 = pneg %p144
      %p257 = pneg %p141
      %p258 = pneg %p165
      %p259 = pneg %p162
      %p260 = pneg %p191
      %p261 = pneg %p188
      %p262 = scmp.lt.s32.totalorder %s18, 1
      %s263 = scalar_select %p262, %s18, 1
      %s264 = smul.addr %s263, 4
      %s265 = scalar_lea.vmem %s7, %s264
      %p266 = scmp.lt.s32.totalorder %s18, 1
      %s267 = scalar_select %p266, %s18, 1
      %s268 = smul.addr %s267, 4
      %s269 = scalar_lea.vmem %s0, %s268
      %p270 = scmp.lt.s32.totalorder %s18, 1
      %s271 = scalar_select %p270, %s18, 1
      %s272 = smul.addr %s271, 4
      %s273 = scalar_lea.vmem %s7, %s272
      %v275 = vld [vmem:[%s269] sm:$0xf]
      %v276 = vunpack.c.l.bf16 %v275
      %v277 = vld [vmem:[%s1] sm:$0xf]
      %v278 = vld [vmem:[%s1 + $0x4] sm:$0xf]
      %v279 = vld [vmem:[%s1 + $0x8] sm:$0xf]
      %v280 = vld [vmem:[%s1 + $0xc] sm:$0xf]
      %v281 = vld [vmem:[%s1 + $0x10] sm:$0xf]
      %v282 = vld [vmem:[%s1 + $0x14] sm:$0xf]
      %v283 = vld [vmem:[%s1 + $0x18] sm:$0xf]
      %v284 = vld [vmem:[%s1 + $0x1c] sm:$0xf]
      %v285 = vld [vmem:[%s1 + $0x20] sm:$0xf]
      %v286 = vld [vmem:[%s1 + $0x24] sm:$0xf]
      %v287 = vld [vmem:[%s1 + $0x28] sm:$0xf]
      %v288 = vld [vmem:[%s1 + $0x2c] sm:$0xf]
      %v289 = vld [vmem:[%s1 + $0x30] sm:$0xf]
      %v290 = vld [vmem:[%s1 + $0x34] sm:$0xf]
      %v291 = vld [vmem:[%s1 + $0x38] sm:$0xf]
      %v292 = vld [vmem:[%s1 + $0x3c] sm:$0xf]
      %v293 = vld [vmem:[%s2] sm:$0x1]
      %v295 = vlaneseq
      %v296 = vshrl.u32 %v295, 7
      %v297 = vsub.s32 0, %v296
      %v298 = vrot.slane %v293, %v297
      %v316 = vunpack.c.l.b16 %v277
      %v317 = vunpack.c.l.b16 %v278
      %v318 = vunpack.c.l.b16 %v279
      %v319 = vunpack.c.l.b16 %v280
      %v320 = vunpack.c.l.b16 %v281
      %v321 = vunpack.c.l.b16 %v282
      %v322 = vunpack.c.l.b16 %v283
      %v323 = vunpack.c.l.b16 %v284
      %v324 = vunpack.c.l.b16 %v285
      %v325 = vunpack.c.l.b16 %v286
      %v326 = vunpack.c.l.b16 %v287
      %v327 = vunpack.c.l.b16 %v288
      %v328 = vunpack.c.l.b16 %v289
      %v329 = vunpack.c.l.b16 %v290
      %v330 = vunpack.c.l.b16 %v291
      %v331 = vunpack.c.l.b16 %v292
      %v332 = vpack.c.b16 %v317, %v316
      %v333 = vpack.c.b16 %v319, %v318
      %v334 = vpack.c.b16 %v321, %v320
      %v335 = vpack.c.b16 %v323, %v322
      %v336 = vpack.c.b16 %v325, %v324
      %v337 = vpack.c.b16 %v327, %v326
      %v338 = vpack.c.b16 %v329, %v328
      %v339 = vpack.c.b16 %v331, %v330
      %348 = vmatprep.subr.bf16.mxu0 0
      %349 = vmatpush1.bf16.msra.mxu0 %v332
      %350 = vmatprep.subr.bf16.mxu0 0
      %351 = vmatpush1.bf16.msra.mxu0 %v333
      %352 = vmatprep.subr.bf16.mxu0 0
      %353 = vmatpush1.bf16.msra.mxu0 %v334
      %354 = vmatprep.subr.bf16.mxu0 0
      %355 = vmatpush1.bf16.msra.mxu0 %v335
      %356 = vmatprep.subr.bf16.mxu0 0
      %357 = vmatpush1.bf16.msra.mxu0 %v336
      %358 = vmatprep.subr.bf16.mxu0 0
      %359 = vmatpush1.bf16.msra.mxu0 %v337
      %360 = vmatprep.subr.bf16.mxu0 0
      %361 = vmatpush1.bf16.msra.mxu0 %v338
      %362 = vmatprep.subr.bf16.mxu0 0
      %363 = vmatpush1.bf16.msra.mxu0 %v339
      %364 = vmatprep.subr.bf16.mxu0 0
      %365 = vmatpush1.bf16.msra.mxu0 0
      %366 = vmatprep.subr.bf16.mxu0 0
      %367 = vmatpush1.bf16.msra.mxu0 0
      %368 = vmatprep.subr.bf16.mxu0 0
      %369 = vmatpush1.bf16.msra.mxu0 0
      %370 = vmatprep.subr.bf16.mxu0 0
      %371 = vmatpush1.bf16.msra.mxu0 0
      %372 = vmatprep.subr.bf16.mxu0 0
      %373 = vmatpush1.bf16.msra.mxu0 0
      %374 = vmatprep.subr.bf16.mxu0 0
      %375 = vmatpush1.bf16.msra.mxu0 0
      %376 = vmatprep.subr.bf16.mxu0 0
      %377 = vmatpush1.bf16.msra.mxu0 0
      %378 = vmatprep.subr.bf16.mxu0 0
      %379 = vmatpush1.bf16.msra.mxu0 0
      %380 = vmatprep.mubr.bf16.mxu0 0
      %381 = vmatmul.mubr.bf16.gmra.mrb[0].mxu0 %v275
      %v382 = vpop.f32.mrb[0].mxu0
      %v383 = vadd.f32 %v298, %v382
      %v384 = vpop.f32.mrb[0].mxu0
      %v385 = vpop.f32.mrb[0].mxu0
      %v386 = vpop.f32.mrb[0].mxu0
      %387 = vdwg.mxu0
      %v388 = vmax.f32 %v383, 0.0
      %v389 = vpack.c.bf16 %v388, %v388
      %v390 = vld [vmem:[%s3] sm:$0xf]
      %v391 = vld [vmem:[%s3 + $0x4] sm:$0xf]
      %v392 = vld [vmem:[%s3 + $0x8] sm:$0xf]
      %v393 = vld [vmem:[%s3 + $0xc] sm:$0xf]
      %v394 = vld [vmem:[%s3 + $0x10] sm:$0xf]
      %v395 = vld [vmem:[%s3 + $0x14] sm:$0xf]
      %v396 = vld [vmem:[%s3 + $0x18] sm:$0xf]
      %v397 = vld [vmem:[%s3 + $0x1c] sm:$0xf]
      %v398 = vld [vmem:[%s4] sm:$0x1]
      %v400 = vlaneseq
      %v401 = vshrl.u32 %v400, 7
      %v402 = vsub.s32 0, %v401
      %v403 = vrot.slane %v398, %v402
      %v413 = vunpack.c.l.b16 %v390
      %v414 = vunpack.c.l.b16 %v391
      %v415 = vunpack.c.l.b16 %v392
      %v416 = vunpack.c.l.b16 %v393
      %v417 = vunpack.c.l.b16 %v394
      %v418 = vunpack.c.l.b16 %v395
      %v419 = vunpack.c.l.b16 %v396
      %v420 = vunpack.c.l.b16 %v397
      %v421 = vpack.c.b16 %v414, %v413
      %v422 = vpack.c.b16 %v416, %v415
      %v423 = vpack.c.b16 %v418, %v417
      %v424 = vpack.c.b16 %v420, %v419
      %vm429 = vcmask 523264
      %v431 = vsel %vm429, %v389, 0
      %433 = vmatprep.subr.bf16.mxu0 0
      %434 = vmatpush1.bf16.msra.mxu0 %v421
      %435 = vmatprep.subr.bf16.mxu0 0
      %436 = vmatpush1.bf16.msra.mxu0 %v422
      %437 = vmatprep.subr.bf16.mxu0 0
      %438 = vmatpush1.bf16.msra.mxu0 %v423
      %439 = vmatprep.subr.bf16.mxu0 0
      %440 = vmatpush1.bf16.msra.mxu0 %v424
      %441 = vmatprep.subr.bf16.mxu0 0
      %442 = vmatpush1.bf16.msra.mxu0 0
      %443 = vmatprep.subr.bf16.mxu0 0
      %444 = vmatpush1.bf16.msra.mxu0 0
      %445 = vmatprep.subr.bf16.mxu0 0
      %446 = vmatpush1.bf16.msra.mxu0 0
      %447 = vmatprep.subr.bf16.mxu0 0
      %448 = vmatpush1.bf16.msra.mxu0 0
      %449 = vmatprep.subr.bf16.mxu0 0
      %450 = vmatpush1.bf16.msra.mxu0 0
      %451 = vmatprep.subr.bf16.mxu0 0
      %452 = vmatpush1.bf16.msra.mxu0 0
      %453 = vmatprep.subr.bf16.mxu0 0
      %454 = vmatpush1.bf16.msra.mxu0 0
      %455 = vmatprep.subr.bf16.mxu0 0
      %456 = vmatpush1.bf16.msra.mxu0 0
      %457 = vmatprep.subr.bf16.mxu0 0
      %458 = vmatpush1.bf16.msra.mxu0 0
      %459 = vmatprep.subr.bf16.mxu0 0
      %460 = vmatpush1.bf16.msra.mxu0 0
      %461 = vmatprep.subr.bf16.mxu0 0
      %462 = vmatpush1.bf16.msra.mxu0 0
      %463 = vmatprep.subr.bf16.mxu0 0
      %464 = vmatpush1.bf16.msra.mxu0 0
      %465 = vmatprep.mubr.bf16.mxu0 0
      %466 = vmatmul.mubr.bf16.gmra.mrb[0].mxu0 %v431
      %v467 = vpop.f32.mrb[0].mxu0
      %v468 = vadd.f32 %v403, %v467
      %v469 = vpop.f32.mrb[0].mxu0
      %v470 = vpop.f32.mrb[0].mxu0
      %v471 = vpop.f32.mrb[0].mxu0
      %472 = vdwg.mxu0
      %v473 = vadd.f32 %v468, %v276
      %474 = vadd.xlane.f32.xlu0 %v473
      %v475 = vpop.xlane.xlu0 %474
      %v476 = vrcp.pop 128.0
      %v477 = vmul.f32 %v475, %v476
      %v478 = vsub.f32 %v473, %v477
      %v479 = vmul.f32 %v478, %v478
      %480 = vadd.xlane.f32.xlu0 %v479
      %v481 = vpop.xlane.xlu0 %480
      %v482 = vmul.f32 %v481, %v476
      %v483 = vadd.f32 %v482, 1e-06
      %v484 = vrsqrt.pop %v483
      %v485 = vmul.f32 %v478, %v484
      %v486 = vld [vmem:[%s5] sm:$0x1]
      %v488 = vlaneseq
      %v489 = vshrl.u32 %v488, 7
      %v490 = vsub.s32 0, %v489
      %v491 = vrot.slane %v486, %v490
      %v493 = vmul.f32 %v485, %v491
      %v494 = vld [vmem:[%s6] sm:$0x1]
      %v496 = vlaneseq
      %v497 = vshrl.u32 %v496, 7
      %v498 = vsub.s32 0, %v497
      %v499 = vrot.slane %v494, %v498
      %v501 = vadd.f32 %v493, %v499
      %v502 = vpack.c.bf16 %v501, %v501
      %503 = vst [vmem:[%s273] sm:$0xf] %v502
      %p504 = scmp.lt.s32.totalorder %s18, 1
      %s505 = scalar_select %p504, %s18, 1
      %s506 = smul.addr %s505, 4
      %s507 = scalar_lea.vmem %s7, %s506
      // Predicated region
      $region49: #{decoder_forward.8} parent=47 // pred_check
        %p508 = pneg %p188
      $region50: #{decoder_forward.8} parent=47 // pred_check_branch
        %510 = sbr.rel (%p508) target = $region52
      $region51: #{decoder_forward.8} parent=47 // pred_region
        _
      $region52: #{decoder_forward.8} parent=47 // pred_fallthru
        _
    $region48: #{decoder_forward.8} parent=5 // pred_fallthru
      _
    %p511 = scmp.le.s32.totalorder 2, %s13
    // Predicated region
    $region53: #{decoder_forward.8} parent=5 // pred_check
      %p512 = pneg %p511
    $region54: #{decoder_forward.8} parent=5 // pred_check_branch
      %514 = sbr.rel (%p512) target = $region56
    $region55: #{decoder_forward.8} parent=5 // pred_region
      %s515 = ssub.s32 %s13, 2
      // Predicated region
      $region57: #{decoder_forward.8} parent=55 // pred_check
        %p516 = pneg %p194
      $region58: #{decoder_forward.8} parent=55 // pred_check_branch
        %518 = sbr.rel (%p516) target = $region60
      $region59: #{decoder_forward.8} parent=55 // pred_region
        %p519 = scmp.lt.s32.totalorder %s19, 1
        %s520 = scalar_select %p519, %s19, 1
        %s521 = smul.addr %s520, 4
        %s522 = scalar_lea.vmem %s7, %s521
      $region60: #{decoder_forward.8} parent=55 // pred_fallthru
        _
    $region56: #{decoder_forward.8} parent=5 // pred_fallthru
      _
  $region6: #{decoder_forward.8} parent=0 // loop_footer
    %s17 = sadd.s32 1, %s13
  $region7: #{decoder_forward.8} parent=0 // loop_footer_branch
    %12 = sbr.rel target = $region3
  $region8: #{decoder_forward.8} parent=0 // loop_exit
    _

// kernel: decoder_forward.9
$region0: #{decoder_forward.9}
  #allocation0 [shape = 'u32[]', space=smem, size = 0x4, offset = 0x4, fixed_abs, tag = 'smem constant byte address 0x4 - core index']
  #allocation1 [shape = 'u32[144,128]{1,0:T(1,128)}', space=vmem, size = 0x12000, scoped, tag = 'internal scratch']
  %s0 = inlined_call_operand.vmem [shape: bf16[2,8,128], index: 0, kind: input, shape index: {}]
  %s1 = inlined_call_operand.vmem [shape: bf16[128,384], index: 1, kind: input, shape index: {}]
  %s2 = inlined_call_operand.vmem [shape: f32[1,384], index: 2, kind: input, shape index: {}]
  %s3 = inlined_call_operand.vmem [shape: bf16[128,128], index: 3, kind: input, shape index: {}]
  %s4 = inlined_call_operand.vmem [shape: f32[1,128], index: 4, kind: input, shape index: {}]
  %s5 = inlined_call_operand.vmem [shape: f32[1,128], index: 5, kind: input, shape index: {}]
  %s6 = inlined_call_operand.vmem [shape: f32[1,128], index: 6, kind: input, shape index: {}]
  %s7 = inlined_call_operand.vmem [shape: bf16[2,8,128], index: 7, kind: output, shape index: {}]
  %s8 = sld [smem:[#allocation0]]
  $region61: #{decoder_forward.9} parent=0
    _
  %s10 = ssub.s32 1, %s8
  %s11 = scalar_select 0, %s10, %s8
  loop: start=0, step=1, limit=4
  $region2: #{decoder_forward.9} parent=0 // loop_pre_header
    _
  $region3: #{decoder_forward.9} parent=0 // loop_header
    %s13 = sphi 0, %s17
    %p14 = scmp.ge.s32.totalorder %s13, 4
    %s23 = sphi 0, %s25
    %s26 = sphi 0, %s23
    %s27 = sphi 0, %s26
    %s43 = sphi 0, %s27
    %s47 = sphi 0, %s47
    %s49 = sphi 0, %s47
    %s50 = sphi 0, %s49
    %s64 = sphi 0, %s50
    %s68 = sphi 0, %s68
    %s70 = sphi 0, %s68
    %s71 = sphi 0, %s70
    %s85 = sphi 0, %s71
    %s89 = sphi 0, %s89
    %s91 = sphi 0, %s89
    %s92 = sphi 0, %s91
    %s106 = sphi 0, %s92
    %s110 = sphi 0, %s110
    %s112 = sphi 0, %s110
    %s113 = sphi 0, %s112
    %s127 = sphi 0, %s113
    %s131 = sphi 0, %s131
    %s133 = sphi 0, %s131
    %s134 = sphi 0, %s133
    %s148 = sphi 0, %s134
    %s152 = sphi 0, %s152
    %s154 = sphi 0, %s152
    %s155 = sphi 0, %s154
    %s169 = sphi 0, %s155
    %s175 = sphi 0, %s177
    %s178 = sphi 0, %s175
    %s179 = sphi 0, %s178
    %s195 = sphi 0, %s179
  $region4: #{decoder_forward.9} parent=0 // loop_header_branch
    %16 = sbr.rel (%p14) target = $region8
  $region5: #{decoder_forward.9} parent=0 // loop_body
    %s18 = ssub.s32 %s13, 1
    %s19 = ssub.s32 %s13, 2
    %s20 = sadd.s32 %s13, 1
    %s21 = ssub.s32 %s13, %s20
    %p22 = scmp.eq.s32.totalorder %s21, 0
    %s24 = sadd.s32 %s23, 1
    %s25 = scalar_select %p22, %s23, %s24
    %p28 = pneg %p22
    %p29 = scmp.eq.s32.totalorder %s13, 1
    %p30 = por %p28, %p29
    %p31 = scmp.ne.s32.totalorder %s23, %s26
    %p32 = scmp.eq.s32.totalorder %s13, 0
    %p33 = por %p31, %p32
    %p34 = scmp.ne.s32.totalorder %s23, %s26
    %p35 = scmp.eq.s32.totalorder %s18, 1
    %p36 = por %p34, %p35
    %p37 = scmp.ne.s32.totalorder %s26, %s27
    %p38 = scmp.eq.s32.totalorder %s18, 0
    %p39 = por %p37, %p38
    %p40 = scmp.ne.s32.totalorder %s26, %s27
    %p41 = scmp.eq.s32.totalorder %s19, 1
    %p42 = por %p40, %p41
    %p44 = scmp.ne.s32.totalorder %s27, %s43
    %p45 = scmp.eq.s32.totalorder %s19, 0
    %p46 = por %p44, %p45
    %s48 = sadd.s32 %s47, 1
    %p51 = scmp.eq.s32.totalorder %s13, 1
    %p52 = scmp.ne.s32.totalorder %s47, %s49
    %p53 = scmp.eq.s32.totalorder %s13, 0
    %p54 = por %p52, %p53
    %p55 = scmp.ne.s32.totalorder %s47, %s49
    %p56 = scmp.eq.s32.totalorder %s18, 1
    %p57 = por %p55, %p56
    %p58 = scmp.ne.s32.totalorder %s49, %s50
    %p59 = scmp.eq.s32.totalorder %s18, 0
    %p60 = por %p58, %p59
    %p61 = scmp.ne.s32.totalorder %s49, %s50
    %p62 = scmp.eq.s32.totalorder %s19, 1
    %p63 = por %p61, %p62
    %p65 = scmp.ne.s32.totalorder %s50, %s64
    %p66 = scmp.eq.s32.totalorder %s19, 0
    %p67 = por %p65, %p66
    %s69 = sadd.s32 %s68, 1
    %p72 = scmp.eq.s32.totalorder %s13, 1
    %p73 = scmp.ne.s32.totalorder %s68, %s70
    %p74 = scmp.eq.s32.totalorder %s13, 0
    %p75 = por %p73, %p74
    %p76 = scmp.ne.s32.totalorder %s68, %s70
    %p77 = scmp.eq.s32.totalorder %s18, 1
    %p78 = por %p76, %p77
    %p79 = scmp.ne.s32.totalorder %s70, %s71
    %p80 = scmp.eq.s32.totalorder %s18, 0
    %p81 = por %p79, %p80
    %p82 = scmp.ne.s32.totalorder %s70, %s71
    %p83 = scmp.eq.s32.totalorder %s19, 1
    %p84 = por %p82, %p83
    %p86 = scmp.ne.s32.totalorder %s71, %s85
    %p87 = scmp.eq.s32.totalorder %s19, 0
    %p88 = por %p86, %p87
    %s90 = sadd.s32 %s89, 1
    %p93 = scmp.eq.s32.totalorder %s13, 1
    %p94 = scmp.ne.s32.totalorder %s89, %s91
    %p95 = scmp.eq.s32.totalorder %s13, 0
    %p96 = por %p94, %p95
    %p97 = scmp.ne.s32.totalorder %s89, %s91
    %p98 = scmp.eq.s32.totalorder %s18, 1
    %p99 = por %p97, %p98
    %p100 = scmp.ne.s32.totalorder %s91, %s92
    %p101 = scmp.eq.s32.totalorder %s18, 0
    %p102 = por %p100, %p101
    %p103 = scmp.ne.s32.totalorder %s91, %s92
    %p104 = scmp.eq.s32.totalorder %s19, 1
    %p105 = por %p103, %p104
    %p107 = scmp.ne.s32.totalorder %s92, %s106
    %p108 = scmp.eq.s32.totalorder %s19, 0
    %p109 = por %p107, %p108
    %s111 = sadd.s32 %s110, 1
    %p114 = scmp.eq.s32.totalorder %s13, 1
    %p115 = scmp.ne.s32.totalorder %s110, %s112
    %p116 = scmp.eq.s32.totalorder %s13, 0
    %p117 = por %p115, %p116
    %p118 = scmp.ne.s32.totalorder %s110, %s112
    %p119 = scmp.eq.s32.totalorder %s18, 1
    %p120 = por %p118, %p119
    %p121 = scmp.ne.s32.totalorder %s112, %s113
    %p122 = scmp.eq.s32.totalorder %s18, 0
    %p123 = por %p121, %p122
    %p124 = scmp.ne.s32.totalorder %s112, %s113
    %p125 = scmp.eq.s32.totalorder %s19, 1
    %p126 = por %p124, %p125
    %p128 = scmp.ne.s32.totalorder %s113, %s127
    %p129 = scmp.eq.s32.totalorder %s19, 0
    %p130 = por %p128, %p129
    %s132 = sadd.s32 %s131, 1
    %p135 = scmp.eq.s32.totalorder %s13, 1
    %p136 = scmp.ne.s32.totalorder %s131, %s133
    %p137 = scmp.eq.s32.totalorder %s13, 0
    %p138 = por %p136, %p137
    %p139 = scmp.ne.s32.totalorder %s131, %s133
    %p140 = scmp.eq.s32.totalorder %s18, 1
    %p141 = por %p139, %p140
    %p142 = scmp.ne.s32.totalorder %s133, %s134
    %p143 = scmp.eq.s32.totalorder %s18, 0
    %p144 = por %p142, %p143
    %p145 = scmp.ne.s32.totalorder %s133, %s134
    %p146 = scmp.eq.s32.totalorder %s19, 1
    %p147 = por %p145, %p146
    %p149 = scmp.ne.s32.totalorder %s134, %s148
    %p150 = scmp.eq.s32.totalorder %s19, 0
    %p151 = por %p149, %p150
    %s153 = sadd.s32 %s152, 1
    %p156 = scmp.eq.s32.totalorder %s13, 1
    %p157 = scmp.ne.s32.totalorder %s152, %s154
    %p158 = scmp.eq.s32.totalorder %s13, 0
    %p159 = por %p157, %p158
    %p160 = scmp.ne.s32.totalorder %s152, %s154
    %p161 = scmp.eq.s32.totalorder %s18, 1
    %p162 = por %p160, %p161
    %p163 = scmp.ne.s32.totalorder %s154, %s155
    %p164 = scmp.eq.s32.totalorder %s18, 0
    %p165 = por %p163, %p164
    %p166 = scmp.ne.s32.totalorder %s154, %s155
    %p167 = scmp.eq.s32.totalorder %s19, 1
    %p168 = por %p166, %p167
    %p170 = scmp.ne.s32.totalorder %s155, %s169
    %p171 = scmp.eq.s32.totalorder %s19, 0
    %p172 = por %p170, %p171
    %s173 = ssub.s32 %s13, %s20
    %p174 = scmp.eq.s32.totalorder %s173, 0
    %s176 = sadd.s32 %s175, 1
    %s177 = scalar_select %p174, %s175, %s176
    %p180 = pneg %p174
    %p181 = scmp.eq.s32.totalorder %s13, 1
    %p182 = por %p180, %p181
    %p183 = scmp.ne.s32.totalorder %s175, %s178
    %p184 = scmp.eq.s32.totalorder %s13, 0
    %p185 = por %p183, %p184
    %p186 = scmp.ne.s32.totalorder %s175, %s178
    %p187 = scmp.eq.s32.totalorder %s18, 1
    %p188 = por %p186, %p187
    %p189 = scmp.ne.s32.totalorder %s178, %s179
    %p190 = scmp.eq.s32.totalorder %s18, 0
    %p191 = por %p189, %p190
    %p192 = scmp.ne.s32.totalorder %s178, %s179
    %p193 = scmp.eq.s32.totalorder %s19, 1
    %p194 = por %p192, %p193
    %p196 = scmp.ne.s32.totalorder %s179, %s195
    %p197 = scmp.eq.s32.totalorder %s19, 0
    %p198 = por %p196, %p197
    %p199 = scmp.le.s32.totalorder 1, %s13
    %p200 = scmp.lt.s32.totalorder %s13, 3
    %p201 = pnand %p199, %p200
    %p202 = pneg %p201
    // Predicated region
    $region9: #{decoder_forward.9} parent=5 // pred_check
      _
    $region10: #{decoder_forward.9} parent=5 // pred_check_branch
      %204 = sbr.rel (%p201) target = $region12
    $region11: #{decoder_forward.9} parent=5 // pred_region
      %s205 = ssub.s32 %s13, 1
      // Predicated region
      $region13: #{decoder_forward.9} parent=11 // pred_check
        %p206 = pneg %p60
      $region14: #{decoder_forward.9} parent=11 // pred_check_branch
        %208 = sbr.rel (%p206) target = $region16
      $region15: #{decoder_forward.9} parent=11 // pred_region
        _
      $region16: #{decoder_forward.9} parent=11 // pred_fallthru
        _
      // Predicated region
      $region17: #{decoder_forward.9} parent=11 // pred_check
        %p209 = pneg %p81
      $region18: #{decoder_forward.9} parent=11 // pred_check_branch
        %211 = sbr.rel (%p209) target = $region20
      $region19: #{decoder_forward.9} parent=11 // pred_region
        _
      $region20: #{decoder_forward.9} parent=11 // pred_fallthru
        _
      // Predicated region
      $region21: #{decoder_forward.9} parent=11 // pred_check
        %p212 = pneg %p102
      $region22: #{decoder_forward.9} parent=11 // pred_check_branch
        %214 = sbr.rel (%p212) target = $region24
      $region23: #{decoder_forward.9} parent=11 // pred_region
        _
      $region24: #{decoder_forward.9} parent=11 // pred_fallthru
        _
      // Predicated region
      $region25: #{decoder_forward.9} parent=11 // pred_check
        %p215 = pneg %p123
      $region26: #{decoder_forward.9} parent=11 // pred_check_branch
        %217 = sbr.rel (%p215) target = $region28
      $region27: #{decoder_forward.9} parent=11 // pred_region
        _
      $region28: #{decoder_forward.9} parent=11 // pred_fallthru
        _
      // Predicated region
      $region29: #{decoder_forward.9} parent=11 // pred_check
        %p218 = pneg %p144
      $region30: #{decoder_forward.9} parent=11 // pred_check_branch
        %220 = sbr.rel (%p218) target = $region32
      $region31: #{decoder_forward.9} parent=11 // pred_region
        _
      $region32: #{decoder_forward.9} parent=11 // pred_fallthru
        _
      // Predicated region
      $region33: #{decoder_forward.9} parent=11 // pred_check
        %p221 = pneg %p165
      $region34: #{decoder_forward.9} parent=11 // pred_check_branch
        %223 = sbr.rel (%p221) target = $region36
      $region35: #{decoder_forward.9} parent=11 // pred_region
        _
      $region36: #{decoder_forward.9} parent=11 // pred_fallthru
        _
    $region12: #{decoder_forward.9} parent=5 // pred_fallthru
      _
    %p224 = scmp.lt.s32.totalorder %s13, 2
    // Predicated region
    $region37: #{decoder_forward.9} parent=5 // pred_check
      %p225 = pneg %p224
    $region38: #{decoder_forward.9} parent=5 // pred_check_branch
      %227 = sbr.rel (%p225) target = $region40
    $region39: #{decoder_forward.9} parent=5 // pred_region
      // Predicated region
      $region41: #{decoder_forward.9} parent=39 // pred_check
        %p228 = pneg %p33
      $region42: #{decoder_forward.9} parent=39 // pred_check_branch
        %230 = sbr.rel (%p228) target = $region44
      $region43: #{decoder_forward.9} parent=39 // pred_region
        %p231 = scmp.lt.s32.totalorder %s13, 1
        %s232 = scalar_select %p231, %s13, 1
        %s233 = smul.addr %s232, 4
        %s234 = scalar_lea.vmem %s0, %s233
      $region44: #{decoder_forward.9} parent=39 // pred_fallthru
        _
    $region40: #{decoder_forward.9} parent=5 // pred_fallthru
      _
    %p235 = scmp.le.s32.totalorder 1, %s13
    %p236 = scmp.lt.s32.totalorder %s13, 3
    %p237 = pnand %p235, %p236
    %p238 = pneg %p237
    // Predicated region
    $region45: #{decoder_forward.9} parent=5 // pred_check
      _
    $region46: #{decoder_forward.9} parent=5 // pred_check_branch
      %240 = sbr.rel (%p237) target = $region48
    $region47: #{decoder_forward.9} parent=5 // pred_region
      %s241 = ssub.s32 %s13, 1
      %p242 = scmp.lt.s32.totalorder %s18, 1
      %s243 = scalar_select %p242, %s18, 1
      %s244 = smul.addr %s243, 4
      %s245 = scalar_lea.vmem %s0, %s244
      %p246 = pneg %p39
      %p247 = pneg %p36
      %p248 = pneg %p60
      %p249 = pneg %p57
      %p250 = pneg %p81
      %p251 = pneg %p78
      %p252 = pneg %p102
      %p253 = pneg %p99
      %p254 = pneg %p123
      %p255 = pneg %p120
      %p256 = pneg %p144
      %p257 = pneg %p141
      %p258 = pneg %p165
      %p259 = pneg %p162
      %p260 = pneg %p191
      %p261 = pneg %p188
      %p262 = scmp.lt.s32.totalorder %s18, 1
      %s263 = scalar_select %p262, %s18, 1
      %s264 = smul.addr %s263, 4
      %s265 = scalar_lea.vmem %s7, %s264
      %p266 = scmp.lt.s32.totalorder %s18, 1
      %s267 = scalar_select %p266, %s18, 1
      %s268 = smul.addr %s267, 4
      %s269 = scalar_lea.vmem %s0, %s268
      %p270 = scmp.lt.s32.totalorder %s18, 1
      %s271 = scalar_select %p270, %s18, 1
      %s272 = smul.addr %s271, 4
      %s273 = scalar_lea.vmem %s7, %s272
      %v275 = vld [vmem:[%s269] sm:$0xf]
      %v276 = vunpack.c.l.bf16 %v275
      %v277 = vld [vmem:[%s1] sm:$0xff]
      %v278 = vld [vmem:[%s1 + $0x8] sm:$0xf]
      %v279 = vld [vmem:[%s1 + $0xc] sm:$0xff]
      %v280 = vld [vmem:[%s1 + $0x14] sm:$0xf]
      %v281 = vld [vmem:[%s1 + $0x18] sm:$0xff]
      %v282 = vld [vmem:[%s1 + $0x20] sm:$0xf]
      %v283 = vld [vmem:[%s1 + $0x24] sm:$0xff]
      %v284 = vld [vmem:[%s1 + $0x2c] sm:$0xf]
      %v285 = vld [vmem:[%s1 + $0x30] sm:$0xff]
      %v286 = vld [vmem:[%s1 + $0x38] sm:$0xf]
      %v287 = vld [vmem:[%s1 + $0x3c] sm:$0xff]
      %v288 = vld [vmem:[%s1 + $0x44] sm:$0xf]
      %v289 = vld [vmem:[%s1 + $0x48] sm:$0xff]
      %v290 = vld [vmem:[%s1 + $0x50] sm:$0xf]
      %v291 = vld [vmem:[%s1 + $0x54] sm:$0xff]
      %v292 = vld [vmem:[%s1 + $0x5c] sm:$0xf]
      %v293 = vld [vmem:[%s1 + $0x60] sm:$0xff]
      %v294 = vld [vmem:[%s1 + $0x68] sm:$0xf]
      %v295 = vld [vmem:[%s1 + $0x6c] sm:$0xff]
      %v296 = vld [vmem:[%s1 + $0x74] sm:$0xf]
      %v297 = vld [vmem:[%s1 + $0x78] sm:$0xff]
      %v298 = vld [vmem:[%s1 + $0x80] sm:$0xf]
      %v299 = vld [vmem:[%s1 + $0x84] sm:$0xff]
      %v300 = vld [vmem:[%s1 + $0x8c] sm:$0xf]
      %v301 = vld [vmem:[%s1 + $0x90] sm:$0xff]
      %v302 = vld [vmem:[%s1 + $0x98] sm:$0xf]
      %v303 = vld [vmem:[%s1 + $0x9c] sm:$0xff]
      %v304 = vld [vmem:[%s1 + $0xa4] sm:$0xf]
      %v305 = vld [vmem:[%s1 + $0xa8] sm:$0xff]
      %v306 = vld [vmem:[%s1 + $0xb0] sm:$0xf]
      %v307 = vld [vmem:[%s1 + $0xb4] sm:$0xff]
      %v308 = vld [vmem:[%s1 + $0xbc] sm:$0xf]
      %v309 = vld [vmem:[%s2] sm:$0x7]
      %v311 = vlaneseq
      %v312 = vshrl.u32 %v311, 7
      %v313 = vsub.s32 0, %v312
      %v314 = vrot.slane %v309, %v313
      %v315 = vlaneseq
      %v316 = vshrl.u32 %v315, 7
      %v317 = vsub.s32 1, %v316
      %v318 = vrot.slane %v309, %v317
      %v319 = vlaneseq
      %v320 = vshrl.u32 %v319, 7
      %v321 = vsub.s32 2, %v320
      %v322 = vrot.slane %v309, %v321
      %v358 = vunpack.c.l.b16 %v277
      %v359 = vunpack.c.h.b16 %v277
      %v360 = vunpack.c.l.b16 %v278
      %v361 = vunpack.c.l.b16 %v279
      %v362 = vunpack.c.h.b16 %v279
      %v363 = vunpack.c.l.b16 %v280
      %v364 = vunpack.c.l.b16 %v281
      %v365 = vunpack.c.h.b16 %v281
      %v366 = vunpack.c.l.b16 %v282
      %v367 = vunpack.c.l.b16 %v283
      %v368 = vunpack.c.h.b16 %v283
      %v369 = vunpack.c.l.b16 %v284
      %v370 = vunpack.c.l.b16 %v285
      %v371 = vunpack.c.h.b16 %v285
      %v372 = vunpack.c.l.b16 %v286
      %v373 = vunpack.c.l.b16 %v287
      %v374 = vunpack.c.h.b16 %v287
      %v375 = vunpack.c.l.b16 %v288
      %v376 = vunpack.c.l.b16 %v289
      %v377 = vunpack.c.h.b16 %v289
      %v378 = vunpack.c.l.b16 %v290
      %v379 = vunpack.c.l.b16 %v291
      %v380 = vunpack.c.h.b16 %v291
      %v381 = vunpack.c.l.b16 %v292
      %v382 = vunpack.c.l.b16 %v293
      %v383 = vunpack.c.h.b16 %v293
      %v384 = vunpack.c.l.b16 %v294
      %v385 = vunpack.c.l.b16 %v295
      %v386 = vunpack.c.h.b16 %v295
      %v387 = vunpack.c.l.b16 %v296
      %v388 = vunpack.c.l.b16 %v297
      %v389 = vunpack.c.h.b16 %v297
      %v390 = vunpack.c.l.b16 %v298
      %v391 = vunpack.c.l.b16 %v299
      %v392 = vunpack.c.h.b16 %v299
      %v393 = vunpack.c.l.b16 %v300
      %v394 = vunpack.c.l.b16 %v301
      %v395 = vunpack.c.h.b16 %v301
      %v396 = vunpack.c.l.b16 %v302
      %v397 = vunpack.c.l.b16 %v303
      %v398 = vunpack.c.h.b16 %v303
      %v399 = vunpack.c.l.b16 %v304
      %v400 = vunpack.c.l.b16 %v305
      %v401 = vunpack.c.h.b16 %v305
      %v402 = vunpack.c.l.b16 %v306
      %v403 = vunpack.c.l.b16 %v307
      %v404 = vunpack.c.h.b16 %v307
      %v405 = vunpack.c.l.b16 %v308
      %v406 = vpack.c.b16 %v361, %v358
      %v407 = vpack.c.b16 %v362, %v359
      %v408 = vpack.c.b16 %v363, %v360
      %v409 = vpack.c.b16 %v367, %v364
      %v410 = vpack.c.b16 %v368, %v365
      %v411 = vpack.c.b16 %v369, %v366
      %v412 = vpack.c.b16 %v373, %v370
      %v413 = vpack.c.b16 %v374, %v371
      %v414 = vpack.c.b16 %v375, %v372
      %v415 = vpack.c.b16 %v379, %v376
      %v416 = vpack.c.b16 %v380, %v377
      %v417 = vpack.c.b16 %v381, %v378
      %v418 = vpack.c.b16 %v385, %v382
      %v419 = vpack.c.b16 %v386, %v383
      %v420 = vpack.c.b16 %v387, %v384
      %v421 = vpack.c.b16 %v391, %v388
      %v422 = vpack.c.b16 %v392, %v389
      %v423 = vpack.c.b16 %v393, %v390
      %v424 = vpack.c.b16 %v397, %v394
      %v425 = vpack.c.b16 %v398, %v395
      %v426 = vpack.c.b16 %v399, %v396
      %v427 = vpack.c.b16 %v403, %v400
      %v428 = vpack.c.b16 %v404, %v401
      %v429 = vpack.c.b16 %v405, %v402
      %454 = vmatprep.subr.bf16.mxu0 %v407
      %455 = vmatpush1.bf16.msra.mxu0 %v406
      %456 = vmatprep.subr.bf16.mxu0 %v410
      %457 = vmatpush1.bf16.msra.mxu0 %v409
      %458 = vmatprep.subr.bf16.mxu0 %v413
      %459 = vmatpush1.bf16.msra.mxu0 %v412
      %460 = vmatprep.subr.bf16.mxu0 %v416
      %461 = vmatpush1.bf16.msra.mxu0 %v415
      %462 = vmatprep.subr.bf16.mxu0 %v419
      %463 = vmatpush1.bf16.msra.mxu0 %v418
      %464 = vmatprep.subr.bf16.mxu0 %v422
      %465 = vmatpush1.bf16.msra.mxu0 %v421
      %466 = vmatprep.subr.bf16.mxu0 %v425
      %467 = vmatpush1.bf16.msra.mxu0 %v424
      %468 = vmatprep.subr.bf16.mxu0 %v428
      %469 = vmatpush1.bf16.msra.mxu0 %v427
      %470 = vmatprep.subr.bf16.mxu0 0
      %471 = vmatpush1.bf16.msra.mxu0 0
      %472 = vmatprep.subr.bf16.mxu0 0
      %473 = vmatpush1.bf16.msra.mxu0 0
      %474 = vmatprep.subr.bf16.mxu0 0
      %475 = vmatpush1.bf16.msra.mxu0 0
      %476 = vmatprep.subr.bf16.mxu0 0
      %477 = vmatpush1.bf16.msra.mxu0 0
      %478 = vmatprep.subr.bf16.mxu0 0
      %479 = vmatpush1.bf16.msra.mxu0 0
      %480 = vmatprep.subr.bf16.mxu0 0
      %481 = vmatpush1.bf16.msra.mxu0 0
      %482 = vmatprep.subr.bf16.mxu0 0
      %483 = vmatpush1.bf16.msra.mxu0 0
      %484 = vmatprep.subr.bf16.mxu0 0
      %485 = vmatpush1.bf16.msra.mxu0 0
      %486 = vmatprep.mubr.bf16.mxu0 0
      %487 = vmatmul.mubr.bf16.gmra.mrb[0].mxu0 %v275
      %v488 = vpop.f32.mrb[0].mxu0
      %v489 = vadd.f32 %v314, %v488
      %v490 = vpop.f32.mrb[0].mxu0
      %v491 = vadd.f32 %v318, %v490
      %v492 = vpop.f32.mrb[0].mxu0
      %v493 = vpop.f32.mrb[0].mxu0
      %494 = vdwg.mxu0
      %495 = vmatprep.subr.bf16.mxu0 0
      %496 = vmatpush1.bf16.msra.mxu0 %v408
      %497 = vmatprep.subr.bf16.mxu0 0
      %498 = vmatpush1.bf16.msra.mxu0 %v411
      %499 = vmatprep.subr.bf16.mxu0 0
      %500 = vmatpush1.bf16.msra.mxu0 %v414
      %501 = vmatprep.subr.bf16.mxu0 0
      %502 = vmatpush1.bf16.msra.mxu0 %v417
      %503 = vmatprep.subr.bf16.mxu0 0
      %504 = vmatpush1.bf16.msra.mxu0 %v420
      %505 = vmatprep.subr.bf16.mxu0 0
      %506 = vmatpush1.bf16.msra.mxu0 %v423
      %507 = vmatprep.subr.bf16.mxu0 0
      %508 = vmatpush1.bf16.msra.mxu0 %v426
      %509 = vmatprep.subr.bf16.mxu0 0
      %510 = vmatpush1.bf16.msra.mxu0 %v429
      %511 = vmatprep.subr.bf16.mxu0 0
      %512 = vmatpush1.bf16.msra.mxu0 0
      %513 = vmatprep.subr.bf16.mxu0 0
      %514 = vmatpush1.bf16.msra.mxu0 0
      %515 = vmatprep.subr.bf16.mxu0 0
      %516 = vmatpush1.bf16.msra.mxu0 0
      %517 = vmatprep.subr.bf16.mxu0 0
      %518 = vmatpush1.bf16.msra.mxu0 0
      %519 = vmatprep.subr.bf16.mxu0 0
      %520 = vmatpush1.bf16.msra.mxu0 0
      %521 = vmatprep.subr.bf16.mxu0 0
      %522 = vmatpush1.bf16.msra.mxu0 0
      %523 = vmatprep.subr.bf16.mxu0 0
      %524 = vmatpush1.bf16.msra.mxu0 0
      %525 = vmatprep.subr.bf16.mxu0 0
      %526 = vmatpush1.bf16.msra.mxu0 0
      %527 = vmatprep.mubr.bf16.mxu0 0
      %528 = vmatmul.mubr.bf16.gmra.mrb[0].mxu0 %v275
      %v529 = vpop.f32.mrb[0].mxu0
      %v530 = vadd.f32 %v322, %v529
      %v531 = vpop.f32.mrb[0].mxu0
      %v532 = vpop.f32.mrb[0].mxu0
      %v533 = vpop.f32.mrb[0].mxu0
      %534 = vdwg.mxu0
      %v535 = vld [vmem:[%s3] sm:$0xf]
      %v536 = vld [vmem:[%s3 + $0x4] sm:$0xf]
      %v537 = vld [vmem:[%s3 + $0x8] sm:$0xf]
      %v538 = vld [vmem:[%s3 + $0xc] sm:$0xf]
      %v539 = vld [vmem:[%s3 + $0x10] sm:$0xf]
      %v540 = vld [vmem:[%s3 + $0x14] sm:$0xf]
      %v541 = vld [vmem:[%s3 + $0x18] sm:$0xf]
      %v542 = vld [vmem:[%s3 + $0x1c] sm:$0xf]
      %v543 = vld [vmem:[%s3 + $0x20] sm:$0xf]
      %v544 = vld [vmem:[%s3 + $0x24] sm:$0xf]
      %v545 = vld [vmem:[%s3 + $0x28] sm:$0xf]
      %v546 = vld [vmem:[%s3 + $0x2c] sm:$0xf]
      %v547 = vld [vmem:[%s3 + $0x30] sm:$0xf]
      %v548 = vld [vmem:[%s3 + $0x34] sm:$0xf]
      %v549 = vld [vmem:[%s3 + $0x38] sm:$0xf]
      %v550 = vld [vmem:[%s3 + $0x3c] sm:$0xf]
      %v551 = vld [vmem:[%s4] sm:$0x1]
      %v552 = vld [vmem:[%s5] sm:$0x1]
      %v553 = vld [vmem:[%s6] sm:$0x1]
      %v554 = vmul.f32 %v489, 0.125
      %v555 = vlaneseq
      %v556 = vshrl.u32 %v555, 7
      %v557 = vlaneseq
      %v558 = vand.u32 %v557, 127
      %vm559 = vcmp.le.s32.totalorder %v558, %v556
      %v560 = vpack.c.bf16 %v554, %v554
      %v561 = vpack.c.bf16 %v491, %v491
      %v562 = vpack.c.bf16 %v530, %v530
      %vm563 = vcmask 523264
      %v565 = vsel %vm563, %v560, 0
      %v568 = vsel %vm563, %v561, 0
      %570 = vmatprep.subr.bf16.mxu0 0
      %571 = vmatpush1.bf16.xpose.msra.mxu0 %v568
      %572 = vmatprep.subr.bf16.mxu0 0
      %573 = vmatpush1.bf16.xpose.msra.mxu0 0
      %574 = vmatprep.subr.bf16.mxu0 0
      %575 = vmatpush1.bf16.xpose.msra.mxu0 0
      %576 = vmatprep.subr.bf16.mxu0 0
      %577 = vmatpush1.bf16.xpose.msra.mxu0 0
      %578 = vmatprep.subr.bf16.mxu0 0
      %579 = vmatpush1.bf16.xpose.msra.mxu0 0
      %580 = vmatprep.subr.bf16.mxu0 0
      %581 = vmatpush1.bf16.xpose.msra.mxu0 0
      %582 = vmatprep.subr.bf16.mxu0 0
      %583 = vmatpush1.bf16.xpose.msra.mxu0 0
      %584 = vmatprep.subr.bf16.mxu0 0
      %585 = vmatpush1.bf16.xpose.msra.mxu0 0
      %586 = vmatprep.subr.bf16.mxu0 0
      %587 = vmatpush1.bf16.xpose.msra.mxu0 0
      %588 = vmatprep.subr.bf16.mxu0 0
      %589 = vmatpush1.bf16.xpose.msra.mxu0 0
      %590 = vmatprep.subr.bf16.mxu0 0
      %591 = vmatpush1.bf16.xpose.msra.mxu0 0
      %592 = vmatprep.subr.bf16.mxu0 0
      %593 = vmatpush1.bf16.xpose.msra.mxu0 0
      %594 = vmatprep.subr.bf16.mxu0 0
      %595 = vmatpush1.bf16.xpose.msra.mxu0 0
      %596 = vmatprep.subr.bf16.mxu0 0
      %597 = vmatpush1.bf16.xpose.msra.mxu0 0
      %598 = vmatprep.subr.bf16.mxu0 0
      %599 = vmatpush1.bf16.xpose.msra.mxu0 0
      %600 = vmatprep.subr.bf16.mxu0 0
      %601 = vmatpush1.bf16.xpose.msra.mxu0 0
      %602 = vmatprep.mubr.bf16.mxu0 0
      %603 = vmatmul.mubr.bf16.gmra.mrb[0].mxu0 %v565
      %v604 = vpop.f32.mrb[0].mxu0
      %v605 = vadd.f32 0.0, %v604
      %v606 = vpop.f32.mrb[0].mxu0
      %v607 = vpop.f32.mrb[0].mxu0
      %v608 = vpop.f32.mrb[0].mxu0
      %609 = vdwg.mxu0
      %v610 = vsel %vm559, %v605, -1e+09
      %vm611 = vcmask 64512
      %v612 = vsel %vm611, %v610, -inf
      %613 = vmax.xlane.f32.xlu0 %v612
      %v614 = vpop.xlane.xlu0 %613
      %v615 = vsub.f32 %v610, %v614
      %v616 = vmul.f32 %v615, 1.442695
      %v617 = vpow.pop %v616
      %v618 = vsel %vm611, %v617, 0.0
      %619 = vadd.xlane.f32.xlu0 %v618
      %v620 = vpop.xlane.xlu0 %619
      %v621 = vrcp.pop %v620
      %v622 = vmul.f32 %v617, %v621
      %v623 = vpack.c.bf16 %v622, %v622
      %v625 = vsel %vm611, %v623, 0
      %vm627 = vcmask 1043456
      %v629 = vsel %vm627, %v562, 0
      %631 = vmatprep.subr.bf16.mxu0 0
      %632 = vmatpush1.bf16.msra.mxu0 %v629
      %633 = vmatprep.subr.bf16.mxu0 0
      %634 = vmatpush1.bf16.msra.mxu0 0
      %635 = vmatprep.subr.bf16.mxu0 0
      %636 = vmatpush1.bf16.msra.mxu0 0
      %637 = vmatprep.subr.bf16.mxu0 0
      %638 = vmatpush1.bf16.msra.mxu0 0
      %639 = vmatprep.subr.bf16.mxu0 0
      %640 = vmatpush1.bf16.msra.mxu0 0
      %641 = vmatprep.subr.bf16.mxu0 0
      %642 = vmatpush1.bf16.msra.mxu0 0
      %643 = vmatprep.subr.bf16.mxu0 0
      %644 = vmatpush1.bf16.msra.mxu0 0
      %645 = vmatprep.subr.bf16.mxu0 0
      %646 = vmatpush1.bf16.msra.mxu0 0
      %647 = vmatprep.subr.bf16.mxu0 0
      %648 = vmatpush1.bf16.msra.mxu0 0
      %649 = vmatprep.subr.bf16.mxu0 0
      %650 = vmatpush1.bf16.msra.mxu0 0
      %651 = vmatprep.subr.bf16.mxu0 0
      %652 = vmatpush1.bf16.msra.mxu0 0
      %653 = vmatprep.subr.bf16.mxu0 0
      %654 = vmatpush1.bf16.msra.mxu0 0
      %655 = vmatprep.subr.bf16.mxu0 0
      %656 = vmatpush1.bf16.msra.mxu0 0
      %657 = vmatprep.subr.bf16.mxu0 0
      %658 = vmatpush1.bf16.msra.mxu0 0
      %659 = vmatprep.subr.bf16.mxu0 0
      %660 = vmatpush1.bf16.msra.mxu0 0
      %661 = vmatprep.subr.bf16.mxu0 0
      %662 = vmatpush1.bf16.msra.mxu0 0
      %663 = vmatprep.mubr.bf16.mxu0 0
      %664 = vmatmul.mubr.bf16.gmra.mrb[0].mxu0 %v625
      %v665 = vpop.f32.mrb[0].mxu0
      %v666 = vadd.f32 0.0, %v665
      %v667 = vpop.f32.mrb[0].mxu0
      %v668 = vpop.f32.mrb[0].mxu0
      %v669 = vpop.f32.mrb[0].mxu0
      %670 = vdwg.mxu0
      %672 = vrot.lane.b32.xlu0 %v560, 64
      %v673 = vpop.permute.xlu0 %672
      %675 = vrot.lane.b32.xlu0 %v561, 64
      %v676 = vpop.permute.xlu0 %675
      %v678 = vsel %vm563, %v673, 0
      %v681 = vsel %vm563, %v676, 0
      %683 = vmatprep.subr.bf16.mxu0 0
      %684 = vmatpush1.bf16.xpose.msra.mxu0 %v681
      %685 = vmatprep.subr.bf16.mxu0 0
      %686 = vmatpush1.bf16.xpose.msra.mxu0 0
      %687 = vmatprep.subr.bf16.mxu0 0
      %688 = vmatpush1.bf16.xpose.msra.mxu0 0
      %689 = vmatprep.subr.bf16.mxu0 0
      %690 = vmatpush1.bf16.xpose.msra.mxu0 0
      %691 = vmatprep.subr.bf16.mxu0 0
      %692 = vmatpush1.bf16.xpose.msra.mxu0 0
      %693 = vmatprep.subr.bf16.mxu0 0
      %694 = vmatpush1.bf16.xpose.msra.mxu0 0
      %695 = vmatprep.subr.bf16.mxu0 0
      %696 = vmatpush1.bf16.xpose.msra.mxu0 0
      %697 = vmatprep.subr.bf16.mxu0 0
      %698 = vmatpush1.bf16.xpose.msra.mxu0 0
      %699 = vmatprep.subr.bf16.mxu0 0
      %700 = vmatpush1.bf16.xpose.msra.mxu0 0
      %701 = vmatprep.subr.bf16.mxu0 0
      %702 = vmatpush1.bf16.xpose.msra.mxu0 0
      %703 = vmatprep.subr.bf16.mxu0 0
      %704 = vmatpush1.bf16.xpose.msra.mxu0 0
      %705 = vmatprep.subr.bf16.mxu0 0
      %706 = vmatpush1.bf16.xpose.msra.mxu0 0
      %707 = vmatprep.subr.bf16.mxu0 0
      %708 = vmatpush1.bf16.xpose.msra.mxu0 0
      %709 = vmatprep.subr.bf16.mxu0 0
      %710 = vmatpush1.bf16.xpose.msra.mxu0 0
      %711 = vmatprep.subr.bf16.mxu0 0
      %712 = vmatpush1.bf16.xpose.msra.mxu0 0
      %713 = vmatprep.subr.bf16.mxu0 0
      %714 = vmatpush1.bf16.xpose.msra.mxu0 0
      %715 = vmatprep.mubr.bf16.mxu0 0
      %716 = vmatmul.mubr.bf16.gmra.mrb[0].mxu0 %v678
      %v717 = vpop.f32.mrb[0].mxu0
      %v718 = vadd.f32 0.0, %v717
      %v719 = vpop.f32.mrb[0].mxu0
      %v720 = vpop.f32.mrb[0].mxu0
      %v721 = vpop.f32.mrb[0].mxu0
      %722 = vdwg.mxu0
      %v723 = vsel %vm559, %v718, -1e+09
      %v724 = vsel %vm611, %v723, -inf
      %725 = vmax.xlane.f32.xlu0 %v724
      %v726 = vpop.xlane.xlu0 %725
      %v727 = vsub.f32 %v723, %v726
      %v728 = vmul.f32 %v727, 1.442695
      %v729 = vpow.pop %v728
      %v730 = vsel %vm611, %v729, 0.0
      %731 = vadd.xlane.f32.xlu0 %v730
      %v732 = vpop.xlane.xlu0 %731
      %v733 = vrcp.pop %v732
      %v734 = vmul.f32 %v729, %v733
      %v735 = vpack.c.bf16 %v734, %v734
      %737 = vrot.lane.b32.xlu0 %v562, 64
      %v738 = vpop.permute.xlu0 %737
      %v740 = vsel %vm611, %v735, 0
      %v743 = vsel %vm627, %v738, 0
      %745 = vmatprep.subr.bf16.mxu0 0
      %746 = vmatpush1.bf16.msra.mxu0 %v743
      %747 = vmatprep.subr.bf16.mxu0 0
      %748 = vmatpush1.bf16.msra.mxu0 0
      %749 = vmatprep.subr.bf16.mxu0 0
      %750 = vmatpush1.bf16.msra.mxu0 0
      %751 = vmatprep.subr.bf16.mxu0 0
      %752 = vmatpush1.bf16.msra.mxu0 0
      %753 = vmatprep.subr.bf16.mxu0 0
      %754 = vmatpush1.bf16.msra.mxu0 0
      %755 = vmatprep.subr.bf16.mxu0 0
      %756 = vmatpush1.bf16.msra.mxu0 0
      %757 = vmatprep.subr.bf16.mxu0 0
      %758 = vmatpush1.bf16.msra.mxu0 0
      %759 = vmatprep.subr.bf16.mxu0 0
      %760 = vmatpush1.bf16.msra.mxu0 0
      %761 = vmatprep.subr.bf16.mxu0 0
      %762 = vmatpush1.bf16.msra.mxu0 0
      %763 = vmatprep.subr.bf16.mxu0 0
      %764 = vmatpush1.bf16.msra.mxu0 0
      %765 = vmatprep.subr.bf16.mxu0 0
      %766 = vmatpush1.bf16.msra.mxu0 0
      %767 = vmatprep.subr.bf16.mxu0 0
      %768 = vmatpush1.bf16.msra.mxu0 0
      %769 = vmatprep.subr.bf16.mxu0 0
      %770 = vmatpush1.bf16.msra.mxu0 0
      %771 = vmatprep.subr.bf16.mxu0 0
      %772 = vmatpush1.bf16.msra.mxu0 0
      %773 = vmatprep.subr.bf16.mxu0 0
      %774 = vmatpush1.bf16.msra.mxu0 0
      %775 = vmatprep.subr.bf16.mxu0 0
      %776 = vmatpush1.bf16.msra.mxu0 0
      %777 = vmatprep.mubr.bf16.mxu0 0
      %778 = vmatmul.mubr.bf16.gmra.mrb[0].mxu0 %v740
      %v779 = vpop.f32.mrb[0].mxu0
      %v780 = vadd.f32 0.0, %v779
      %v781 = vpop.f32.mrb[0].mxu0
      %v782 = vpop.f32.mrb[0].mxu0
      %v783 = vpop.f32.mrb[0].mxu0
      %784 = vdwg.mxu0
      %786 = vrot.lane.b32.xlu0 %v780, 64
      %v787 = vpop.permute.xlu0 %786
      %v789 = vsel %vm563, %v666, %v787
      %v790 = vpack.c.bf16 %v789, %v789
      %v792 = vlaneseq
      %v793 = vshrl.u32 %v792, 7
      %v794 = vsub.s32 0, %v793
      %v795 = vrot.slane %v551, %v794
      %v813 = vunpack.c.l.b16 %v535
      %v814 = vunpack.c.l.b16 %v536
      %v815 = vunpack.c.l.b16 %v537
      %v816 = vunpack.c.l.b16 %v538
      %v817 = vunpack.c.l.b16 %v539
      %v818 = vunpack.c.l.b16 %v540
      %v819 = vunpack.c.l.b16 %v541
      %v820 = vunpack.c.l.b16 %v542
      %v821 = vunpack.c.l.b16 %v543
      %v822 = vunpack.c.l.b16 %v544
      %v823 = vunpack.c.l.b16 %v545
      %v824 = vunpack.c.l.b16 %v546
      %v825 = vunpack.c.l.b16 %v547
      %v826 = vunpack.c.l.b16 %v548
      %v827 = vunpack.c.l.b16 %v549
      %v828 = vunpack.c.l.b16 %v550
      %v829 = vpack.c.b16 %v814, %v813
      %v830 = vpack.c.b16 %v816, %v815
      %v831 = vpack.c.b16 %v818, %v817
      %v832 = vpack.c.b16 %v820, %v819
      %v833 = vpack.c.b16 %v822, %v821
      %v834 = vpack.c.b16 %v824, %v823
      %v835 = vpack.c.b16 %v826, %v825
      %v836 = vpack.c.b16 %v828, %v827
      %845 = vmatprep.subr.bf16.mxu0 0
      %846 = vmatpush1.bf16.msra.mxu0 %v829
      %847 = vmatprep.subr.bf16.mxu0 0
      %848 = vmatpush1.bf16.msra.mxu0 %v830
      %849 = vmatprep.subr.bf16.mxu0 0
      %850 = vmatpush1.bf16.msra.mxu0 %v831
      %851 = vmatprep.subr.bf16.mxu0 0
      %852 = vmatpush1.bf16.msra.mxu0 %v832
      %853 = vmatprep.subr.bf16.mxu0 0
      %854 = vmatpush1.bf16.msra.mxu0 %v833
      %855 = vmatprep.subr.bf16.mxu0 0
      %856 = vmatpush1.bf16.msra.mxu0 %v834
      %857 = vmatprep.subr.bf16.mxu0 0
      %858 = vmatpush1.bf16.msra.mxu0 %v835
      %859 = vmatprep.subr.bf16.mxu0 0
      %860 = vmatpush1.bf16.msra.mxu0 %v836
      %861 = vmatprep.subr.bf16.mxu0 0
      %862 = vmatpush1.bf16.msra.mxu0 0
      %863 = vmatprep.subr.bf16.mxu0 0
      %864 = vmatpush1.bf16.msra.mxu0 0
      %865 = vmatprep.subr.bf16.mxu0 0
      %866 = vmatpush1.bf16.msra.mxu0 0
      %867 = vmatprep.subr.bf16.mxu0 0
      %868 = vmatpush1.bf16.msra.mxu0 0
      %869 = vmatprep.subr.bf16.mxu0 0
      %870 = vmatpush1.bf16.msra.mxu0 0
      %871 = vmatprep.subr.bf16.mxu0 0
      %872 = vmatpush1.bf16.msra.mxu0 0
      %873 = vmatprep.subr.bf16.mxu0 0
      %874 = vmatpush1.bf16.msra.mxu0 0
      %875 = vmatprep.subr.bf16.mxu0 0
      %876 = vmatpush1.bf16.msra.mxu0 0
      %877 = vmatprep.mubr.bf16.mxu0 0
      %878 = vmatmul.mubr.bf16.gmra.mrb[0].mxu0 %v790
      %v879 = vpop.f32.mrb[0].mxu0
      %v880 = vadd.f32 %v795, %v879
      %v881 = vpop.f32.mrb[0].mxu0
      %v882 = vpop.f32.mrb[0].mxu0
      %v883 = vpop.f32.mrb[0].mxu0
      %884 = vdwg.mxu0
      %v885 = vadd.f32 %v880, %v276
      %886 = vadd.xlane.f32.xlu0 %v885
      %v887 = vpop.xlane.xlu0 %886
      %v888 = vrcp.pop 128.0
      %v889 = vmul.f32 %v887, %v888
      %v890 = vsub.f32 %v885, %v889
      %v891 = vmul.f32 %v890, %v890
      %892 = vadd.xlane.f32.xlu0 %v891
      %v893 = vpop.xlane.xlu0 %892
      %v894 = vmul.f32 %v893, %v888
      %v895 = vadd.f32 %v894, 1e-06
      %v896 = vrsqrt.pop %v895
      %v897 = vmul.f32 %v890, %v896
      %v899 = vlaneseq
      %v900 = vshrl.u32 %v899, 7
      %v901 = vsub.s32 0, %v900
      %v902 = vrot.slane %v552, %v901
      %v904 = vmul.f32 %v897, %v902
      %v906 = vlaneseq
      %v907 = vshrl.u32 %v906, 7
      %v908 = vsub.s32 0, %v907
      %v909 = vrot.slane %v553, %v908
      %v911 = vadd.f32 %v904, %v909
      %v912 = vpack.c.bf16 %v911, %v911
      %913 = vst [vmem:[%s273] sm:$0xf] %v912
      %p914 = scmp.lt.s32.totalorder %s18, 1
      %s915 = scalar_select %p914, %s18, 1
      %s916 = smul.addr %s915, 4
      %s917 = scalar_lea.vmem %s7, %s916
      // Predicated region
      $region49: #{decoder_forward.9} parent=47 // pred_check
        %p918 = pneg %p188
      $region50: #{decoder_forward.9} parent=47 // pred_check_branch
        %920 = sbr.rel (%p918) target = $region52
      $region51: #{decoder_forward.9} parent=47 // pred_region
        _
      $region52: #{decoder_forward.9} parent=47 // pred_fallthru
        _
    $region48: #{decoder_forward.9} parent=5 // pred_fallthru
      _
    %p921 = scmp.le.s32.totalorder 2, %s13
    // Predicated region
    $region53: #{decoder_forward.9} parent=5 // pred_check
      %p922 = pneg %p921
    $region54: #{decoder_forward.9} parent=5 // pred_check_branch
      %924 = sbr.rel (%p922) target = $region56
    $region55: #{decoder_forward.9} parent=5 // pred_region
      %s925 = ssub.s32 %s13, 2
      // Predicated region
      $region57: #{decoder_forward.9} parent=55 // pred_check
        %p926 = pneg %p194
      $region58: #{decoder_forward.9} parent=55 // pred_check_branch
        %928 = sbr.rel (%p926) target = $region60
      $region59: #{decoder_forward.9} parent=55 // pred_region
        %p929 = scmp.lt.s32.totalorder %s19, 1
        %s930 = scalar_select %p929, %s19, 1
        %s931 = smul.addr %s930, 4
        %s932 = scalar_lea.vmem %s7, %s931
      $region60: #{decoder_forward.9} parent=55 // pred_fallthru
        _
    $region56: #{decoder_forward.9} parent=5 // pred_fallthru
      _
  $region6: #{decoder_forward.9} parent=0 // loop_footer
    %s17 = sadd.s32 1, %s13
  $region7: #{decoder_forward.9} parent=0 // loop_footer_branch
    %12 = sbr.rel target = $region3
  $region8: #{decoder_forward.9} parent=0 // loop_exit
    _

// kernel: decoder_forward.7
$region0: #{decoder_forward.7}
  #allocation0 [shape = 'u32[]', space=smem, size = 0x4, offset = 0x4, fixed_abs, tag = 'smem constant byte address 0x4 - core index']
  #allocation1 [shape = 'u32[144,128]{1,0:T(1,128)}', space=vmem, size = 0x12000, scoped, tag = 'internal scratch']
  %s0 = inlined_call_operand.vmem [shape: bf16[2,8,128], index: 0, kind: input, shape index: {}]
  %s1 = inlined_call_operand.vmem [shape: f32[2,8,128], index: 1, kind: input, shape index: {}]
  %s2 = inlined_call_operand.vmem [shape: bf16[128,128], index: 2, kind: input, shape index: {}]
  %s3 = inlined_call_operand.vmem [shape: f32[1,128], index: 3, kind: input, shape index: {}]
  %s4 = inlined_call_operand.vmem [shape: bf16[128,256], index: 4, kind: input, shape index: {}]
  %s5 = inlined_call_operand.vmem [shape: f32[1,256], index: 5, kind: input, shape index: {}]
  %s6 = inlined_call_operand.vmem [shape: bf16[128,128], index: 6, kind: input, shape index: {}]
  %s7 = inlined_call_operand.vmem [shape: f32[1,128], index: 7, kind: input, shape index: {}]
  %s8 = inlined_call_operand.vmem [shape: bf16[2,8,8], index: 8, kind: input, shape index: {}]
  %s9 = inlined_call_operand.vmem [shape: f32[1,128], index: 9, kind: input, shape index: {}]
  %s10 = inlined_call_operand.vmem [shape: f32[1,128], index: 10, kind: input, shape index: {}]
  %s11 = inlined_call_operand.vmem [shape: bf16[2,8,128], index: 11, kind: output, shape index: {}]
  %s12 = sld [smem:[#allocation0]]
  $region77: #{decoder_forward.7} parent=0
    _
  %s14 = ssub.s32 1, %s12
  %s15 = scalar_select 0, %s14, %s12
  loop: start=0, step=1, limit=4
  $region2: #{decoder_forward.7} parent=0 // loop_pre_header
    _
  $region3: #{decoder_forward.7} parent=0 // loop_header
    %s17 = sphi 0, %s21
    %p18 = scmp.ge.s32.totalorder %s17, 4
    %s27 = sphi 0, %s29
    %s30 = sphi 0, %s27
    %s31 = sphi 0, %s30
    %s47 = sphi 0, %s31
    %s53 = sphi 0, %s55
    %s56 = sphi 0, %s53
    %s57 = sphi 0, %s56
    %s73 = sphi 0, %s57
    %s77 = sphi 0, %s77
    %s79 = sphi 0, %s77
    %s80 = sphi 0, %s79
    %s94 = sphi 0, %s80
    %s98 = sphi 0, %s98
    %s100 = sphi 0, %s98
    %s101 = sphi 0, %s100
    %s115 = sphi 0, %s101
    %s119 = sphi 0, %s119
    %s121 = sphi 0, %s119
    %s122 = sphi 0, %s121
    %s136 = sphi 0, %s122
    %s140 = sphi 0, %s140
    %s142 = sphi 0, %s140
    %s143 = sphi 0, %s142
    %s157 = sphi 0, %s143
    %s161 = sphi 0, %s161
    %s163 = sphi 0, %s161
    %s164 = sphi 0, %s163
    %s178 = sphi 0, %s164
    %s182 = sphi 0, %s182
    %s184 = sphi 0, %s182
    %s185 = sphi 0, %s184
    %s199 = sphi 0, %s185
    %s205 = sphi 0, %s207
    %s208 = sphi 0, %s205
    %s209 = sphi 0, %s208
    %s225 = sphi 0, %s209
    %s229 = sphi 0, %s229
    %s231 = sphi 0, %s229
    %s232 = sphi 0, %s231
    %s246 = sphi 0, %s232
    %s250 = sphi 0, %s250
    %s252 = sphi 0, %s250
    %s253 = sphi 0, %s252
    %s267 = sphi 0, %s253
    %s273 = sphi 0, %s275
    %s276 = sphi 0, %s273
    %s277 = sphi 0, %s276
    %s293 = sphi 0, %s277
  $region4: #{decoder_forward.7} parent=0 // loop_header_branch
    %20 = sbr.rel (%p18) target = $region8
  $region5: #{decoder_forward.7} parent=0 // loop_body
    %s22 = ssub.s32 %s17, 1
    %s23 = ssub.s32 %s17, 2
    %s24 = sadd.s32 %s17, 1
    %s25 = ssub.s32 %s17, %s24
    %p26 = scmp.eq.s32.totalorder %s25, 0
    %s28 = sadd.s32 %s27, 1
    %s29 = scalar_select %p26, %s27, %s28
    %p32 = pneg %p26
    %p33 = scmp.eq.s32.totalorder %s17, 1
    %p34 = por %p32, %p33
    %p35 = scmp.ne.s32.totalorder %s27, %s30
    %p36 = scmp.eq.s32.totalorder %s17, 0
    %p37 = por %p35, %p36
    %p38 = scmp.ne.s32.totalorder %s27, %s30
    %p39 = scmp.eq.s32.totalorder %s22, 1
    %p40 = por %p38, %p39
    %p41 = scmp.ne.s32.totalorder %s30, %s31
    %p42 = scmp.eq.s32.totalorder %s22, 0
    %p43 = por %p41, %p42
    %p44 = scmp.ne.s32.totalorder %s30, %s31
    %p45 = scmp.eq.s32.totalorder %s23, 1
    %p46 = por %p44, %p45
    %p48 = scmp.ne.s32.totalorder %s31, %s47
    %p49 = scmp.eq.s32.totalorder %s23, 0
    %p50 = por %p48, %p49
    %s51 = ssub.s32 %s17, %s24
    %p52 = scmp.eq.s32.totalorder %s51, 0
    %s54 = sadd.s32 %s53, 1
    %s55 = scalar_select %p52, %s53, %s54
    %p58 = pneg %p52
    %p59 = scmp.eq.s32.totalorder %s17, 1
    %p60 = por %p58, %p59
    %p61 = scmp.ne.s32.totalorder %s53, %s56
    %p62 = scmp.eq.s32.totalorder %s17, 0
    %p63 = por %p61, %p62
    %p64 = scmp.ne.s32.totalorder %s53, %s56
    %p65 = scmp.eq.s32.totalorder %s22, 1
    %p66 = por %p64, %p65
    %p67 = scmp.ne.s32.totalorder %s56, %s57
    %p68 = scmp.eq.s32.totalorder %s22, 0
    %p69 = por %p67, %p68
    %p70 = scmp.ne.s32.totalorder %s56, %s57
    %p71 = scmp.eq.s32.totalorder %s23, 1
    %p72 = por %p70, %p71
    %p74 = scmp.ne.s32.totalorder %s57, %s73
    %p75 = scmp.eq.s32.totalorder %s23, 0
    %p76 = por %p74, %p75
    %s78 = sadd.s32 %s77, 1
    %p81 = scmp.eq.s32.totalorder %s17, 1
    %p82 = scmp.ne.s32.totalorder %s77, %s79
    %p83 = scmp.eq.s32.totalorder %s17, 0
    %p84 = por %p82, %p83
    %p85 = scmp.ne.s32.totalorder %s77, %s79
    %p86 = scmp.eq.s32.totalorder %s22, 1
    %p87 = por %p85, %p86
    %p88 = scmp.ne.s32.totalorder %s79, %s80
    %p89 = scmp.eq.s32.totalorder %s22, 0
    %p90 = por %p88, %p89
    %p91 = scmp.ne.s32.totalorder %s79, %s80
    %p92 = scmp.eq.s32.totalorder %s23, 1
    %p93 = por %p91, %p92
    %p95 = scmp.ne.s32.totalorder %s80, %s94
    %p96 = scmp.eq.s32.totalorder %s23, 0
    %p97 = por %p95, %p96
    %s99 = sadd.s32 %s98, 1
    %p102 = scmp.eq.s32.totalorder %s17, 1
    %p103 = scmp.ne.s32.totalorder %s98, %s100
    %p104 = scmp.eq.s32.totalorder %s17, 0
    %p105 = por %p103, %p104
    %p106 = scmp.ne.s32.totalorder %s98, %s100
    %p107 = scmp.eq.s32.totalorder %s22, 1
    %p108 = por %p106, %p107
    %p109 = scmp.ne.s32.totalorder %s100, %s101
    %p110 = scmp.eq.s32.totalorder %s22, 0
    %p111 = por %p109, %p110
    %p112 = scmp.ne.s32.totalorder %s100, %s101
    %p113 = scmp.eq.s32.totalorder %s23, 1
    %p114 = por %p112, %p113
    %p116 = scmp.ne.s32.totalorder %s101, %s115
    %p117 = scmp.eq.s32.totalorder %s23, 0
    %p118 = por %p116, %p117
    %s120 = sadd.s32 %s119, 1
    %p123 = scmp.eq.s32.totalorder %s17, 1
    %p124 = scmp.ne.s32.totalorder %s119, %s121
    %p125 = scmp.eq.s32.totalorder %s17, 0
    %p126 = por %p124, %p125
    %p127 = scmp.ne.s32.totalorder %s119, %s121
    %p128 = scmp.eq.s32.totalorder %s22, 1
    %p129 = por %p127, %p128
    %p130 = scmp.ne.s32.totalorder %s121, %s122
    %p131 = scmp.eq.s32.totalorder %s22, 0
    %p132 = por %p130, %p131
    %p133 = scmp.ne.s32.totalorder %s121, %s122
    %p134 = scmp.eq.s32.totalorder %s23, 1
    %p135 = por %p133, %p134
    %p137 = scmp.ne.s32.totalorder %s122, %s136
    %p138 = scmp.eq.s32.totalorder %s23, 0
    %p139 = por %p137, %p138
    %s141 = sadd.s32 %s140, 1
    %p144 = scmp.eq.s32.totalorder %s17, 1
    %p145 = scmp.ne.s32.totalorder %s140, %s142
    %p146 = scmp.eq.s32.totalorder %s17, 0
    %p147 = por %p145, %p146
    %p148 = scmp.ne.s32.totalorder %s140, %s142
    %p149 = scmp.eq.s32.totalorder %s22, 1
    %p150 = por %p148, %p149
    %p151 = scmp.ne.s32.totalorder %s142, %s143
    %p152 = scmp.eq.s32.totalorder %s22, 0
    %p153 = por %p151, %p152
    %p154 = scmp.ne.s32.totalorder %s142, %s143
    %p155 = scmp.eq.s32.totalorder %s23, 1
    %p156 = por %p154, %p155
    %p158 = scmp.ne.s32.totalorder %s143, %s157
    %p159 = scmp.eq.s32.totalorder %s23, 0
    %p160 = por %p158, %p159
    %s162 = sadd.s32 %s161, 1
    %p165 = scmp.eq.s32.totalorder %s17, 1
    %p166 = scmp.ne.s32.totalorder %s161, %s163
    %p167 = scmp.eq.s32.totalorder %s17, 0
    %p168 = por %p166, %p167
    %p169 = scmp.ne.s32.totalorder %s161, %s163
    %p170 = scmp.eq.s32.totalorder %s22, 1
    %p171 = por %p169, %p170
    %p172 = scmp.ne.s32.totalorder %s163, %s164
    %p173 = scmp.eq.s32.totalorder %s22, 0
    %p174 = por %p172, %p173
    %p175 = scmp.ne.s32.totalorder %s163, %s164
    %p176 = scmp.eq.s32.totalorder %s23, 1
    %p177 = por %p175, %p176
    %p179 = scmp.ne.s32.totalorder %s164, %s178
    %p180 = scmp.eq.s32.totalorder %s23, 0
    %p181 = por %p179, %p180
    %s183 = sadd.s32 %s182, 1
    %p186 = scmp.eq.s32.totalorder %s17, 1
    %p187 = scmp.ne.s32.totalorder %s182, %s184
    %p188 = scmp.eq.s32.totalorder %s17, 0
    %p189 = por %p187, %p188
    %p190 = scmp.ne.s32.totalorder %s182, %s184
    %p191 = scmp.eq.s32.totalorder %s22, 1
    %p192 = por %p190, %p191
    %p193 = scmp.ne.s32.totalorder %s184, %s185
    %p194 = scmp.eq.s32.totalorder %s22, 0
    %p195 = por %p193, %p194
    %p196 = scmp.ne.s32.totalorder %s184, %s185
    %p197 = scmp.eq.s32.totalorder %s23, 1
    %p198 = por %p196, %p197
    %p200 = scmp.ne.s32.totalorder %s185, %s199
    %p201 = scmp.eq.s32.totalorder %s23, 0
    %p202 = por %p200, %p201
    %s203 = ssub.s32 %s17, %s24
    %p204 = scmp.eq.s32.totalorder %s203, 0
    %s206 = sadd.s32 %s205, 1
    %s207 = scalar_select %p204, %s205, %s206
    %p210 = pneg %p204
    %p211 = scmp.eq.s32.totalorder %s17, 1
    %p212 = por %p210, %p211
    %p213 = scmp.ne.s32.totalorder %s205, %s208
    %p214 = scmp.eq.s32.totalorder %s17, 0
    %p215 = por %p213, %p214
    %p216 = scmp.ne.s32.totalorder %s205, %s208
    %p217 = scmp.eq.s32.totalorder %s22, 1
    %p218 = por %p216, %p217
    %p219 = scmp.ne.s32.totalorder %s208, %s209
    %p220 = scmp.eq.s32.totalorder %s22, 0
    %p221 = por %p219, %p220
    %p222 = scmp.ne.s32.totalorder %s208, %s209
    %p223 = scmp.eq.s32.totalorder %s23, 1
    %p224 = por %p222, %p223
    %p226 = scmp.ne.s32.totalorder %s209, %s225
    %p227 = scmp.eq.s32.totalorder %s23, 0
    %p228 = por %p226, %p227
    %s230 = sadd.s32 %s229, 1
    %p233 = scmp.eq.s32.totalorder %s17, 1
    %p234 = scmp.ne.s32.totalorder %s229, %s231
    %p235 = scmp.eq.s32.totalorder %s17, 0
    %p236 = por %p234, %p235
    %p237 = scmp.ne.s32.totalorder %s229, %s231
    %p238 = scmp.eq.s32.totalorder %s22, 1
    %p239 = por %p237, %p238
    %p240 = scmp.ne.s32.totalorder %s231, %s232
    %p241 = scmp.eq.s32.totalorder %s22, 0
    %p242 = por %p240, %p241
    %p243 = scmp.ne.s32.totalorder %s231, %s232
    %p244 = scmp.eq.s32.totalorder %s23, 1
    %p245 = por %p243, %p244
    %p247 = scmp.ne.s32.totalorder %s232, %s246
    %p248 = scmp.eq.s32.totalorder %s23, 0
    %p249 = por %p247, %p248
    %s251 = sadd.s32 %s250, 1
    %p254 = scmp.eq.s32.totalorder %s17, 1
    %p255 = scmp.ne.s32.totalorder %s250, %s252
    %p256 = scmp.eq.s32.totalorder %s17, 0
    %p257 = por %p255, %p256
    %p258 = scmp.ne.s32.totalorder %s250, %s252
    %p259 = scmp.eq.s32.totalorder %s22, 1
    %p260 = por %p258, %p259
    %p261 = scmp.ne.s32.totalorder %s252, %s253
    %p262 = scmp.eq.s32.totalorder %s22, 0
    %p263 = por %p261, %p262
    %p264 = scmp.ne.s32.totalorder %s252, %s253
    %p265 = scmp.eq.s32.totalorder %s23, 1
    %p266 = por %p264, %p265
    %p268 = scmp.ne.s32.totalorder %s253, %s267
    %p269 = scmp.eq.s32.totalorder %s23, 0
    %p270 = por %p268, %p269
    %s271 = ssub.s32 %s17, %s24
    %p272 = scmp.eq.s32.totalorder %s271, 0
    %s274 = sadd.s32 %s273, 1
    %s275 = scalar_select %p272, %s273, %s274
    %p278 = pneg %p272
    %p279 = scmp.eq.s32.totalorder %s17, 1
    %p280 = por %p278, %p279
    %p281 = scmp.ne.s32.totalorder %s273, %s276
    %p282 = scmp.eq.s32.totalorder %s17, 0
    %p283 = por %p281, %p282
    %p284 = scmp.ne.s32.totalorder %s273, %s276
    %p285 = scmp.eq.s32.totalorder %s22, 1
    %p286 = por %p284, %p285
    %p287 = scmp.ne.s32.totalorder %s276, %s277
    %p288 = scmp.eq.s32.totalorder %s22, 0
    %p289 = por %p287, %p288
    %p290 = scmp.ne.s32.totalorder %s276, %s277
    %p291 = scmp.eq.s32.totalorder %s23, 1
    %p292 = por %p290, %p291
    %p294 = scmp.ne.s32.totalorder %s277, %s293
    %p295 = scmp.eq.s32.totalorder %s23, 0
    %p296 = por %p294, %p295
    %p297 = scmp.le.s32.totalorder 1, %s17
    %p298 = scmp.lt.s32.totalorder %s17, 3
    %p299 = pnand %p297, %p298
    %p300 = pneg %p299
    // Predicated region
    $region9: #{decoder_forward.7} parent=5 // pred_check
      _
    $region10: #{decoder_forward.7} parent=5 // pred_check_branch
      %302 = sbr.rel (%p299) target = $region12
    $region11: #{decoder_forward.7} parent=5 // pred_region
      %s303 = ssub.s32 %s17, 1
      // Predicated region
      $region13: #{decoder_forward.7} parent=11 // pred_check
        %p304 = pneg %p90
      $region14: #{decoder_forward.7} parent=11 // pred_check_branch
        %306 = sbr.rel (%p304) target = $region16
      $region15: #{decoder_forward.7} parent=11 // pred_region
        _
      $region16: #{decoder_forward.7} parent=11 // pred_fallthru
        _
      // Predicated region
      $region17: #{decoder_forward.7} parent=11 // pred_check
        %p307 = pneg %p111
      $region18: #{decoder_forward.7} parent=11 // pred_check_branch
        %309 = sbr.rel (%p307) target = $region20
      $region19: #{decoder_forward.7} parent=11 // pred_region
        _
      $region20: #{decoder_forward.7} parent=11 // pred_fallthru
        _
      // Predicated region
      $region21: #{decoder_forward.7} parent=11 // pred_check
        %p310 = pneg %p132
      $region22: #{decoder_forward.7} parent=11 // pred_check_branch
        %312 = sbr.rel (%p310) target = $region24
      $region23: #{decoder_forward.7} parent=11 // pred_region
        _
      $region24: #{decoder_forward.7} parent=11 // pred_fallthru
        _
      // Predicated region
      $region25: #{decoder_forward.7} parent=11 // pred_check
        %p313 = pneg %p153
      $region26: #{decoder_forward.7} parent=11 // pred_check_branch
        %315 = sbr.rel (%p313) target = $region28
      $region27: #{decoder_forward.7} parent=11 // pred_region
        _
      $region28: #{decoder_forward.7} parent=11 // pred_fallthru
        _
      // Predicated region
      $region29: #{decoder_forward.7} parent=11 // pred_check
        %p316 = pneg %p174
      $region30: #{decoder_forward.7} parent=11 // pred_check_branch
        %318 = sbr.rel (%p316) target = $region32
      $region31: #{decoder_forward.7} parent=11 // pred_region
        _
      $region32: #{decoder_forward.7} parent=11 // pred_fallthru
        _
      // Predicated region
      $region33: #{decoder_forward.7} parent=11 // pred_check
        %p319 = pneg %p195
      $region34: #{decoder_forward.7} parent=11 // pred_check_branch
        %321 = sbr.rel (%p319) target = $region36
      $region35: #{decoder_forward.7} parent=11 // pred_region
        _
      $region36: #{decoder_forward.7} parent=11 // pred_fallthru
        _
      // Predicated region
      $region37: #{decoder_forward.7} parent=11 // pred_check
        %p322 = pneg %p242
      $region38: #{decoder_forward.7} parent=11 // pred_check_branch
        %324 = sbr.rel (%p322) target = $region40
      $region39: #{decoder_forward.7} parent=11 // pred_region
        _
      $region40: #{decoder_forward.7} parent=11 // pred_fallthru
        _
      // Predicated region
      $region41: #{decoder_forward.7} parent=11 // pred_check
        %p325 = pneg %p263
      $region42: #{decoder_forward.7} parent=11 // pred_check_branch
        %327 = sbr.rel (%p325) target = $region44
      $region43: #{decoder_forward.7} parent=11 // pred_region
        _
      $region44: #{decoder_forward.7} parent=11 // pred_fallthru
        _
    $region12: #{decoder_forward.7} parent=5 // pred_fallthru
      _
    %p328 = scmp.lt.s32.totalorder %s17, 2
    // Predicated region
    $region45: #{decoder_forward.7} parent=5 // pred_check
      %p329 = pneg %p328
    $region46: #{decoder_forward.7} parent=5 // pred_check_branch
      %331 = sbr.rel (%p329) target = $region48
    $region47: #{decoder_forward.7} parent=5 // pred_region
      // Predicated region
      $region49: #{decoder_forward.7} parent=47 // pred_check
        %p332 = pneg %p37
      $region50: #{decoder_forward.7} parent=47 // pred_check_branch
        %334 = sbr.rel (%p332) target = $region52
      $region51: #{decoder_forward.7} parent=47 // pred_region
        %p335 = scmp.lt.s32.totalorder %s17, 1
        %s336 = scalar_select %p335, %s17, 1
        %s337 = smul.addr %s336, 4
        %s338 = scalar_lea.vmem %s0, %s337
      $region52: #{decoder_forward.7} parent=47 // pred_fallthru
        _
      // Predicated region
      $region53: #{decoder_forward.7} parent=47 // pred_check
        %p339 = pneg %p63
      $region54: #{decoder_forward.7} parent=47 // pred_check_branch
        %341 = sbr.rel (%p339) target = $region56
      $region55: #{decoder_forward.7} parent=47 // pred_region
        %p342 = scmp.lt.s32.totalorder %s17, 1
        %s343 = scalar_select %p342, %s17, 1
        %s344 = smul.addr %s343, 8
        %s345 = scalar_lea.vmem %s1, %s344
      $region56: #{decoder_forward.7} parent=47 // pred_fallthru
        _
      // Predicated region
      $region57: #{decoder_forward.7} parent=47 // pred_check
        %p346 = pneg %p215
      $region58: #{decoder_forward.7} parent=47 // pred_check_branch
        %348 = sbr.rel (%p346) target = $region60
      $region59: #{decoder_forward.7} parent=47 // pred_region
        %p349 = scmp.lt.s32.totalorder %s17, 1
        %s350 = scalar_select %p349, %s17, 1
        %s351 = smul.addr %s350, 4
        %s352 = scalar_lea.vmem %s8, %s351
      $region60: #{decoder_forward.7} parent=47 // pred_fallthru
        _
    $region48: #{decoder_forward.7} parent=5 // pred_fallthru
      _
    %p353 = scmp.le.s32.totalorder 1, %s17
    %p354 = scmp.lt.s32.totalorder %s17, 3
    %p355 = pnand %p353, %p354
    %p356 = pneg %p355
    // Predicated region
    $region61: #{decoder_forward.7} parent=5 // pred_check
      _
    $region62: #{decoder_forward.7} parent=5 // pred_check_branch
      %358 = sbr.rel (%p355) target = $region64
    $region63: #{decoder_forward.7} parent=5 // pred_region
      %s359 = ssub.s32 %s17, 1
      %p360 = scmp.lt.s32.totalorder %s22, 1
      %s361 = scalar_select %p360, %s22, 1
      %s362 = smul.addr %s361, 4
      %s363 = scalar_lea.vmem %s0, %s362
      %p364 = pneg %p43
      %p365 = pneg %p40
      %p366 = scmp.lt.s32.totalorder %s22, 1
      %s367 = scalar_select %p366, %s22, 1
      %s368 = smul.addr %s367, 8
      %s369 = scalar_lea.vmem %s1, %s368
      %p370 = pneg %p69
      %p371 = pneg %p66
      %p372 = pneg %p90
      %p373 = pneg %p87
      %p374 = pneg %p111
      %p375 = pneg %p108
      %p376 = pneg %p132
      %p377 = pneg %p129
      %p378 = pneg %p153
      %p379 = pneg %p150
      %p380 = pneg %p174
      %p381 = pneg %p171
      %p382 = pneg %p195
      %p383 = pneg %p192
      %p384 = scmp.lt.s32.totalorder %s22, 1
      %s385 = scalar_select %p384, %s22, 1
      %s386 = smul.addr %s385, 4
      %s387 = scalar_lea.vmem %s8, %s386
      %p388 = pneg %p221
      %p389 = pneg %p218
      %p390 = pneg %p242
      %p391 = pneg %p239
      %p392 = pneg %p263
      %p393 = pneg %p260
      %p394 = pneg %p289
      %p395 = pneg %p286
      %p396 = scmp.lt.s32.totalorder %s22, 1
      %s397 = scalar_select %p396, %s22, 1
      %s398 = smul.addr %s397, 4
      %s399 = scalar_lea.vmem %s11, %s398
      %p400 = scmp.lt.s32.totalorder %s22, 1
      %s401 = scalar_select %p400, %s22, 1
      %s402 = smul.addr %s401, 4
      %s403 = scalar_lea.vmem %s0, %s402
      %p404 = scmp.lt.s32.totalorder %s22, 1
      %s405 = scalar_select %p404, %s22, 1
      %s406 = smul.addr %s405, 8
      %s407 = scalar_lea.vmem %s1, %s406
      %p408 = scmp.lt.s32.totalorder %s22, 1
      %s409 = scalar_select %p408, %s22, 1
      %s410 = smul.addr %s409, 4
      %s411 = scalar_lea.vmem %s8, %s410
      %p412 = scmp.lt.s32.totalorder %s22, 1
      %s413 = scalar_select %p412, %s22, 1
      %s414 = smul.addr %s413, 4
      %s415 = scalar_lea.vmem %s11, %s414
      %v419 = vld [vmem:[%s403] sm:$0xf]
      %v420 = vunpack.c.l.bf16 %v419
      %v421 = vld [vmem:[%s407] sm:$0xff]
      %v422 = vld [vmem:[%s2] sm:$0xf]
      %v423 = vld [vmem:[%s2 + $0x4] sm:$0xf]
      %v424 = vld [vmem:[%s2 + $0x8] sm:$0xf]
      %v425 = vld [vmem:[%s2 + $0xc] sm:$0xf]
      %v426 = vld [vmem:[%s2 + $0x10] sm:$0xf]
      %v427 = vld [vmem:[%s2 + $0x14] sm:$0xf]
      %v428 = vld [vmem:[%s2 + $0x18] sm:$0xf]
      %v429 = vld [vmem:[%s2 + $0x1c] sm:$0xf]
      %v430 = vld [vmem:[%s2 + $0x20] sm:$0xf]
      %v431 = vld [vmem:[%s2 + $0x24] sm:$0xf]
      %v432 = vld [vmem:[%s2 + $0x28] sm:$0xf]
      %v433 = vld [vmem:[%s2 + $0x2c] sm:$0xf]
      %v434 = vld [vmem:[%s2 + $0x30] sm:$0xf]
      %v435 = vld [vmem:[%s2 + $0x34] sm:$0xf]
      %v436 = vld [vmem:[%s2 + $0x38] sm:$0xf]
      %v437 = vld [vmem:[%s2 + $0x3c] sm:$0xf]
      %v438 = vld [vmem:[%s3] sm:$0x1]
      %v440 = vlaneseq
      %v441 = vshrl.u32 %v440, 7
      %v442 = vsub.s32 0, %v441
      %v443 = vrot.slane %v438, %v442
      %v461 = vunpack.c.l.b16 %v422
      %v462 = vunpack.c.l.b16 %v423
      %v463 = vunpack.c.l.b16 %v424
      %v464 = vunpack.c.l.b16 %v425
      %v465 = vunpack.c.l.b16 %v426
      %v466 = vunpack.c.l.b16 %v427
      %v467 = vunpack.c.l.b16 %v428
      %v468 = vunpack.c.l.b16 %v429
      %v469 = vunpack.c.l.b16 %v430
      %v470 = vunpack.c.l.b16 %v431
      %v471 = vunpack.c.l.b16 %v432
      %v472 = vunpack.c.l.b16 %v433
      %v473 = vunpack.c.l.b16 %v434
      %v474 = vunpack.c.l.b16 %v435
      %v475 = vunpack.c.l.b16 %v436
      %v476 = vunpack.c.l.b16 %v437
      %v477 = vpack.c.b16 %v462, %v461
      %v478 = vpack.c.b16 %v464, %v463
      %v479 = vpack.c.b16 %v466, %v465
      %v480 = vpack.c.b16 %v468, %v467
      %v481 = vpack.c.b16 %v470, %v469
      %v482 = vpack.c.b16 %v472, %v471
      %v483 = vpack.c.b16 %v474, %v473
      %v484 = vpack.c.b16 %v476, %v475
      %493 = vmatprep.subr.bf16.mxu0 0
      %494 = vmatpush1.bf16.msra.mxu0 %v477
      %495 = vmatprep.subr.bf16.mxu0 0
      %496 = vmatpush1.bf16.msra.mxu0 %v478
      %497 = vmatprep.subr.bf16.mxu0 0
      %498 = vmatpush1.bf16.msra.mxu0 %v479
      %499 = vmatprep.subr.bf16.mxu0 0
      %500 = vmatpush1.bf16.msra.mxu0 %v480
      %501 = vmatprep.subr.bf16.mxu0 0
      %502 = vmatpush1.bf16.msra.mxu0 %v481
      %503 = vmatprep.subr.bf16.mxu0 0
      %504 = vmatpush1.bf16.msra.mxu0 %v482
      %505 = vmatprep.subr.bf16.mxu0 0
      %506 = vmatpush1.bf16.msra.mxu0 %v483
      %507 = vmatprep.subr.bf16.mxu0 0
      %508 = vmatpush1.bf16.msra.mxu0 %v484
      %509 = vmatprep.subr.bf16.mxu0 0
      %510 = vmatpush1.bf16.msra.mxu0 0
      %511 = vmatprep.subr.bf16.mxu0 0
      %512 = vmatpush1.bf16.msra.mxu0 0
      %513 = vmatprep.subr.bf16.mxu0 0
      %514 = vmatpush1.bf16.msra.mxu0 0
      %515 = vmatprep.subr.bf16.mxu0 0
      %516 = vmatpush1.bf16.msra.mxu0 0
      %517 = vmatprep.subr.bf16.mxu0 0
      %518 = vmatpush1.bf16.msra.mxu0 0
      %519 = vmatprep.subr.bf16.mxu0 0
      %520 = vmatpush1.bf16.msra.mxu0 0
      %521 = vmatprep.subr.bf16.mxu0 0
      %522 = vmatpush1.bf16.msra.mxu0 0
      %523 = vmatprep.subr.bf16.mxu0 0
      %524 = vmatpush1.bf16.msra.mxu0 0
      %525 = vmatprep.mubr.bf16.mxu0 0
      %526 = vmatmul.mubr.bf16.gmra.mrb[0].mxu0 %v419
      %v527 = vpop.f32.mrb[0].mxu0
      %v528 = vadd.f32 %v443, %v527
      %v529 = vpop.f32.mrb[0].mxu0
      %v530 = vpop.f32.mrb[0].mxu0
      %v531 = vpop.f32.mrb[0].mxu0
      %532 = vdwg.mxu0
      %v533 = vpack.c.bf16 %v421, %v421
      %v534 = vld [vmem:[%s4] sm:$0xff]
      %v535 = vld [vmem:[%s4 + $0x8] sm:$0xff]
      %v536 = vld [vmem:[%s4 + $0x10] sm:$0xff]
      %v537 = vld [vmem:[%s4 + $0x18] sm:$0xff]
      %v538 = vld [vmem:[%s4 + $0x20] sm:$0xff]
      %v539 = vld [vmem:[%s4 + $0x28] sm:$0xff]
      %v540 = vld [vmem:[%s4 + $0x30] sm:$0xff]
      %v541 = vld [vmem:[%s4 + $0x38] sm:$0xff]
      %v542 = vld [vmem:[%s4 + $0x40] sm:$0xff]
      %v543 = vld [vmem:[%s4 + $0x48] sm:$0xff]
      %v544 = vld [vmem:[%s4 + $0x50] sm:$0xff]
      %v545 = vld [vmem:[%s4 + $0x58] sm:$0xff]
      %v546 = vld [vmem:[%s4 + $0x60] sm:$0xff]
      %v547 = vld [vmem:[%s4 + $0x68] sm:$0xff]
      %v548 = vld [vmem:[%s4 + $0x70] sm:$0xff]
      %v549 = vld [vmem:[%s4 + $0x78] sm:$0xff]
      %v550 = vld [vmem:[%s5] sm:$0x3]
      %v552 = vlaneseq
      %v553 = vshrl.u32 %v552, 7
      %v554 = vsub.s32 0, %v553
      %v555 = vrot.slane %v550, %v554
      %v556 = vlaneseq
      %v557 = vshrl.u32 %v556, 7
      %v558 = vsub.s32 1, %v557
      %v559 = vrot.slane %v550, %v558
      %v578 = vunpack.c.l.b16 %v534
      %v579 = vunpack.c.h.b16 %v534
      %v580 = vunpack.c.l.b16 %v535
      %v581 = vunpack.c.h.b16 %v535
      %v582 = vunpack.c.l.b16 %v536
      %v583 = vunpack.c.h.b16 %v536
      %v584 = vunpack.c.l.b16 %v537
      %v585 = vunpack.c.h.b16 %v537
      %v586 = vunpack.c.l.b16 %v538
      %v587 = vunpack.c.h.b16 %v538
      %v588 = vunpack.c.l.b16 %v539
      %v589 = vunpack.c.h.b16 %v539
      %v590 = vunpack.c.l.b16 %v540
      %v591 = vunpack.c.h.b16 %v540
      %v592 = vunpack.c.l.b16 %v541
      %v593 = vunpack.c.h.b16 %v541
      %v594 = vunpack.c.l.b16 %v542
      %v595 = vunpack.c.h.b16 %v542
      %v596 = vunpack.c.l.b16 %v543
      %v597 = vunpack.c.h.b16 %v543
      %v598 = vunpack.c.l.b16 %v544
      %v599 = vunpack.c.h.b16 %v544
      %v600 = vunpack.c.l.b16 %v545
      %v601 = vunpack.c.h.b16 %v545
      %v602 = vunpack.c.l.b16 %v546
      %v603 = vunpack.c.h.b16 %v546
      %v604 = vunpack.c.l.b16 %v547
      %v605 = vunpack.c.h.b16 %v547
      %v606 = vunpack.c.l.b16 %v548
      %v607 = vunpack.c.h.b16 %v548
      %v608 = vunpack.c.l.b16 %v549
      %v609 = vunpack.c.h.b16 %v549
      %v610 = vpack.c.b16 %v580, %v578
      %v611 = vpack.c.b16 %v581, %v579
      %v612 = vpack.c.b16 %v584, %v582
      %v613 = vpack.c.b16 %v585, %v583
      %v614 = vpack.c.b16 %v588, %v586
      %v615 = vpack.c.b16 %v589, %v587
      %v616 = vpack.c.b16 %v592, %v590
      %v617 = vpack.c.b16 %v593, %v591
      %v618 = vpack.c.b16 %v596, %v594
      %v619 = vpack.c.b16 %v597, %v595
      %v620 = vpack.c.b16 %v600, %v598
      %v621 = vpack.c.b16 %v601, %v599
      %v622 = vpack.c.b16 %v604, %v602
      %v623 = vpack.c.b16 %v605, %v603
      %v624 = vpack.c.b16 %v608, %v606
      %v625 = vpack.c.b16 %v609, %v607
      %642 = vmatprep.subr.bf16.mxu0 %v611
      %643 = vmatpush1.bf16.msra.mxu0 %v610
      %644 = vmatprep.subr.bf16.mxu0 %v613
      %645 = vmatpush1.bf16.msra.mxu0 %v612
      %646 = vmatprep.subr.bf16.mxu0 %v615
      %647 = vmatpush1.bf16.msra.mxu0 %v614
      %648 = vmatprep.subr.bf16.mxu0 %v617
      %649 = vmatpush1.bf16.msra.mxu0 %v616
      %650 = vmatprep.subr.bf16.mxu0 %v619
      %651 = vmatpush1.bf16.msra.mxu0 %v618
      %652 = vmatprep.subr.bf16.mxu0 %v621
      %653 = vmatpush1.bf16.msra.mxu0 %v620
      %654 = vmatprep.subr.bf16.mxu0 %v623
      %655 = vmatpush1.bf16.msra.mxu0 %v622
      %656 = vmatprep.subr.bf16.mxu0 %v625
      %657 = vmatpush1.bf16.msra.mxu0 %v624
      %658 = vmatprep.subr.bf16.mxu0 0
      %659 = vmatpush1.bf16.msra.mxu0 0
      %660 = vmatprep.subr.bf16.mxu0 0
      %661 = vmatpush1.bf16.msra.mxu0 0
      %662 = vmatprep.subr.bf16.mxu0 0
      %663 = vmatpush1.bf16.msra.mxu0 0
      %664 = vmatprep.subr.bf16.mxu0 0
      %665 = vmatpush1.bf16.msra.mxu0 0
      %666 = vmatprep.subr.bf16.mxu0 0
      %667 = vmatpush1.bf16.msra.mxu0 0
      %668 = vmatprep.subr.bf16.mxu0 0
      %669 = vmatpush1.bf16.msra.mxu0 0
      %670 = vmatprep.subr.bf16.mxu0 0
      %671 = vmatpush1.bf16.msra.mxu0 0
      %672 = vmatprep.subr.bf16.mxu0 0
      %673 = vmatpush1.bf16.msra.mxu0 0
      %674 = vmatprep.mubr.bf16.mxu0 0
      %675 = vmatmul.mubr.bf16.gmra.mrb[0].mxu0 %v533
      %v676 = vpop.f32.mrb[0].mxu0
      %v677 = vadd.f32 %v555, %v676
      %v678 = vpop.f32.mrb[0].mxu0
      %v679 = vadd.f32 %v559, %v678
      %v680 = vpop.f32.mrb[0].mxu0
      %v681 = vpop.f32.mrb[0].mxu0
      %682 = vdwg.mxu0
      %v683 = vld [vmem:[%s411] sm:$0xf]
      %v684 = vld [vmem:[%s6] sm:$0xf]
      %v685 = vld [vmem:[%s6 + $0x4] sm:$0xf]
      %v686 = vld [vmem:[%s6 + $0x8] sm:$0xf]
      %v687 = vld [vmem:[%s6 + $0xc] sm:$0xf]
      %v688 = vld [vmem:[%s6 + $0x10] sm:$0xf]
      %v689 = vld [vmem:[%s6 + $0x14] sm:$0xf]
      %v690 = vld [vmem:[%s6 + $0x18] sm:$0xf]
      %v691 = vld [vmem:[%s6 + $0x1c] sm:$0xf]
      %v692 = vld [vmem:[%s6 + $0x20] sm:$0xf]
      %v693 = vld [vmem:[%s6 + $0x24] sm:$0xf]
      %v694 = vld [vmem:[%s6 + $0x28] sm:$0xf]
      %v695 = vld [vmem:[%s6 + $0x2c] sm:$0xf]
      %v696 = vld [vmem:[%s6 + $0x30] sm:$0xf]
      %v697 = vld [vmem:[%s6 + $0x34] sm:$0xf]
      %v698 = vld [vmem:[%s6 + $0x38] sm:$0xf]
      %v699 = vld [vmem:[%s6 + $0x3c] sm:$0xf]
      %v700 = vld [vmem:[%s7] sm:$0x1]
      %v701 = vld [vmem:[%s9] sm:$0x1]
      %v702 = vld [vmem:[%s10] sm:$0x1]
      %v703 = vmul.f32 %v528, 0.125
      %v704 = vpack.c.bf16 %v703, %v703
      %v705 = vpack.c.bf16 %v677, %v677
      %v706 = vpack.c.bf16 %v679, %v679
      %vm707 = vcmask 523264
      %v709 = vsel %vm707, %v704, 0
      %v712 = vsel %vm707, %v705, 0
      %714 = vmatprep.subr.bf16.mxu0 0
      %715 = vmatpush1.bf16.xpose.msra.mxu0 %v712
      %716 = vmatprep.subr.bf16.mxu0 0
      %717 = vmatpush1.bf16.xpose.msra.mxu0 0
      %718 = vmatprep.subr.bf16.mxu0 0
      %719 = vmatpush1.bf16.xpose.msra.mxu0 0
      %720 = vmatprep.subr.bf16.mxu0 0
      %721 = vmatpush1.bf16.xpose.msra.mxu0 0
      %722 = vmatprep.subr.bf16.mxu0 0
      %723 = vmatpush1.bf16.xpose.msra.mxu0 0
      %724 = vmatprep.subr.bf16.mxu0 0
      %725 = vmatpush1.bf16.xpose.msra.mxu0 0
      %726 = vmatprep.subr.bf16.mxu0 0
      %727 = vmatpush1.bf16.xpose.msra.mxu0 0
      %728 = vmatprep.subr.bf16.mxu0 0
      %729 = vmatpush1.bf16.xpose.msra.mxu0 0
      %730 = vmatprep.subr.bf16.mxu0 0
      %731 = vmatpush1.bf16.xpose.msra.mxu0 0
      %732 = vmatprep.subr.bf16.mxu0 0
      %733 = vmatpush1.bf16.xpose.msra.mxu0 0
      %734 = vmatprep.subr.bf16.mxu0 0
      %735 = vmatpush1.bf16.xpose.msra.mxu0 0
      %736 = vmatprep.subr.bf16.mxu0 0
      %737 = vmatpush1.bf16.xpose.msra.mxu0 0
      %738 = vmatprep.subr.bf16.mxu0 0
      %739 = vmatpush1.bf16.xpose.msra.mxu0 0
      %740 = vmatprep.subr.bf16.mxu0 0
      %741 = vmatpush1.bf16.xpose.msra.mxu0 0
      %742 = vmatprep.subr.bf16.mxu0 0
      %743 = vmatpush1.bf16.xpose.msra.mxu0 0
      %744 = vmatprep.subr.bf16.mxu0 0
      %745 = vmatpush1.bf16.xpose.msra.mxu0 0
      %746 = vmatprep.mubr.bf16.mxu0 0
      %747 = vmatmul.mubr.bf16.gmra.mrb[0].mxu0 %v709
      %v748 = vpop.f32.mrb[0].mxu0
      %v749 = vadd.f32 0.0, %v748
      %v750 = vpop.f32.mrb[0].mxu0
      %v751 = vpop.f32.mrb[0].mxu0
      %v752 = vpop.f32.mrb[0].mxu0
      %753 = vdwg.mxu0
      %vm754 = vcmp.eq.bf16.partialorder %v683, 0
      %v755 = vsel %vm754, 65537, 0
      %v756 = vunpack.c.l.b16 %v755
      %vm757 = vcmp.ne.s32.totalorder %v756, 0
      %v758 = vsel %vm757, -1e+09, %v749
      %vm759 = vcmask 64512
      %v760 = vsel %vm759, %v758, -inf
      %761 = vmax.xlane.f32.xlu0 %v760
      %v762 = vpop.xlane.xlu0 %761
      %v763 = vsub.f32 %v758, %v762
      %v764 = vmul.f32 %v763, 1.442695
      %v765 = vpow.pop %v764
      %v766 = vsel %vm759, %v765, 0.0
      %767 = vadd.xlane.f32.xlu0 %v766
      %v768 = vpop.xlane.xlu0 %767
      %v769 = vrcp.pop %v768
      %v770 = vmul.f32 %v765, %v769
      %v771 = vpack.c.bf16 %v770, %v770
      %v773 = vsel %vm759, %v771, 0
      %vm775 = vcmask 1043456
      %v777 = vsel %vm775, %v706, 0
      %779 = vmatprep.subr.bf16.mxu0 0
      %780 = vmatpush1.bf16.msra.mxu0 %v777
      %781 = vmatprep.subr.bf16.mxu0 0
      %782 = vmatpush1.bf16.msra.mxu0 0
      %783 = vmatprep.subr.bf16.mxu0 0
      %784 = vmatpush1.bf16.msra.mxu0 0
      %785 = vmatprep.subr.bf16.mxu0 0
      %786 = vmatpush1.bf16.msra.mxu0 0
      %787 = vmatprep.subr.bf16.mxu0 0
      %788 = vmatpush1.bf16.msra.mxu0 0
      %789 = vmatprep.subr.bf16.mxu0 0
      %790 = vmatpush1.bf16.msra.mxu0 0
      %791 = vmatprep.subr.bf16.mxu0 0
      %792 = vmatpush1.bf16.msra.mxu0 0
      %793 = vmatprep.subr.bf16.mxu0 0
      %794 = vmatpush1.bf16.msra.mxu0 0
      %795 = vmatprep.subr.bf16.mxu0 0
      %796 = vmatpush1.bf16.msra.mxu0 0
      %797 = vmatprep.subr.bf16.mxu0 0
      %798 = vmatpush1.bf16.msra.mxu0 0
      %799 = vmatprep.subr.bf16.mxu0 0
      %800 = vmatpush1.bf16.msra.mxu0 0
      %801 = vmatprep.subr.bf16.mxu0 0
      %802 = vmatpush1.bf16.msra.mxu0 0
      %803 = vmatprep.subr.bf16.mxu0 0
      %804 = vmatpush1.bf16.msra.mxu0 0
      %805 = vmatprep.subr.bf16.mxu0 0
      %806 = vmatpush1.bf16.msra.mxu0 0
      %807 = vmatprep.subr.bf16.mxu0 0
      %808 = vmatpush1.bf16.msra.mxu0 0
      %809 = vmatprep.subr.bf16.mxu0 0
      %810 = vmatpush1.bf16.msra.mxu0 0
      %811 = vmatprep.mubr.bf16.mxu0 0
      %812 = vmatmul.mubr.bf16.gmra.mrb[0].mxu0 %v773
      %v813 = vpop.f32.mrb[0].mxu0
      %v814 = vadd.f32 0.0, %v813
      %v815 = vpop.f32.mrb[0].mxu0
      %v816 = vpop.f32.mrb[0].mxu0
      %v817 = vpop.f32.mrb[0].mxu0
      %818 = vdwg.mxu0
      %820 = vrot.lane.b32.xlu0 %v704, 64
      %v821 = vpop.permute.xlu0 %820
      %823 = vrot.lane.b32.xlu0 %v705, 64
      %v824 = vpop.permute.xlu0 %823
      %v826 = vsel %vm707, %v821, 0
      %v829 = vsel %vm707, %v824, 0
      %831 = vmatprep.subr.bf16.mxu0 0
      %832 = vmatpush1.bf16.xpose.msra.mxu0 %v829
      %833 = vmatprep.subr.bf16.mxu0 0
      %834 = vmatpush1.bf16.xpose.msra.mxu0 0
      %835 = vmatprep.subr.bf16.mxu0 0
      %836 = vmatpush1.bf16.xpose.msra.mxu0 0
      %837 = vmatprep.subr.bf16.mxu0 0
      %838 = vmatpush1.bf16.xpose.msra.mxu0 0
      %839 = vmatprep.subr.bf16.mxu0 0
      %840 = vmatpush1.bf16.xpose.msra.mxu0 0
      %841 = vmatprep.subr.bf16.mxu0 0
      %842 = vmatpush1.bf16.xpose.msra.mxu0 0
      %843 = vmatprep.subr.bf16.mxu0 0
      %844 = vmatpush1.bf16.xpose.msra.mxu0 0
      %845 = vmatprep.subr.bf16.mxu0 0
      %846 = vmatpush1.bf16.xpose.msra.mxu0 0
      %847 = vmatprep.subr.bf16.mxu0 0
      %848 = vmatpush1.bf16.xpose.msra.mxu0 0
      %849 = vmatprep.subr.bf16.mxu0 0
      %850 = vmatpush1.bf16.xpose.msra.mxu0 0
      %851 = vmatprep.subr.bf16.mxu0 0
      %852 = vmatpush1.bf16.xpose.msra.mxu0 0
      %853 = vmatprep.subr.bf16.mxu0 0
      %854 = vmatpush1.bf16.xpose.msra.mxu0 0
      %855 = vmatprep.subr.bf16.mxu0 0
      %856 = vmatpush1.bf16.xpose.msra.mxu0 0
      %857 = vmatprep.subr.bf16.mxu0 0
      %858 = vmatpush1.bf16.xpose.msra.mxu0 0
      %859 = vmatprep.subr.bf16.mxu0 0
      %860 = vmatpush1.bf16.xpose.msra.mxu0 0
      %861 = vmatprep.subr.bf16.mxu0 0
      %862 = vmatpush1.bf16.xpose.msra.mxu0 0
      %863 = vmatprep.mubr.bf16.mxu0 0
      %864 = vmatmul.mubr.bf16.gmra.mrb[0].mxu0 %v826
      %v865 = vpop.f32.mrb[0].mxu0
      %v866 = vadd.f32 0.0, %v865
      %v867 = vpop.f32.mrb[0].mxu0
      %v868 = vpop.f32.mrb[0].mxu0
      %v869 = vpop.f32.mrb[0].mxu0
      %870 = vdwg.mxu0
      %v871 = vsel %vm757, -1e+09, %v866
      %v872 = vsel %vm759, %v871, -inf
      %873 = vmax.xlane.f32.xlu0 %v872
      %v874 = vpop.xlane.xlu0 %873
      %v875 = vsub.f32 %v871, %v874
      %v876 = vmul.f32 %v875, 1.442695
      %v877 = vpow.pop %v876
      %v878 = vsel %vm759, %v877, 0.0
      %879 = vadd.xlane.f32.xlu0 %v878
      %v880 = vpop.xlane.xlu0 %879
      %v881 = vrcp.pop %v880
      %v882 = vmul.f32 %v877, %v881
      %v883 = vpack.c.bf16 %v882, %v882
      %885 = vrot.lane.b32.xlu0 %v706, 64
      %v886 = vpop.permute.xlu0 %885
      %v888 = vsel %vm759, %v883, 0
      %v891 = vsel %vm775, %v886, 0
      %893 = vmatprep.subr.bf16.mxu0 0
      %894 = vmatpush1.bf16.msra.mxu0 %v891
      %895 = vmatprep.subr.bf16.mxu0 0
      %896 = vmatpush1.bf16.msra.mxu0 0
      %897 = vmatprep.subr.bf16.mxu0 0
      %898 = vmatpush1.bf16.msra.mxu0 0
      %899 = vmatprep.subr.bf16.mxu0 0
      %900 = vmatpush1.bf16.msra.mxu0 0
      %901 = vmatprep.subr.bf16.mxu0 0
      %902 = vmatpush1.bf16.msra.mxu0 0
      %903 = vmatprep.subr.bf16.mxu0 0
      %904 = vmatpush1.bf16.msra.mxu0 0
      %905 = vmatprep.subr.bf16.mxu0 0
      %906 = vmatpush1.bf16.msra.mxu0 0
      %907 = vmatprep.subr.bf16.mxu0 0
      %908 = vmatpush1.bf16.msra.mxu0 0
      %909 = vmatprep.subr.bf16.mxu0 0
      %910 = vmatpush1.bf16.msra.mxu0 0
      %911 = vmatprep.subr.bf16.mxu0 0
      %912 = vmatpush1.bf16.msra.mxu0 0
      %913 = vmatprep.subr.bf16.mxu0 0
      %914 = vmatpush1.bf16.msra.mxu0 0
      %915 = vmatprep.subr.bf16.mxu0 0
      %916 = vmatpush1.bf16.msra.mxu0 0
      %917 = vmatprep.subr.bf16.mxu0 0
      %918 = vmatpush1.bf16.msra.mxu0 0
      %919 = vmatprep.subr.bf16.mxu0 0
      %920 = vmatpush1.bf16.msra.mxu0 0
      %921 = vmatprep.subr.bf16.mxu0 0
      %922 = vmatpush1.bf16.msra.mxu0 0
      %923 = vmatprep.subr.bf16.mxu0 0
      %924 = vmatpush1.bf16.msra.mxu0 0
      %925 = vmatprep.mubr.bf16.mxu0 0
      %926 = vmatmul.mubr.bf16.gmra.mrb[0].mxu0 %v888
      %v927 = vpop.f32.mrb[0].mxu0
      %v928 = vadd.f32 0.0, %v927
      %v929 = vpop.f32.mrb[0].mxu0
      %v930 = vpop.f32.mrb[0].mxu0
      %v931 = vpop.f32.mrb[0].mxu0
      %932 = vdwg.mxu0
      %934 = vrot.lane.b32.xlu0 %v928, 64
      %v935 = vpop.permute.xlu0 %934
      %v937 = vsel %vm707, %v814, %v935
      %v938 = vpack.c.bf16 %v937, %v937
      %v940 = vlaneseq
      %v941 = vshrl.u32 %v940, 7
      %v942 = vsub.s32 0, %v941
      %v943 = vrot.slane %v700, %v942
      %v961 = vunpack.c.l.b16 %v684
      %v962 = vunpack.c.l.b16 %v685
      %v963 = vunpack.c.l.b16 %v686
      %v964 = vunpack.c.l.b16 %v687
      %v965 = vunpack.c.l.b16 %v688
      %v966 = vunpack.c.l.b16 %v689
      %v967 = vunpack.c.l.b16 %v690
      %v968 = vunpack.c.l.b16 %v691
      %v969 = vunpack.c.l.b16 %v692
      %v970 = vunpack.c.l.b16 %v693
      %v971 = vunpack.c.l.b16 %v694
      %v972 = vunpack.c.l.b16 %v695
      %v973 = vunpack.c.l.b16 %v696
      %v974 = vunpack.c.l.b16 %v697
      %v975 = vunpack.c.l.b16 %v698
      %v976 = vunpack.c.l.b16 %v699
      %v977 = vpack.c.b16 %v962, %v961
      %v978 = vpack.c.b16 %v964, %v963
      %v979 = vpack.c.b16 %v966, %v965
      %v980 = vpack.c.b16 %v968, %v967
      %v981 = vpack.c.b16 %v970, %v969
      %v982 = vpack.c.b16 %v972, %v971
      %v983 = vpack.c.b16 %v974, %v973
      %v984 = vpack.c.b16 %v976, %v975
      %993 = vmatprep.subr.bf16.mxu0 0
      %994 = vmatpush1.bf16.msra.mxu0 %v977
      %995 = vmatprep.subr.bf16.mxu0 0
      %996 = vmatpush1.bf16.msra.mxu0 %v978
      %997 = vmatprep.subr.bf16.mxu0 0
      %998 = vmatpush1.bf16.msra.mxu0 %v979
      %999 = vmatprep.subr.bf16.mxu0 0
      %1000 = vmatpush1.bf16.msra.mxu0 %v980
      %1001 = vmatprep.subr.bf16.mxu0 0
      %1002 = vmatpush1.bf16.msra.mxu0 %v981
      %1003 = vmatprep.subr.bf16.mxu0 0
      %1004 = vmatpush1.bf16.msra.mxu0 %v982
      %1005 = vmatprep.subr.bf16.mxu0 0
      %1006 = vmatpush1.bf16.msra.mxu0 %v983
      %1007 = vmatprep.subr.bf16.mxu0 0
      %1008 = vmatpush1.bf16.msra.mxu0 %v984
      %1009 = vmatprep.subr.bf16.mxu0 0
      %1010 = vmatpush1.bf16.msra.mxu0 0
      %1011 = vmatprep.subr.bf16.mxu0 0
      %1012 = vmatpush1.bf16.msra.mxu0 0
      %1013 = vmatprep.subr.bf16.mxu0 0
      %1014 = vmatpush1.bf16.msra.mxu0 0
      %1015 = vmatprep.subr.bf16.mxu0 0
      %1016 = vmatpush1.bf16.msra.mxu0 0
      %1017 = vmatprep.subr.bf16.mxu0 0
      %1018 = vmatpush1.bf16.msra.mxu0 0
      %1019 = vmatprep.subr.bf16.mxu0 0
      %1020 = vmatpush1.bf16.msra.mxu0 0
      %1021 = vmatprep.subr.bf16.mxu0 0
      %1022 = vmatpush1.bf16.msra.mxu0 0
      %1023 = vmatprep.subr.bf16.mxu0 0
      %1024 = vmatpush1.bf16.msra.mxu0 0
      %1025 = vmatprep.mubr.bf16.mxu0 0
      %1026 = vmatmul.mubr.bf16.gmra.mrb[0].mxu0 %v938
      %v1027 = vpop.f32.mrb[0].mxu0
      %v1028 = vadd.f32 %v943, %v1027
      %v1029 = vpop.f32.mrb[0].mxu0
      %v1030 = vpop.f32.mrb[0].mxu0
      %v1031 = vpop.f32.mrb[0].mxu0
      %1032 = vdwg.mxu0
      %v1033 = vadd.f32 %v1028, %v420
      %1034 = vadd.xlane.f32.xlu0 %v1033
      %v1035 = vpop.xlane.xlu0 %1034
      %v1036 = vrcp.pop 128.0
      %v1037 = vmul.f32 %v1035, %v1036
      %v1038 = vsub.f32 %v1033, %v1037
      %v1039 = vmul.f32 %v1038, %v1038
      %1040 = vadd.xlane.f32.xlu0 %v1039
      %v1041 = vpop.xlane.xlu0 %1040
      %v1042 = vmul.f32 %v1041, %v1036
      %v1043 = vadd.f32 %v1042, 1e-06
      %v1044 = vrsqrt.pop %v1043
      %v1045 = vmul.f32 %v1038, %v1044
      %v1047 = vlaneseq
      %v1048 = vshrl.u32 %v1047, 7
      %v1049 = vsub.s32 0, %v1048
      %v1050 = vrot.slane %v701, %v1049
      %v1052 = vmul.f32 %v1045, %v1050
      %v1054 = vlaneseq
      %v1055 = vshrl.u32 %v1054, 7
      %v1056 = vsub.s32 0, %v1055
      %v1057 = vrot.slane %v702, %v1056
      %v1059 = vadd.f32 %v1052, %v1057
      %v1060 = vpack.c.bf16 %v1059, %v1059
      %1061 = vst [vmem:[%s415] sm:$0xf] %v1060
      %p1062 = scmp.lt.s32.totalorder %s22, 1
      %s1063 = scalar_select %p1062, %s22, 1
      %s1064 = smul.addr %s1063, 4
      %s1065 = scalar_lea.vmem %s11, %s1064
      // Predicated region
      $region65: #{decoder_forward.7} parent=63 // pred_check
        %p1066 = pneg %p286
      $region66: #{decoder_forward.7} parent=63 // pred_check_branch
        %1068 = sbr.rel (%p1066) target = $region68
      $region67: #{decoder_forward.7} parent=63 // pred_region
        _
      $region68: #{decoder_forward.7} parent=63 // pred_fallthru
        _
    $region64: #{decoder_forward.7} parent=5 // pred_fallthru
      _
    %p1069 = scmp.le.s32.totalorder 2, %s17
    // Predicated region
    $region69: #{decoder_forward.7} parent=5 // pred_check
      %p1070 = pneg %p1069
    $region70: #{decoder_forward.7} parent=5 // pred_check_branch
      %1072 = sbr.rel (%p1070) target = $region72
    $region71: #{decoder_forward.7} parent=5 // pred_region
      %s1073 = ssub.s32 %s17, 2
      // Predicated region
      $region73: #{decoder_forward.7} parent=71 // pred_check
        %p1074 = pneg %p292
      $region74: #{decoder_forward.7} parent=71 // pred_check_branch
        %1076 = sbr.rel (%p1074) target = $region76
      $region75: #{decoder_forward.7} parent=71 // pred_region
        %p1077 = scmp.lt.s32.totalorder %s23, 1
        %s1078 = scalar_select %p1077, %s23, 1
        %s1079 = smul.addr %s1078, 4
        %s1080 = scalar_lea.vmem %s11, %s1079
      $region76: #{decoder_forward.7} parent=71 // pred_fallthru
        _
    $region72: #{decoder_forward.7} parent=5 // pred_fallthru
      _
  $region6: #{decoder_forward.7} parent=0 // loop_footer
    %s21 = sadd.s32 1, %s17
  $region7: #{decoder_forward.7} parent=0 // loop_footer_branch
    %16 = sbr.rel target = $region3
  $region8: #{decoder_forward.7} parent=0 // loop_exit
    _

// kernel: decoder_forward.6
$region0: #{decoder_forward.6}
  #allocation0 [shape = 'u32[]', space=smem, size = 0x4, offset = 0x4, fixed_abs, tag = 'smem constant byte address 0x4 - core index']
  #allocation1 [shape = 'u32[144,128]{1,0:T(1,128)}', space=vmem, size = 0x12000, scoped, tag = 'internal scratch']
  %s0 = inlined_call_operand.vmem [shape: f32[2,8,128], index: 0, kind: input, shape index: {}]
  %s1 = inlined_call_operand.vmem [shape: bf16[128,384], index: 1, kind: input, shape index: {}]
  %s2 = inlined_call_operand.vmem [shape: f32[1,384], index: 2, kind: input, shape index: {}]
  %s3 = inlined_call_operand.vmem [shape: bf16[128,128], index: 3, kind: input, shape index: {}]
  %s4 = inlined_call_operand.vmem [shape: f32[1,128], index: 4, kind: input, shape index: {}]
  %s5 = inlined_call_operand.vmem [shape: f32[1,128], index: 5, kind: input, shape index: {}]
  %s6 = inlined_call_operand.vmem [shape: f32[1,128], index: 6, kind: input, shape index: {}]
  %s7 = inlined_call_operand.vmem [shape: bf16[2,8,128], index: 7, kind: output, shape index: {}]
  %s8 = sld [smem:[#allocation0]]
  $region61: #{decoder_forward.6} parent=0
    _
  %s10 = ssub.s32 1, %s8
  %s11 = scalar_select 0, %s10, %s8
  loop: start=0, step=1, limit=4
  $region2: #{decoder_forward.6} parent=0 // loop_pre_header
    _
  $region3: #{decoder_forward.6} parent=0 // loop_header
    %s13 = sphi 0, %s17
    %p14 = scmp.ge.s32.totalorder %s13, 4
    %s23 = sphi 0, %s25
    %s26 = sphi 0, %s23
    %s27 = sphi 0, %s26
    %s43 = sphi 0, %s27
    %s47 = sphi 0, %s47
    %s49 = sphi 0, %s47
    %s50 = sphi 0, %s49
    %s64 = sphi 0, %s50
    %s68 = sphi 0, %s68
    %s70 = sphi 0, %s68
    %s71 = sphi 0, %s70
    %s85 = sphi 0, %s71
    %s89 = sphi 0, %s89
    %s91 = sphi 0, %s89
    %s92 = sphi 0, %s91
    %s106 = sphi 0, %s92
    %s110 = sphi 0, %s110
    %s112 = sphi 0, %s110
    %s113 = sphi 0, %s112
    %s127 = sphi 0, %s113
    %s131 = sphi 0, %s131
    %s133 = sphi 0, %s131
    %s134 = sphi 0, %s133
    %s148 = sphi 0, %s134
    %s152 = sphi 0, %s152
    %s154 = sphi 0, %s152
    %s155 = sphi 0, %s154
    %s169 = sphi 0, %s155
    %s175 = sphi 0, %s177
    %s178 = sphi 0, %s175
    %s179 = sphi 0, %s178
    %s195 = sphi 0, %s179
  $region4: #{decoder_forward.6} parent=0 // loop_header_branch
    %16 = sbr.rel (%p14) target = $region8
  $region5: #{decoder_forward.6} parent=0 // loop_body
    %s18 = ssub.s32 %s13, 1
    %s19 = ssub.s32 %s13, 2
    %s20 = sadd.s32 %s13, 1
    %s21 = ssub.s32 %s13, %s20
    %p22 = scmp.eq.s32.totalorder %s21, 0
    %s24 = sadd.s32 %s23, 1
    %s25 = scalar_select %p22, %s23, %s24
    %p28 = pneg %p22
    %p29 = scmp.eq.s32.totalorder %s13, 1
    %p30 = por %p28, %p29
    %p31 = scmp.ne.s32.totalorder %s23, %s26
    %p32 = scmp.eq.s32.totalorder %s13, 0
    %p33 = por %p31, %p32
    %p34 = scmp.ne.s32.totalorder %s23, %s26
    %p35 = scmp.eq.s32.totalorder %s18, 1
    %p36 = por %p34, %p35
    %p37 = scmp.ne.s32.totalorder %s26, %s27
    %p38 = scmp.eq.s32.totalorder %s18, 0
    %p39 = por %p37, %p38
    %p40 = scmp.ne.s32.totalorder %s26, %s27
    %p41 = scmp.eq.s32.totalorder %s19, 1
    %p42 = por %p40, %p41
    %p44 = scmp.ne.s32.totalorder %s27, %s43
    %p45 = scmp.eq.s32.totalorder %s19, 0
    %p46 = por %p44, %p45
    %s48 = sadd.s32 %s47, 1
    %p51 = scmp.eq.s32.totalorder %s13, 1
    %p52 = scmp.ne.s32.totalorder %s47, %s49
    %p53 = scmp.eq.s32.totalorder %s13, 0
    %p54 = por %p52, %p53
    %p55 = scmp.ne.s32.totalorder %s47, %s49
    %p56 = scmp.eq.s32.totalorder %s18, 1
    %p57 = por %p55, %p56
    %p58 = scmp.ne.s32.totalorder %s49, %s50
    %p59 = scmp.eq.s32.totalorder %s18, 0
    %p60 = por %p58, %p59
    %p61 = scmp.ne.s32.totalorder %s49, %s50
    %p62 = scmp.eq.s32.totalorder %s19, 1
    %p63 = por %p61, %p62
    %p65 = scmp.ne.s32.totalorder %s50, %s64
    %p66 = scmp.eq.s32.totalorder %s19, 0
    %p67 = por %p65, %p66
    %s69 = sadd.s32 %s68, 1
    %p72 = scmp.eq.s32.totalorder %s13, 1
    %p73 = scmp.ne.s32.totalorder %s68, %s70
    %p74 = scmp.eq.s32.totalorder %s13, 0
    %p75 = por %p73, %p74
    %p76 = scmp.ne.s32.totalorder %s68, %s70
    %p77 = scmp.eq.s32.totalorder %s18, 1
    %p78 = por %p76, %p77
    %p79 = scmp.ne.s32.totalorder %s70, %s71
    %p80 = scmp.eq.s32.totalorder %s18, 0
    %p81 = por %p79, %p80
    %p82 = scmp.ne.s32.totalorder %s70, %s71
    %p83 = scmp.eq.s32.totalorder %s19, 1
    %p84 = por %p82, %p83
    %p86 = scmp.ne.s32.totalorder %s71, %s85
    %p87 = scmp.eq.s32.totalorder %s19, 0
    %p88 = por %p86, %p87
    %s90 = sadd.s32 %s89, 1
    %p93 = scmp.eq.s32.totalorder %s13, 1
    %p94 = scmp.ne.s32.totalorder %s89, %s91
    %p95 = scmp.eq.s32.totalorder %s13, 0
    %p96 = por %p94, %p95
    %p97 = scmp.ne.s32.totalorder %s89, %s91
    %p98 = scmp.eq.s32.totalorder %s18, 1
    %p99 = por %p97, %p98
    %p100 = scmp.ne.s32.totalorder %s91, %s92
    %p101 = scmp.eq.s32.totalorder %s18, 0
    %p102 = por %p100, %p101
    %p103 = scmp.ne.s32.totalorder %s91, %s92
    %p104 = scmp.eq.s32.totalorder %s19, 1
    %p105 = por %p103, %p104
    %p107 = scmp.ne.s32.totalorder %s92, %s106
    %p108 = scmp.eq.s32.totalorder %s19, 0
    %p109 = por %p107, %p108
    %s111 = sadd.s32 %s110, 1
    %p114 = scmp.eq.s32.totalorder %s13, 1
    %p115 = scmp.ne.s32.totalorder %s110, %s112
    %p116 = scmp.eq.s32.totalorder %s13, 0
    %p117 = por %p115, %p116
    %p118 = scmp.ne.s32.totalorder %s110, %s112
    %p119 = scmp.eq.s32.totalorder %s18, 1
    %p120 = por %p118, %p119
    %p121 = scmp.ne.s32.totalorder %s112, %s113
    %p122 = scmp.eq.s32.totalorder %s18, 0
    %p123 = por %p121, %p122
    %p124 = scmp.ne.s32.totalorder %s112, %s113
    %p125 = scmp.eq.s32.totalorder %s19, 1
    %p126 = por %p124, %p125
    %p128 = scmp.ne.s32.totalorder %s113, %s127
    %p129 = scmp.eq.s32.totalorder %s19, 0
    %p130 = por %p128, %p129
    %s132 = sadd.s32 %s131, 1
    %p135 = scmp.eq.s32.totalorder %s13, 1
    %p136 = scmp.ne.s32.totalorder %s131, %s133
    %p137 = scmp.eq.s32.totalorder %s13, 0
    %p138 = por %p136, %p137
    %p139 = scmp.ne.s32.totalorder %s131, %s133
    %p140 = scmp.eq.s32.totalorder %s18, 1
    %p141 = por %p139, %p140
    %p142 = scmp.ne.s32.totalorder %s133, %s134
    %p143 = scmp.eq.s32.totalorder %s18, 0
    %p144 = por %p142, %p143
    %p145 = scmp.ne.s32.totalorder %s133, %s134
    %p146 = scmp.eq.s32.totalorder %s19, 1
    %p147 = por %p145, %p146
    %p149 = scmp.ne.s32.totalorder %s134, %s148
    %p150 = scmp.eq.s32.totalorder %s19, 0
    %p151 = por %p149, %p150
    %s153 = sadd.s32 %s152, 1
    %p156 = scmp.eq.s32.totalorder %s13, 1
    %p157 = scmp.ne.s32.totalorder %s152, %s154
    %p158 = scmp.eq.s32.totalorder %s13, 0
    %p159 = por %p157, %p158
    %p160 = scmp.ne.s32.totalorder %s152, %s154
    %p161 = scmp.eq.s32.totalorder %s18, 1
    %p162 = por %p160, %p161
    %p163 = scmp.ne.s32.totalorder %s154, %s155
    %p164 = scmp.eq.s32.totalorder %s18, 0
    %p165 = por %p163, %p164
    %p166 = scmp.ne.s32.totalorder %s154, %s155
    %p167 = scmp.eq.s32.totalorder %s19, 1
    %p168 = por %p166, %p167
    %p170 = scmp.ne.s32.totalorder %s155, %s169
    %p171 = scmp.eq.s32.totalorder %s19, 0
    %p172 = por %p170, %p171
    %s173 = ssub.s32 %s13, %s20
    %p174 = scmp.eq.s32.totalorder %s173, 0
    %s176 = sadd.s32 %s175, 1
    %s177 = scalar_select %p174, %s175, %s176
    %p180 = pneg %p174
    %p181 = scmp.eq.s32.totalorder %s13, 1
    %p182 = por %p180, %p181
    %p183 = scmp.ne.s32.totalorder %s175, %s178
    %p184 = scmp.eq.s32.totalorder %s13, 0
    %p185 = por %p183, %p184
    %p186 = scmp.ne.s32.totalorder %s175, %s178
    %p187 = scmp.eq.s32.totalorder %s18, 1
    %p188 = por %p186, %p187
    %p189 = scmp.ne.s32.totalorder %s178, %s179
    %p190 = scmp.eq.s32.totalorder %s18, 0
    %p191 = por %p189, %p190
    %p192 = scmp.ne.s32.totalorder %s178, %s179
    %p193 = scmp.eq.s32.totalorder %s19, 1
    %p194 = por %p192, %p193
    %p196 = scmp.ne.s32.totalorder %s179, %s195
    %p197 = scmp.eq.s32.totalorder %s19, 0
    %p198 = por %p196, %p197
    %p199 = scmp.le.s32.totalorder 1, %s13
    %p200 = scmp.lt.s32.totalorder %s13, 3
    %p201 = pnand %p199, %p200
    %p202 = pneg %p201
    // Predicated region
    $region9: #{decoder_forward.6} parent=5 // pred_check
      _
    $region10: #{decoder_forward.6} parent=5 // pred_check_branch
      %204 = sbr.rel (%p201) target = $region12
    $region11: #{decoder_forward.6} parent=5 // pred_region
      %s205 = ssub.s32 %s13, 1
      // Predicated region
      $region13: #{decoder_forward.6} parent=11 // pred_check
        %p206 = pneg %p60
      $region14: #{decoder_forward.6} parent=11 // pred_check_branch
        %208 = sbr.rel (%p206) target = $region16
      $region15: #{decoder_forward.6} parent=11 // pred_region
        _
      $region16: #{decoder_forward.6} parent=11 // pred_fallthru
        _
      // Predicated region
      $region17: #{decoder_forward.6} parent=11 // pred_check
        %p209 = pneg %p81
      $region18: #{decoder_forward.6} parent=11 // pred_check_branch
        %211 = sbr.rel (%p209) target = $region20
      $region19: #{decoder_forward.6} parent=11 // pred_region
        _
      $region20: #{decoder_forward.6} parent=11 // pred_fallthru
        _
      // Predicated region
      $region21: #{decoder_forward.6} parent=11 // pred_check
        %p212 = pneg %p102
      $region22: #{decoder_forward.6} parent=11 // pred_check_branch
        %214 = sbr.rel (%p212) target = $region24
      $region23: #{decoder_forward.6} parent=11 // pred_region
        _
      $region24: #{decoder_forward.6} parent=11 // pred_fallthru
        _
      // Predicated region
      $region25: #{decoder_forward.6} parent=11 // pred_check
        %p215 = pneg %p123
      $region26: #{decoder_forward.6} parent=11 // pred_check_branch
        %217 = sbr.rel (%p215) target = $region28
      $region27: #{decoder_forward.6} parent=11 // pred_region
        _
      $region28: #{decoder_forward.6} parent=11 // pred_fallthru
        _
      // Predicated region
      $region29: #{decoder_forward.6} parent=11 // pred_check
        %p218 = pneg %p144
      $region30: #{decoder_forward.6} parent=11 // pred_check_branch
        %220 = sbr.rel (%p218) target = $region32
      $region31: #{decoder_forward.6} parent=11 // pred_region
        _
      $region32: #{decoder_forward.6} parent=11 // pred_fallthru
        _
      // Predicated region
      $region33: #{decoder_forward.6} parent=11 // pred_check
        %p221 = pneg %p165
      $region34: #{decoder_forward.6} parent=11 // pred_check_branch
        %223 = sbr.rel (%p221) target = $region36
      $region35: #{decoder_forward.6} parent=11 // pred_region
        _
      $region36: #{decoder_forward.6} parent=11 // pred_fallthru
        _
    $region12: #{decoder_forward.6} parent=5 // pred_fallthru
      _
    %p224 = scmp.lt.s32.totalorder %s13, 2
    // Predicated region
    $region37: #{decoder_forward.6} parent=5 // pred_check
      %p225 = pneg %p224
    $region38: #{decoder_forward.6} parent=5 // pred_check_branch
      %227 = sbr.rel (%p225) target = $region40
    $region39: #{decoder_forward.6} parent=5 // pred_region
      // Predicated region
      $region41: #{decoder_forward.6} parent=39 // pred_check
        %p228 = pneg %p33
      $region42: #{decoder_forward.6} parent=39 // pred_check_branch
        %230 = sbr.rel (%p228) target = $region44
      $region43: #{decoder_forward.6} parent=39 // pred_region
        %p231 = scmp.lt.s32.totalorder %s13, 1
        %s232 = scalar_select %p231, %s13, 1
        %s233 = smul.addr %s232, 8
        %s234 = scalar_lea.vmem %s0, %s233
      $region44: #{decoder_forward.6} parent=39 // pred_fallthru
        _
    $region40: #{decoder_forward.6} parent=5 // pred_fallthru
      _
    %p235 = scmp.le.s32.totalorder 1, %s13
    %p236 = scmp.lt.s32.totalorder %s13, 3
    %p237 = pnand %p235, %p236
    %p238 = pneg %p237
    // Predicated region
    $region45: #{decoder_forward.6} parent=5 // pred_check
      _
    $region46: #{decoder_forward.6} parent=5 // pred_check_branch
      %240 = sbr.rel (%p237) target = $region48
    $region47: #{decoder_forward.6} parent=5 // pred_region
      %s241 = ssub.s32 %s13, 1
      %p242 = scmp.lt.s32.totalorder %s18, 1
      %s243 = scalar_select %p242, %s18, 1
      %s244 = smul.addr %s243, 8
      %s245 = scalar_lea.vmem %s0, %s244
      %p246 = pneg %p39
      %p247 = pneg %p36
      %p248 = pneg %p60
      %p249 = pneg %p57
      %p250 = pneg %p81
      %p251 = pneg %p78
      %p252 = pneg %p102
      %p253 = pneg %p99
      %p254 = pneg %p123
      %p255 = pneg %p120
      %p256 = pneg %p144
      %p257 = pneg %p141
      %p258 = pneg %p165
      %p259 = pneg %p162
      %p260 = pneg %p191
      %p261 = pneg %p188
      %p262 = scmp.lt.s32.totalorder %s18, 1
      %s263 = scalar_select %p262, %s18, 1
      %s264 = smul.addr %s263, 4
      %s265 = scalar_lea.vmem %s7, %s264
      %p266 = scmp.lt.s32.totalorder %s18, 1
      %s267 = scalar_select %p266, %s18, 1
      %s268 = smul.addr %s267, 8
      %s269 = scalar_lea.vmem %s0, %s268
      %p270 = scmp.lt.s32.totalorder %s18, 1
      %s271 = scalar_select %p270, %s18, 1
      %s272 = smul.addr %s271, 4
      %s273 = scalar_lea.vmem %s7, %s272
      %v275 = vld [vmem:[%s269] sm:$0xff]
      %v276 = vpack.c.bf16 %v275, %v275
      %v277 = vld [vmem:[%s1] sm:$0xff]
      %v278 = vld [vmem:[%s1 + $0x8] sm:$0xf]
      %v279 = vld [vmem:[%s1 + $0xc] sm:$0xff]
      %v280 = vld [vmem:[%s1 + $0x14] sm:$0xf]
      %v281 = vld [vmem:[%s1 + $0x18] sm:$0xff]
      %v282 = vld [vmem:[%s1 + $0x20] sm:$0xf]
      %v283 = vld [vmem:[%s1 + $0x24] sm:$0xff]
      %v284 = vld [vmem:[%s1 + $0x2c] sm:$0xf]
      %v285 = vld [vmem:[%s1 + $0x30] sm:$0xff]
      %v286 = vld [vmem:[%s1 + $0x38] sm:$0xf]
      %v287 = vld [vmem:[%s1 + $0x3c] sm:$0xff]
      %v288 = vld [vmem:[%s1 + $0x44] sm:$0xf]
      %v289 = vld [vmem:[%s1 + $0x48] sm:$0xff]
      %v290 = vld [vmem:[%s1 + $0x50] sm:$0xf]
      %v291 = vld [vmem:[%s1 + $0x54] sm:$0xff]
      %v292 = vld [vmem:[%s1 + $0x5c] sm:$0xf]
      %v293 = vld [vmem:[%s1 + $0x60] sm:$0xff]
      %v294 = vld [vmem:[%s1 + $0x68] sm:$0xf]
      %v295 = vld [vmem:[%s1 + $0x6c] sm:$0xff]
      %v296 = vld [vmem:[%s1 + $0x74] sm:$0xf]
      %v297 = vld [vmem:[%s1 + $0x78] sm:$0xff]
      %v298 = vld [vmem:[%s1 + $0x80] sm:$0xf]
      %v299 = vld [vmem:[%s1 + $0x84] sm:$0xff]
      %v300 = vld [vmem:[%s1 + $0x8c] sm:$0xf]
      %v301 = vld [vmem:[%s1 + $0x90] sm:$0xff]
      %v302 = vld [vmem:[%s1 + $0x98] sm:$0xf]
      %v303 = vld [vmem:[%s1 + $0x9c] sm:$0xff]
      %v304 = vld [vmem:[%s1 + $0xa4] sm:$0xf]
      %v305 = vld [vmem:[%s1 + $0xa8] sm:$0xff]
      %v306 = vld [vmem:[%s1 + $0xb0] sm:$0xf]
      %v307 = vld [vmem:[%s1 + $0xb4] sm:$0xff]
      %v308 = vld [vmem:[%s1 + $0xbc] sm:$0xf]
      %v309 = vld [vmem:[%s2] sm:$0x7]
      %v311 = vlaneseq
      %v312 = vshrl.u32 %v311, 7
      %v313 = vsub.s32 0, %v312
      %v314 = vrot.slane %v309, %v313
      %v315 = vlaneseq
      %v316 = vshrl.u32 %v315, 7
      %v317 = vsub.s32 1, %v316
      %v318 = vrot.slane %v309, %v317
      %v319 = vlaneseq
      %v320 = vshrl.u32 %v319, 7
      %v321 = vsub.s32 2, %v320
      %v322 = vrot.slane %v309, %v321
      %v358 = vunpack.c.l.b16 %v277
      %v359 = vunpack.c.h.b16 %v277
      %v360 = vunpack.c.l.b16 %v278
      %v361 = vunpack.c.l.b16 %v279
      %v362 = vunpack.c.h.b16 %v279
      %v363 = vunpack.c.l.b16 %v280
      %v364 = vunpack.c.l.b16 %v281
      %v365 = vunpack.c.h.b16 %v281
      %v366 = vunpack.c.l.b16 %v282
      %v367 = vunpack.c.l.b16 %v283
      %v368 = vunpack.c.h.b16 %v283
      %v369 = vunpack.c.l.b16 %v284
      %v370 = vunpack.c.l.b16 %v285
      %v371 = vunpack.c.h.b16 %v285
      %v372 = vunpack.c.l.b16 %v286
      %v373 = vunpack.c.l.b16 %v287
      %v374 = vunpack.c.h.b16 %v287
      %v375 = vunpack.c.l.b16 %v288
      %v376 = vunpack.c.l.b16 %v289
      %v377 = vunpack.c.h.b16 %v289
      %v378 = vunpack.c.l.b16 %v290
      %v379 = vunpack.c.l.b16 %v291
      %v380 = vunpack.c.h.b16 %v291
      %v381 = vunpack.c.l.b16 %v292
      %v382 = vunpack.c.l.b16 %v293
      %v383 = vunpack.c.h.b16 %v293
      %v384 = vunpack.c.l.b16 %v294
      %v385 = vunpack.c.l.b16 %v295
      %v386 = vunpack.c.h.b16 %v295
      %v387 = vunpack.c.l.b16 %v296
      %v388 = vunpack.c.l.b16 %v297
      %v389 = vunpack.c.h.b16 %v297
      %v390 = vunpack.c.l.b16 %v298
      %v391 = vunpack.c.l.b16 %v299
      %v392 = vunpack.c.h.b16 %v299
      %v393 = vunpack.c.l.b16 %v300
      %v394 = vunpack.c.l.b16 %v301
      %v395 = vunpack.c.h.b16 %v301
      %v396 = vunpack.c.l.b16 %v302
      %v397 = vunpack.c.l.b16 %v303
      %v398 = vunpack.c.h.b16 %v303
      %v399 = vunpack.c.l.b16 %v304
      %v400 = vunpack.c.l.b16 %v305
      %v401 = vunpack.c.h.b16 %v305
      %v402 = vunpack.c.l.b16 %v306
      %v403 = vunpack.c.l.b16 %v307
      %v404 = vunpack.c.h.b16 %v307
      %v405 = vunpack.c.l.b16 %v308
      %v406 = vpack.c.b16 %v361, %v358
      %v407 = vpack.c.b16 %v362, %v359
      %v408 = vpack.c.b16 %v363, %v360
      %v409 = vpack.c.b16 %v367, %v364
      %v410 = vpack.c.b16 %v368, %v365
      %v411 = vpack.c.b16 %v369, %v366
      %v412 = vpack.c.b16 %v373, %v370
      %v413 = vpack.c.b16 %v374, %v371
      %v414 = vpack.c.b16 %v375, %v372
      %v415 = vpack.c.b16 %v379, %v376
      %v416 = vpack.c.b16 %v380, %v377
      %v417 = vpack.c.b16 %v381, %v378
      %v418 = vpack.c.b16 %v385, %v382
      %v419 = vpack.c.b16 %v386, %v383
      %v420 = vpack.c.b16 %v387, %v384
      %v421 = vpack.c.b16 %v391, %v388
      %v422 = vpack.c.b16 %v392, %v389
      %v423 = vpack.c.b16 %v393, %v390
      %v424 = vpack.c.b16 %v397, %v394
      %v425 = vpack.c.b16 %v398, %v395
      %v426 = vpack.c.b16 %v399, %v396
      %v427 = vpack.c.b16 %v403, %v400
      %v428 = vpack.c.b16 %v404, %v401
      %v429 = vpack.c.b16 %v405, %v402
      %454 = vmatprep.subr.bf16.mxu0 %v407
      %455 = vmatpush1.bf16.msra.mxu0 %v406
      %456 = vmatprep.subr.bf16.mxu0 %v410
      %457 = vmatpush1.bf16.msra.mxu0 %v409
      %458 = vmatprep.subr.bf16.mxu0 %v413
      %459 = vmatpush1.bf16.msra.mxu0 %v412
      %460 = vmatprep.subr.bf16.mxu0 %v416
      %461 = vmatpush1.bf16.msra.mxu0 %v415
      %462 = vmatprep.subr.bf16.mxu0 %v419
      %463 = vmatpush1.bf16.msra.mxu0 %v418
      %464 = vmatprep.subr.bf16.mxu0 %v422
      %465 = vmatpush1.bf16.msra.mxu0 %v421
      %466 = vmatprep.subr.bf16.mxu0 %v425
      %467 = vmatpush1.bf16.msra.mxu0 %v424
      %468 = vmatprep.subr.bf16.mxu0 %v428
      %469 = vmatpush1.bf16.msra.mxu0 %v427
      %470 = vmatprep.subr.bf16.mxu0 0
      %471 = vmatpush1.bf16.msra.mxu0 0
      %472 = vmatprep.subr.bf16.mxu0 0
      %473 = vmatpush1.bf16.msra.mxu0 0
      %474 = vmatprep.subr.bf16.mxu0 0
      %475 = vmatpush1.bf16.msra.mxu0 0
      %476 = vmatprep.subr.bf16.mxu0 0
      %477 = vmatpush1.bf16.msra.mxu0 0
      %478 = vmatprep.subr.bf16.mxu0 0
      %479 = vmatpush1.bf16.msra.mxu0 0
      %480 = vmatprep.subr.bf16.mxu0 0
      %481 = vmatpush1.bf16.msra.mxu0 0
      %482 = vmatprep.subr.bf16.mxu0 0
      %483 = vmatpush1.bf16.msra.mxu0 0
      %484 = vmatprep.subr.bf16.mxu0 0
      %485 = vmatpush1.bf16.msra.mxu0 0
      %486 = vmatprep.mubr.bf16.mxu0 0
      %487 = vmatmul.mubr.bf16.gmra.mrb[0].mxu0 %v276
      %v488 = vpop.f32.mrb[0].mxu0
      %v489 = vadd.f32 %v314, %v488
      %v490 = vpop.f32.mrb[0].mxu0
      %v491 = vadd.f32 %v318, %v490
      %v492 = vpop.f32.mrb[0].mxu0
      %v493 = vpop.f32.mrb[0].mxu0
      %494 = vdwg.mxu0
      %495 = vmatprep.subr.bf16.mxu0 0
      %496 = vmatpush1.bf16.msra.mxu0 %v408
      %497 = vmatprep.subr.bf16.mxu0 0
      %498 = vmatpush1.bf16.msra.mxu0 %v411
      %499 = vmatprep.subr.bf16.mxu0 0
      %500 = vmatpush1.bf16.msra.mxu0 %v414
      %501 = vmatprep.subr.bf16.mxu0 0
      %502 = vmatpush1.bf16.msra.mxu0 %v417
      %503 = vmatprep.subr.bf16.mxu0 0
      %504 = vmatpush1.bf16.msra.mxu0 %v420
      %505 = vmatprep.subr.bf16.mxu0 0
      %506 = vmatpush1.bf16.msra.mxu0 %v423
      %507 = vmatprep.subr.bf16.mxu0 0
      %508 = vmatpush1.bf16.msra.mxu0 %v426
      %509 = vmatprep.subr.bf16.mxu0 0
      %510 = vmatpush1.bf16.msra.mxu0 %v429
      %511 = vmatprep.subr.bf16.mxu0 0
      %512 = vmatpush1.bf16.msra.mxu0 0
      %513 = vmatprep.subr.bf16.mxu0 0
      %514 = vmatpush1.bf16.msra.mxu0 0
      %515 = vmatprep.subr.bf16.mxu0 0
      %516 = vmatpush1.bf16.msra.mxu0 0
      %517 = vmatprep.subr.bf16.mxu0 0
      %518 = vmatpush1.bf16.msra.mxu0 0
      %519 = vmatprep.subr.bf16.mxu0 0
      %520 = vmatpush1.bf16.msra.mxu0 0
      %521 = vmatprep.subr.bf16.mxu0 0
      %522 = vmatpush1.bf16.msra.mxu0 0
      %523 = vmatprep.subr.bf16.mxu0 0
      %524 = vmatpush1.bf16.msra.mxu0 0
      %525 = vmatprep.subr.bf16.mxu0 0
      %526 = vmatpush1.bf16.msra.mxu0 0
      %527 = vmatprep.mubr.bf16.mxu0 0
      %528 = vmatmul.mubr.bf16.gmra.mrb[0].mxu0 %v276
      %v529 = vpop.f32.mrb[0].mxu0
      %v530 = vadd.f32 %v322, %v529
      %v531 = vpop.f32.mrb[0].mxu0
      %v532 = vpop.f32.mrb[0].mxu0
      %v533 = vpop.f32.mrb[0].mxu0
      %534 = vdwg.mxu0
      %v535 = vld [vmem:[%s3] sm:$0xf]
      %v536 = vld [vmem:[%s3 + $0x4] sm:$0xf]
      %v537 = vld [vmem:[%s3 + $0x8] sm:$0xf]
      %v538 = vld [vmem:[%s3 + $0xc] sm:$0xf]
      %v539 = vld [vmem:[%s3 + $0x10] sm:$0xf]
      %v540 = vld [vmem:[%s3 + $0x14] sm:$0xf]
      %v541 = vld [vmem:[%s3 + $0x18] sm:$0xf]
      %v542 = vld [vmem:[%s3 + $0x1c] sm:$0xf]
      %v543 = vld [vmem:[%s3 + $0x20] sm:$0xf]
      %v544 = vld [vmem:[%s3 + $0x24] sm:$0xf]
      %v545 = vld [vmem:[%s3 + $0x28] sm:$0xf]
      %v546 = vld [vmem:[%s3 + $0x2c] sm:$0xf]
      %v547 = vld [vmem:[%s3 + $0x30] sm:$0xf]
      %v548 = vld [vmem:[%s3 + $0x34] sm:$0xf]
      %v549 = vld [vmem:[%s3 + $0x38] sm:$0xf]
      %v550 = vld [vmem:[%s3 + $0x3c] sm:$0xf]
      %v551 = vld [vmem:[%s4] sm:$0x1]
      %v552 = vld [vmem:[%s5] sm:$0x1]
      %v553 = vld [vmem:[%s6] sm:$0x1]
      %v554 = vmul.f32 %v489, 0.125
      %v555 = vlaneseq
      %v556 = vshrl.u32 %v555, 7
      %v557 = vlaneseq
      %v558 = vand.u32 %v557, 127
      %vm559 = vcmp.le.s32.totalorder %v558, %v556
      %v560 = vpack.c.bf16 %v554, %v554
      %v561 = vpack.c.bf16 %v491, %v491
      %v562 = vpack.c.bf16 %v530, %v530
      %vm563 = vcmask 523264
      %v565 = vsel %vm563, %v560, 0
      %v568 = vsel %vm563, %v561, 0
      %570 = vmatprep.subr.bf16.mxu0 0
      %571 = vmatpush1.bf16.xpose.msra.mxu0 %v568
      %572 = vmatprep.subr.bf16.mxu0 0
      %573 = vmatpush1.bf16.xpose.msra.mxu0 0
      %574 = vmatprep.subr.bf16.mxu0 0
      %575 = vmatpush1.bf16.xpose.msra.mxu0 0
      %576 = vmatprep.subr.bf16.mxu0 0
      %577 = vmatpush1.bf16.xpose.msra.mxu0 0
      %578 = vmatprep.subr.bf16.mxu0 0
      %579 = vmatpush1.bf16.xpose.msra.mxu0 0
      %580 = vmatprep.subr.bf16.mxu0 0
      %581 = vmatpush1.bf16.xpose.msra.mxu0 0
      %582 = vmatprep.subr.bf16.mxu0 0
      %583 = vmatpush1.bf16.xpose.msra.mxu0 0
      %584 = vmatprep.subr.bf16.mxu0 0
      %585 = vmatpush1.bf16.xpose.msra.mxu0 0
      %586 = vmatprep.subr.bf16.mxu0 0
      %587 = vmatpush1.bf16.xpose.msra.mxu0 0
      %588 = vmatprep.subr.bf16.mxu0 0
      %589 = vmatpush1.bf16.xpose.msra.mxu0 0
      %590 = vmatprep.subr.bf16.mxu0 0
      %591 = vmatpush1.bf16.xpose.msra.mxu0 0
      %592 = vmatprep.subr.bf16.mxu0 0
      %593 = vmatpush1.bf16.xpose.msra.mxu0 0
      %594 = vmatprep.subr.bf16.mxu0 0
      %595 = vmatpush1.bf16.xpose.msra.mxu0 0
      %596 = vmatprep.subr.bf16.mxu0 0
      %597 = vmatpush1.bf16.xpose.msra.mxu0 0
      %598 = vmatprep.subr.bf16.mxu0 0
      %599 = vmatpush1.bf16.xpose.msra.mxu0 0
      %600 = vmatprep.subr.bf16.mxu0 0
      %601 = vmatpush1.bf16.xpose.msra.mxu0 0
      %602 = vmatprep.mubr.bf16.mxu0 0
      %603 = vmatmul.mubr.bf16.gmra.mrb[0].mxu0 %v565
      %v604 = vpop.f32.mrb[0].mxu0
      %v605 = vadd.f32 0.0, %v604
      %v606 = vpop.f32.mrb[0].mxu0
      %v607 = vpop.f32.mrb[0].mxu0
      %v608 = vpop.f32.mrb[0].mxu0
      %609 = vdwg.mxu0
      %v610 = vsel %vm559, %v605, -1e+09
      %vm611 = vcmask 64512
      %v612 = vsel %vm611, %v610, -inf
      %613 = vmax.xlane.f32.xlu0 %v612
      %v614 = vpop.xlane.xlu0 %613
      %v615 = vsub.f32 %v610, %v614
      %v616 = vmul.f32 %v615, 1.442695
      %v617 = vpow.pop %v616
      %v618 = vsel %vm611, %v617, 0.0
      %619 = vadd.xlane.f32.xlu0 %v618
      %v620 = vpop.xlane.xlu0 %619
      %v621 = vrcp.pop %v620
      %v622 = vmul.f32 %v617, %v621
      %v623 = vpack.c.bf16 %v622, %v622
      %v625 = vsel %vm611, %v623, 0
      %vm627 = vcmask 1043456
      %v629 = vsel %vm627, %v562, 0
      %631 = vmatprep.subr.bf16.mxu0 0
      %632 = vmatpush1.bf16.msra.mxu0 %v629
      %633 = vmatprep.subr.bf16.mxu0 0
      %634 = vmatpush1.bf16.msra.mxu0 0
      %635 = vmatprep.subr.bf16.mxu0 0
      %636 = vmatpush1.bf16.msra.mxu0 0
      %637 = vmatprep.subr.bf16.mxu0 0
      %638 = vmatpush1.bf16.msra.mxu0 0
      %639 = vmatprep.subr.bf16.mxu0 0
      %640 = vmatpush1.bf16.msra.mxu0 0
      %641 = vmatprep.subr.bf16.mxu0 0
      %642 = vmatpush1.bf16.msra.mxu0 0
      %643 = vmatprep.subr.bf16.mxu0 0
      %644 = vmatpush1.bf16.msra.mxu0 0
      %645 = vmatprep.subr.bf16.mxu0 0
      %646 = vmatpush1.bf16.msra.mxu0 0
      %647 = vmatprep.subr.bf16.mxu0 0
      %648 = vmatpush1.bf16.msra.mxu0 0
      %649 = vmatprep.subr.bf16.mxu0 0
      %650 = vmatpush1.bf16.msra.mxu0 0
      %651 = vmatprep.subr.bf16.mxu0 0
      %652 = vmatpush1.bf16.msra.mxu0 0
      %653 = vmatprep.subr.bf16.mxu0 0
      %654 = vmatpush1.bf16.msra.mxu0 0
      %655 = vmatprep.subr.bf16.mxu0 0
      %656 = vmatpush1.bf16.msra.mxu0 0
      %657 = vmatprep.subr.bf16.mxu0 0
      %658 = vmatpush1.bf16.msra.mxu0 0
      %659 = vmatprep.subr.bf16.mxu0 0
      %660 = vmatpush1.bf16.msra.mxu0 0
      %661 = vmatprep.subr.bf16.mxu0 0
      %662 = vmatpush1.bf16.msra.mxu0 0
      %663 = vmatprep.mubr.bf16.mxu0 0
      %664 = vmatmul.mubr.bf16.gmra.mrb[0].mxu0 %v625
      %v665 = vpop.f32.mrb[0].mxu0
      %v666 = vadd.f32 0.0, %v665
      %v667 = vpop.f32.mrb[0].mxu0
      %v668 = vpop.f32.mrb[0].mxu0
      %v669 = vpop.f32.mrb[0].mxu0
      %670 = vdwg.mxu0
      %672 = vrot.lane.b32.xlu0 %v560, 64
      %v673 = vpop.permute.xlu0 %672
      %675 = vrot.lane.b32.xlu0 %v561, 64
      %v676 = vpop.permute.xlu0 %675
      %v678 = vsel %vm563, %v673, 0
      %v681 = vsel %vm563, %v676, 0
      %683 = vmatprep.subr.bf16.mxu0 0
      %684 = vmatpush1.bf16.xpose.msra.mxu0 %v681
      %685 = vmatprep.subr.bf16.mxu0 0
      %686 = vmatpush1.bf16.xpose.msra.mxu0 0
      %687 = vmatprep.subr.bf16.mxu0 0
      %688 = vmatpush1.bf16.xpose.msra.mxu0 0
      %689 = vmatprep.subr.bf16.mxu0 0
      %690 = vmatpush1.bf16.xpose.msra.mxu0 0
      %691 = vmatprep.subr.bf16.mxu0 0
      %692 = vmatpush1.bf16.xpose.msra.mxu0 0
      %693 = vmatprep.subr.bf16.mxu0 0
      %694 = vmatpush1.bf16.xpose.msra.mxu0 0
      %695 = vmatprep.subr.bf16.mxu0 0
      %696 = vmatpush1.bf16.xpose.msra.mxu0 0
      %697 = vmatprep.subr.bf16.mxu0 0
      %698 = vmatpush1.bf16.xpose.msra.mxu0 0
      %699 = vmatprep.subr.bf16.mxu0 0
      %700 = vmatpush1.bf16.xpose.msra.mxu0 0
      %701 = vmatprep.subr.bf16.mxu0 0
      %702 = vmatpush1.bf16.xpose.msra.mxu0 0
      %703 = vmatprep.subr.bf16.mxu0 0
      %704 = vmatpush1.bf16.xpose.msra.mxu0 0
      %705 = vmatprep.subr.bf16.mxu0 0
      %706 = vmatpush1.bf16.xpose.msra.mxu0 0
      %707 = vmatprep.subr.bf16.mxu0 0
      %708 = vmatpush1.bf16.xpose.msra.mxu0 0
      %709 = vmatprep.subr.bf16.mxu0 0
      %710 = vmatpush1.bf16.xpose.msra.mxu0 0
      %711 = vmatprep.subr.bf16.mxu0 0
      %712 = vmatpush1.bf16.xpose.msra.mxu0 0
      %713 = vmatprep.subr.bf16.mxu0 0
      %714 = vmatpush1.bf16.xpose.msra.mxu0 0
      %715 = vmatprep.mubr.bf16.mxu0 0
      %716 = vmatmul.mubr.bf16.gmra.mrb[0].mxu0 %v678
      %v717 = vpop.f32.mrb[0].mxu0
      %v718 = vadd.f32 0.0, %v717
      %v719 = vpop.f32.mrb[0].mxu0
      %v720 = vpop.f32.mrb[0].mxu0
      %v721 = vpop.f32.mrb[0].mxu0
      %722 = vdwg.mxu0
      %v723 = vsel %vm559, %v718, -1e+09
      %v724 = vsel %vm611, %v723, -inf
      %725 = vmax.xlane.f32.xlu0 %v724
      %v726 = vpop.xlane.xlu0 %725
      %v727 = vsub.f32 %v723, %v726
      %v728 = vmul.f32 %v727, 1.442695
      %v729 = vpow.pop %v728
      %v730 = vsel %vm611, %v729, 0.0
      %731 = vadd.xlane.f32.xlu0 %v730
      %v732 = vpop.xlane.xlu0 %731
      %v733 = vrcp.pop %v732
      %v734 = vmul.f32 %v729, %v733
      %v735 = vpack.c.bf16 %v734, %v734
      %737 = vrot.lane.b32.xlu0 %v562, 64
      %v738 = vpop.permute.xlu0 %737
      %v740 = vsel %vm611, %v735, 0
      %v743 = vsel %vm627, %v738, 0
      %745 = vmatprep.subr.bf16.mxu0 0
      %746 = vmatpush1.bf16.msra.mxu0 %v743
      %747 = vmatprep.subr.bf16.mxu0 0
      %748 = vmatpush1.bf16.msra.mxu0 0
      %749 = vmatprep.subr.bf16.mxu0 0
      %750 = vmatpush1.bf16.msra.mxu0 0
      %751 = vmatprep.subr.bf16.mxu0 0
      %752 = vmatpush1.bf16.msra.mxu0 0
      %753 = vmatprep.subr.bf16.mxu0 0
      %754 = vmatpush1.bf16.msra.mxu0 0
      %755 = vmatprep.subr.bf16.mxu0 0
      %756 = vmatpush1.bf16.msra.mxu0 0
      %757 = vmatprep.subr.bf16.mxu0 0
      %758 = vmatpush1.bf16.msra.mxu0 0
      %759 = vmatprep.subr.bf16.mxu0 0
      %760 = vmatpush1.bf16.msra.mxu0 0
      %761 = vmatprep.subr.bf16.mxu0 0
      %762 = vmatpush1.bf16.msra.mxu0 0
      %763 = vmatprep.subr.bf16.mxu0 0
      %764 = vmatpush1.bf16.msra.mxu0 0
      %765 = vmatprep.subr.bf16.mxu0 0
      %766 = vmatpush1.bf16.msra.mxu0 0
      %767 = vmatprep.subr.bf16.mxu0 0
      %768 = vmatpush1.bf16.msra.mxu0 0
      %769 = vmatprep.subr.bf16.mxu0 0
      %770 = vmatpush1.bf16.msra.mxu0 0
      %771 = vmatprep.subr.bf16.mxu0 0
      %772 = vmatpush1.bf16.msra.mxu0 0
      %773 = vmatprep.subr.bf16.mxu0 0
      %774 = vmatpush1.bf16.msra.mxu0 0
      %775 = vmatprep.subr.bf16.mxu0 0
      %776 = vmatpush1.bf16.msra.mxu0 0
      %777 = vmatprep.mubr.bf16.mxu0 0
      %778 = vmatmul.mubr.bf16.gmra.mrb[0].mxu0 %v740
      %v779 = vpop.f32.mrb[0].mxu0
      %v780 = vadd.f32 0.0, %v779
      %v781 = vpop.f32.mrb[0].mxu0
      %v782 = vpop.f32.mrb[0].mxu0
      %v783 = vpop.f32.mrb[0].mxu0
      %784 = vdwg.mxu0
      %786 = vrot.lane.b32.xlu0 %v780, 64
      %v787 = vpop.permute.xlu0 %786
      %v789 = vsel %vm563, %v666, %v787
      %v790 = vpack.c.bf16 %v789, %v789
      %v792 = vlaneseq
      %v793 = vshrl.u32 %v792, 7
      %v794 = vsub.s32 0, %v793
      %v795 = vrot.slane %v551, %v794
      %v813 = vunpack.c.l.b16 %v535
      %v814 = vunpack.c.l.b16 %v536
      %v815 = vunpack.c.l.b16 %v537
      %v816 = vunpack.c.l.b16 %v538
      %v817 = vunpack.c.l.b16 %v539
      %v818 = vunpack.c.l.b16 %v540
      %v819 = vunpack.c.l.b16 %v541
      %v820 = vunpack.c.l.b16 %v542
      %v821 = vunpack.c.l.b16 %v543
      %v822 = vunpack.c.l.b16 %v544
      %v823 = vunpack.c.l.b16 %v545
      %v824 = vunpack.c.l.b16 %v546
      %v825 = vunpack.c.l.b16 %v547
      %v826 = vunpack.c.l.b16 %v548
      %v827 = vunpack.c.l.b16 %v549
      %v828 = vunpack.c.l.b16 %v550
      %v829 = vpack.c.b16 %v814, %v813
      %v830 = vpack.c.b16 %v816, %v815
      %v831 = vpack.c.b16 %v818, %v817
      %v832 = vpack.c.b16 %v820, %v819
      %v833 = vpack.c.b16 %v822, %v821
      %v834 = vpack.c.b16 %v824, %v823
      %v835 = vpack.c.b16 %v826, %v825
      %v836 = vpack.c.b16 %v828, %v827
      %845 = vmatprep.subr.bf16.mxu0 0
      %846 = vmatpush1.bf16.msra.mxu0 %v829
      %847 = vmatprep.subr.bf16.mxu0 0
      %848 = vmatpush1.bf16.msra.mxu0 %v830
      %849 = vmatprep.subr.bf16.mxu0 0
      %850 = vmatpush1.bf16.msra.mxu0 %v831
      %851 = vmatprep.subr.bf16.mxu0 0
      %852 = vmatpush1.bf16.msra.mxu0 %v832
      %853 = vmatprep.subr.bf16.mxu0 0
      %854 = vmatpush1.bf16.msra.mxu0 %v833
      %855 = vmatprep.subr.bf16.mxu0 0
      %856 = vmatpush1.bf16.msra.mxu0 %v834
      %857 = vmatprep.subr.bf16.mxu0 0
      %858 = vmatpush1.bf16.msra.mxu0 %v835
      %859 = vmatprep.subr.bf16.mxu0 0
      %860 = vmatpush1.bf16.msra.mxu0 %v836
      %861 = vmatprep.subr.bf16.mxu0 0
      %862 = vmatpush1.bf16.msra.mxu0 0
      %863 = vmatprep.subr.bf16.mxu0 0
      %864 = vmatpush1.bf16.msra.mxu0 0
      %865 = vmatprep.subr.bf16.mxu0 0
      %866 = vmatpush1.bf16.msra.mxu0 0
      %867 = vmatprep.subr.bf16.mxu0 0
      %868 = vmatpush1.bf16.msra.mxu0 0
      %869 = vmatprep.subr.bf16.mxu0 0
      %870 = vmatpush1.bf16.msra.mxu0 0
      %871 = vmatprep.subr.bf16.mxu0 0
      %872 = vmatpush1.bf16.msra.mxu0 0
      %873 = vmatprep.subr.bf16.mxu0 0
      %874 = vmatpush1.bf16.msra.mxu0 0
      %875 = vmatprep.subr.bf16.mxu0 0
      %876 = vmatpush1.bf16.msra.mxu0 0
      %877 = vmatprep.mubr.bf16.mxu0 0
      %878 = vmatmul.mubr.bf16.gmra.mrb[0].mxu0 %v790
      %v879 = vpop.f32.mrb[0].mxu0
      %v880 = vadd.f32 %v795, %v879
      %v881 = vpop.f32.mrb[0].mxu0
      %v882 = vpop.f32.mrb[0].mxu0
      %v883 = vpop.f32.mrb[0].mxu0
      %884 = vdwg.mxu0
      %v885 = vadd.f32 %v880, %v275
      %886 = vadd.xlane.f32.xlu0 %v885
      %v887 = vpop.xlane.xlu0 %886
      %v888 = vrcp.pop 128.0
      %v889 = vmul.f32 %v887, %v888
      %v890 = vsub.f32 %v885, %v889
      %v891 = vmul.f32 %v890, %v890
      %892 = vadd.xlane.f32.xlu0 %v891
      %v893 = vpop.xlane.xlu0 %892
      %v894 = vmul.f32 %v893, %v888
      %v895 = vadd.f32 %v894, 1e-06
      %v896 = vrsqrt.pop %v895
      %v897 = vmul.f32 %v890, %v896
      %v899 = vlaneseq
      %v900 = vshrl.u32 %v899, 7
      %v901 = vsub.s32 0, %v900
      %v902 = vrot.slane %v552, %v901
      %v904 = vmul.f32 %v897, %v902
      %v906 = vlaneseq
      %v907 = vshrl.u32 %v906, 7
      %v908 = vsub.s32 0, %v907
      %v909 = vrot.slane %v553, %v908
      %v911 = vadd.f32 %v904, %v909
      %v912 = vpack.c.bf16 %v911, %v911
      %913 = vst [vmem:[%s273] sm:$0xf] %v912
      %p914 = scmp.lt.s32.totalorder %s18, 1
      %s915 = scalar_select %p914, %s18, 1
      %s916 = smul.addr %s915, 4
      %s917 = scalar_lea.vmem %s7, %s916
      // Predicated region
      $region49: #{decoder_forward.6} parent=47 // pred_check
        %p918 = pneg %p188
      $region50: #{decoder_forward.6} parent=47 // pred_check_branch
        %920 = sbr.rel (%p918) target = $region52
      $region51: #{decoder_forward.6} parent=47 // pred_region
        _
      $region52: #{decoder_forward.6} parent=47 // pred_fallthru
        _
    $region48: #{decoder_forward.6} parent=5 // pred_fallthru
      _
    %p921 = scmp.le.s32.totalorder 2, %s13
    // Predicated region
    $region53: #{decoder_forward.6} parent=5 // pred_check
      %p922 = pneg %p921
    $region54: #{decoder_forward.6} parent=5 // pred_check_branch
      %924 = sbr.rel (%p922) target = $region56
    $region55: #{decoder_forward.6} parent=5 // pred_region
      %s925 = ssub.s32 %s13, 2
      // Predicated region
      $region57: #{decoder_forward.6} parent=55 // pred_check
        %p926 = pneg %p194
      $region58: #{decoder_forward.6} parent=55 // pred_check_branch
        %928 = sbr.rel (%p926) target = $region60
      $region59: #{decoder_forward.6} parent=55 // pred_region
        %p929 = scmp.lt.s32.totalorder %s19, 1
        %s930 = scalar_select %p929, %s19, 1
        %s931 = smul.addr %s930, 4
        %s932 = scalar_lea.vmem %s7, %s931
      $region60: #{decoder_forward.6} parent=55 // pred_fallthru
        _
    $region56: #{decoder_forward.6} parent=5 // pred_fallthru
      _
  $region6: #{decoder_forward.6} parent=0 // loop_footer
    %s17 = sadd.s32 1, %s13
  $region7: #{decoder_forward.6} parent=0 // loop_footer_branch
    %12 = sbr.rel target = $region3
  $region8: #{decoder_forward.6} parent=0 // loop_exit
    _

</llo_original>
